<compile_context>
chip_gen: v6e
topology: v6e:2x2x1
jax: 0.10.0
libtpu: 0.0.40
codegen_flags: <defaults>
</compile_context>

<pallas_src>
import functools

import jax
import jax.numpy as jnp
from jax.experimental import pallas as pl


# ---------------------------------------------------------------------------
# One fused kernel: all GlobalPart heads + cat_conv + BatchNorm(train stats) + ReLU.
# ---------------------------------------------------------------------------
def _multi_global_part_kernel(x_ref, wmain_ref, bmain_ref, rowpick_ref, texp_ref,
                              seg_ref, maskbd_ref, ck_ref, wcat_ref, gamma_ref,
                              beta_ref, o_ref, *, B, V, C, H, I, eps):
    N = B * V
    HI = H * I            # == C (heads * inter_channels)
    VH = V * H            # attention lane width: key index major, head index minor

    x = x_ref[...]                                                     # (N, C)

    # Single fused projection for every 1x1 conv in the module:
    #   cols [0, HI)          : g conv, all heads      -> g_all[r, h*I + i]
    #   cols [HI, HI+VH)      : theta . w_cp, tiled    -> t_til[r, j*H + h] = t[r, h]
    #   cols [HI+VH, HI+2VH)  : phi   . w_cp, tiled    -> p_til[r, j*H + h] = p[r, h]
    proj = jnp.dot(x, wmain_ref[...], preferred_element_type=jnp.float32) + bmain_ref[...]
    g_all = proj[:, :HI]                                               # (N, HI)
    f_th = proj[:, HI:HI + VH]                                         # (N, VH)
    t_small = proj[:, HI:HI + H]                                       # (N, H)  (j == 0 slice)
    p_til = proj[:, HI + VH:HI + 2 * VH]                               # (N, VH)
    p_small = proj[:, HI + VH:HI + VH + H]                             # (N, H)

    # phi must be indexed by the *key* position j (a lane index), not the row:
    # pick row j of each batch for lane-group j via a mask + one sublane reduction.
    p_rows = jnp.sum(p_til.reshape(B, V, VH) * rowpick_ref[...],
                     axis=1, keepdims=True)                            # (B, 1, VH)

    # Attention logits for all (batch, head, query, key) at once.
    f = f_th.reshape(B, V, VH) + p_rows                                # (B, V, VH)
    f = jnp.where(f > 0, f, 0.2 * f)                                   # LeakyReLU(0.2)

    # Exact per-(batch, head) softmax max (LeakyReLU is monotone):
    #   max_j leakyrelu(t + p_j) = leakyrelu(t + max_j p_j)
    pmax = jnp.max(p_small.reshape(B, V, H), axis=1, keepdims=True)    # (B, 1, H)
    m_small = t_small.reshape(B, V, H) + pmax                          # (B, V, H)
    m_small = jnp.where(m_small > 0, m_small, 0.2 * m_small)
    m = jnp.dot(m_small.reshape(N, H), texp_ref[...],                  # (N, VH) via MXU
                preferred_element_type=jnp.float32)

    # softmax(dim=-1) per head segment; segment sums as an MXU matmul with a same-head mask.
    e = jnp.exp(f.reshape(N, VH) - m)                                  # (N, VH), <= 1
    s = jnp.dot(e, seg_ref[...], preferred_element_type=jnp.float32)   # (N, VH), >= 1
    attn = (e / s).reshape(B, V, VH) + ck_ref[...]                     # + C_k (broadcast over B)

    # y = attention @ g for every (batch, head), batched over batches as one
    # block-diagonal matmul: g_bd[b, j*H+h, h'*I+c] = g_all[b*V+j, h'*I+c] * (h == h').
    g_bd = jnp.broadcast_to(g_all.reshape(B, V, 1, HI),
                            (B, V, H, HI)).reshape(B, VH, HI) * maskbd_ref[...]
    ycat = jnp.einsum('bik,bkc->bic', attn, g_bd,
                      preferred_element_type=jnp.float32)              # (B, V, C), heads along channels

    # cat_conv: 1x1 Conv2d(C -> C), bias=False.
    z = jnp.dot(ycat.reshape(N, C), wcat_ref[...], preferred_element_type=jnp.float32)

    # BatchNorm2d (training-mode batch statistics over all B0*B1*V positions) + ReLU.
    # Column moments of [z, z*z] via one ones-row matmul (MXU) instead of sublane reductions.
    zz = jnp.concatenate([z, z * z], axis=1)                           # (N, 2C)
    sums = jnp.dot(jnp.ones((1, N), jnp.float32), zz,
                   preferred_element_type=jnp.float32)                 # (1, 2C)
    mean = sums[:, :C] * (1.0 / N)
    var = sums[:, C:] * (1.0 / N) - mean * mean
    scale = gamma_ref[...] * jax.lax.rsqrt(var + eps)
    shift = beta_ref[...] - mean * scale
    o_ref[...] = jnp.maximum(z * scale + shift, 0.0)
    # TODO(synk): BatchNorm running_mean/running_var momentum updates are training state,
    # not part of the forward output, so they are not modeled here.


# ---------------------------------------------------------------------------
# Wrapper: algebraic weight pre-composition + constant selection matrices + one pallas_call.
# ---------------------------------------------------------------------------
def multi_global_part(x, params, inter_channels):
    B0, B1, V, C = x.shape
    I = inter_channels
    assert C % I == 0, "in_channels must be divisible by inter_channels (H * I == C)"
    # The PyTorch module switches to g_channels == in_channels when
    # inter_channels == in_channels // 2; only the g_channels == inter_channels path is fused here.
    assert I != C // 2, "inter_channels == in_channels // 2 path (g_channels == in_channels) not supported"
    # TODO(synk): g_channels == in_channels branch (inter_channels == in_channels // 2) not implemented.
    H = C // I
    B = B0 * B1
    N = B * V
    VH = V * H
    HI = H * I

    x_flat = x.reshape(N, C).astype(jnp.float32)

    wg, bg = params["wg"], params["bg"]            # (H, I, C), (H, I)
    wth, bth = params["wth"], params["bth"]        # (H, I, C), (H, I)
    wph, bph = params["wph"], params["bph"]        # (H, I, C), (H, I)
    wcp = params["wcp"]                            # (H, 2I): [:, :I] theta half, [:, I:] phi half

    # g conv weights for all heads along output columns: (C, H*I).
    wg_all = jnp.transpose(wg, (2, 0, 1)).reshape(C, HI)
    bg_all = bg.reshape(HI)

    # concat_project . theta / phi pre-composed into one column per head, then tiled over
    # the key index j so the lane expansion happens inside the MXU:
    #   <w_cp_theta_h, theta_h(x_v)> = x_v @ (W_theta_h^T w_cp_theta_h) + b_theta_h . w_cp_theta_h
    wtc = jnp.einsum("hic,hi->ch", wth, wcp[:, :I])          # (C, H)
    wpc = jnp.einsum("hic,hi->ch", wph, wcp[:, I:])          # (C, H)
    btc = jnp.einsum("hi,hi->h", bth, wcp[:, :I])            # (H,)
    bpc = jnp.einsum("hi,hi->h", bph, wcp[:, I:])            # (H,)

    wmain = jnp.concatenate([wg_all, jnp.tile(wtc, (1, V)), jnp.tile(wpc, (1, V))], axis=1)   # (C, HI+2VH)
    bmain = jnp.concatenate([bg_all, jnp.tile(btc, V), jnp.tile(bpc, V)]).reshape(1, HI + 2 * VH)

    # Constant selection / expansion matrices (lane layout: key j major, head h minor).
    eye_h = jnp.eye(H, dtype=jnp.float32)
    rowpick = jnp.repeat(jnp.eye(V, dtype=jnp.float32), H, axis=1)   # (V, VH):  [i, j*H+h]  = (i == j)
    texp = jnp.tile(eye_h, (1, V))                                   # (H, VH):  [h, j*H+h'] = (h == h')
    seg = jnp.tile(eye_h, (V, V))                                    # (VH, VH): same-head mask
    maskbd = jnp.tile(jnp.repeat(eye_h, I, axis=1), (V, 1))          # (VH, HI): [j*H+h, h'*I+c] = (h == h')

    # C_k re-laid out to (query i, key j * H + head h).
    ck2 = jnp.transpose(params["c_k"], (1, 2, 0)).reshape(V, VH)

    wcat_t = params["wcat"].T                                        # (C_in, C_out): cat_conv weight^T
    gamma = params["bn_gamma"].reshape(1, C)
    beta = params["bn_beta"].reshape(1, C)

    # Working set is a few hundred KiB -> single grid step, whole-array VMEM blocks
    # (default BlockSpecs), no pipeline needed.
    out = pl.pallas_call(
        functools.partial(_multi_global_part_kernel,
                          B=B, V=V, C=C, H=H, I=I, eps=1e-5),
        out_shape=jax.ShapeDtypeStruct((N, C), jnp.float32),
    )(x_flat, wmain, bmain, rowpick, texp, seg, maskbd, ck2, wcat_t, gamma, beta)

    # TODO(synk): dropout=None in the module -> identity, nothing to implement.
    return out.reshape(B0, B1, V, C)


# ---------------------------------------------------------------------------
# Deterministic parameter init matching the PyTorch __init__ shapes:
# kaiming_normal_ ~ N(0, 2/fan_in), conv biases / C_k zeros, BN gamma=1 beta=0.
# ---------------------------------------------------------------------------
def init_params(key, in_channels, inter_channels, num_nodes):
    C, I, V = in_channels, inter_channels, num_nodes
    H = C // I
    ks = jax.random.split(key, 5)
    std_proj = (2.0 / C) ** 0.5          # Conv1d(C -> I), kernel 1
    std_cp = (2.0 / (2 * I)) ** 0.5      # Conv2d(2I -> 1), kernel 1
    std_cat = (2.0 / C) ** 0.5           # Conv2d(C -> C), kernel 1
    return {
        "wg":  jax.random.normal(ks[0], (H, I, C), jnp.float32) * std_proj,
        "bg":  jnp.zeros((H, I), jnp.float32),
        "wth": jax.random.normal(ks[1], (H, I, C), jnp.float32) * std_proj,
        "bth": jnp.zeros((H, I), jnp.float32),
        "wph": jax.random.normal(ks[2], (H, I, C), jnp.float32) * std_proj,
        "bph": jnp.zeros((H, I), jnp.float32),
        "wcp": jax.random.normal(ks[3], (H, 2 * I), jnp.float32) * std_cp,
        "c_k": jnp.zeros((H, V, V), jnp.float32),     # nn.Parameter(torch.zeros(adj.shape))
        "wcat": jax.random.normal(ks[4], (C, C), jnp.float32) * std_cat,
        "bn_gamma": jnp.ones((C,), jnp.float32),
        "bn_beta": jnp.zeros((C,), jnp.float32),
    }


# ---------------------------------------------------------------------------
# Pure-JAX reference of the PyTorch forward (training-mode BN), for validation.
# ---------------------------------------------------------------------------
def _reference(x, params, I):
    B0, B1, V, C = x.shape
    H = C // I
    B = B0 * B1
    xf = x.reshape(B, V, C).astype(jnp.float32)
    ys = []
    for h in range(H):
        g = jnp.einsum('bvc,ic->bvi', xf, params["wg"][h]) + params["bg"][h]
        t = jnp.einsum('bvc,ic->bvi', xf, params["wth"][h]) + params["bth"][h]
        p = jnp.einsum('bvc,ic->bvi', xf, params["wph"][h]) + params["bph"][h]
        wcp = params["wcp"][h]
        f = (jnp.einsum('bvi,i->bv', t, wcp[:I])[:, :, None]
             + jnp.einsum('bvi,i->bv', p, wcp[I:])[:, None, :])
        f = jnp.where(f > 0, f, 0.2 * f)
        attn = jax.nn.softmax(f, axis=-1) + params["c_k"][h]
        ys.append(jnp.einsum('bij,bjd->bid', attn, g))
    ycat = jnp.concatenate(ys, axis=-1)                              # (B, V, C)
    z = jnp.einsum('bvc,oc->bvo', ycat, params["wcat"]).reshape(B * V, C)
    mean = z.mean(axis=0)
    var = z.var(axis=0)                                              # biased, matches BN train fwd
    out = (z - mean) / jnp.sqrt(var + 1e-5) * params["bn_gamma"] + params["bn_beta"]
    return jnp.maximum(out, 0.0).reshape(B0, B1, V, C)


if __name__ == "__main__":
    # small shapes: batch=2, persons=3, V=16 graph nodes (adj 16x16),
    # in_channels=32, inter_channels=8 -> 4 non-local heads.
    B0, B1, V, C, I = 2, 3, 16, 32, 8
    key = jax.random.PRNGKey(0)
    kx, kp, kc, kg, kb = jax.random.split(key, 5)
    x = jax.random.normal(kx, (B0, B1, V, C), jnp.float32)
    params = init_params(kp, C, I, V)
    # Perturb C_k and the BN affine params away from their trivial inits so the
    # numerical check exercises those code paths too.
    params["c_k"] = 0.1 * jax.random.normal(kc, (C // I, V, V), jnp.float32)
    params["bn_gamma"] = 1.0 + 0.1 * jax.random.normal(kg, (C,), jnp.float32)
    params["bn_beta"] = 0.1 * jax.random.normal(kb, (C,), jnp.float32)

    fn = jax.jit(multi_global_part, static_argnames=("inter_channels",))
    out = fn(x, params, inter_channels=I)
    jax.block_until_ready(out)
    assert out.shape == (B0, B1, V, C), out.shape

    ref = _reference(x, params, I)
    max_err = float(jnp.max(jnp.abs(out - ref)))
    assert max_err < 1e-3, f"kernel mismatch vs reference, max abs err = {max_err}"
    print("KERNEL_OK")
</pallas_src>

<mosaic_0001>
module attributes {stable_mosaic.version = 11 : i64} {
  func.func @_multi_global_part_kernel(%arg0: memref<96x32xf32, #tpu.memory_space<vmem>>, %arg1: memref<32x160xf32, #tpu.memory_space<vmem>>, %arg2: memref<1x160xf32, #tpu.memory_space<vmem>>, %arg3: memref<16x64xf32, #tpu.memory_space<vmem>>, %arg4: memref<4x64xf32, #tpu.memory_space<vmem>>, %arg5: memref<64x64xf32, #tpu.memory_space<vmem>>, %arg6: memref<64x32xf32, #tpu.memory_space<vmem>>, %arg7: memref<16x64xf32, #tpu.memory_space<vmem>>, %arg8: memref<32x32xf32, #tpu.memory_space<vmem>>, %arg9: memref<1x32xf32, #tpu.memory_space<vmem>>, %arg10: memref<1x32xf32, #tpu.memory_space<vmem>>, %arg11: memref<96x32xf32, #tpu.memory_space<vmem>>) attributes {dimension_semantics = [], scalar_prefetch = 0 : i64, scratch_operands = 0 : i64, tpu.core_type = #tpu.core_type<tc>} {
    %c0 = arith.constant 0 : index
    %c0_0 = arith.constant 0 : index
    %0 = vector.load %arg0[%c0, %c0_0] : memref<96x32xf32, #tpu.memory_space<vmem>>, vector<96x32xf32>
    %c0_1 = arith.constant 0 : index
    %c0_2 = arith.constant 0 : index
    %1 = vector.load %arg1[%c0_1, %c0_2] : memref<32x160xf32, #tpu.memory_space<vmem>>, vector<32x160xf32>
    %cst = arith.constant dense<0.000000e+00> : vector<96x160xf32>
    %2 = tpu.matmul %0, %1, %cst {dimension_numbers = #tpu.dot_dimension_numbers<[1], [0], [0], [1], [0, 0, 1, 1], [], []>} : vector<96x32xf32>, vector<32x160xf32>, vector<96x160xf32> -> vector<96x160xf32>
    %c0_3 = arith.constant 0 : index
    %c0_4 = arith.constant 0 : index
    %3 = vector.load %arg2[%c0_3, %c0_4] : memref<1x160xf32, #tpu.memory_space<vmem>>, vector<1x160xf32>
    %4 = vector.broadcast %3 : vector<1x160xf32> to vector<96x160xf32>
    %5 = arith.addf %2, %4 : vector<96x160xf32>
    %6 = vector.extract_strided_slice %5 {offsets = [0, 0], sizes = [96, 32], strides = [1, 1]} : vector<96x160xf32> to vector<96x32xf32>
    %7 = vector.extract_strided_slice %5 {offsets = [0, 32], sizes = [96, 64], strides = [1, 1]} : vector<96x160xf32> to vector<96x64xf32>
    %8 = vector.extract_strided_slice %5 {offsets = [0, 32], sizes = [96, 4], strides = [1, 1]} : vector<96x160xf32> to vector<96x4xf32>
    %9 = vector.extract_strided_slice %5 {offsets = [0, 96], sizes = [96, 64], strides = [1, 1]} : vector<96x160xf32> to vector<96x64xf32>
    %10 = vector.extract_strided_slice %5 {offsets = [0, 96], sizes = [96, 4], strides = [1, 1]} : vector<96x160xf32> to vector<96x4xf32>
    %11 = vector.shape_cast %9 : vector<96x64xf32> to vector<6x16x64xf32>
    %c0_5 = arith.constant 0 : index
    %c0_6 = arith.constant 0 : index
    %12 = vector.load %arg3[%c0_5, %c0_6] : memref<16x64xf32, #tpu.memory_space<vmem>>, vector<16x64xf32>
    %13 = vector.shape_cast %12 : vector<16x64xf32> to vector<1x16x64xf32>
    %14 = vector.broadcast %13 : vector<1x16x64xf32> to vector<6x16x64xf32>
    %15 = arith.mulf %11, %14 : vector<6x16x64xf32>
    %cst_7 = arith.constant dense<0.000000e+00> : vector<6x64xf32>
    %16 = vector.multi_reduction <add>, %15, %cst_7 [1] : vector<6x16x64xf32> to vector<6x64xf32>
    %17 = vector.shape_cast %16 : vector<6x64xf32> to vector<6x1x64xf32>
    %18 = vector.shape_cast %7 : vector<96x64xf32> to vector<6x16x64xf32>
    %19 = vector.broadcast %17 : vector<6x1x64xf32> to vector<6x16x64xf32>
    %20 = arith.addf %18, %19 : vector<6x16x64xf32>
    %cst_8 = arith.constant 0.000000e+00 : f32
    %21 = vector.broadcast %cst_8 : f32 to vector<6x16x64xf32>
    %22 = arith.cmpf ogt, %20, %21 : vector<6x16x64xf32>
    %cst_9 = arith.constant 2.000000e-01 : f32
    %23 = vector.broadcast %cst_9 : f32 to vector<6x16x64xf32>
    %24 = arith.mulf %23, %20 : vector<6x16x64xf32>
    %25 = arith.select %22, %20, %24 : vector<6x16x64xi1>, vector<6x16x64xf32>
    %26 = vector.shape_cast %10 : vector<96x4xf32> to vector<6x16x4xf32>
    %cst_10 = arith.constant dense<0xFF800000> : vector<6x4xf32>
    %27 = vector.multi_reduction <maximumf>, %26, %cst_10 [1] : vector<6x16x4xf32> to vector<6x4xf32>
    %28 = vector.shape_cast %27 : vector<6x4xf32> to vector<6x1x4xf32>
    %29 = vector.shape_cast %8 : vector<96x4xf32> to vector<6x16x4xf32>
    %30 = vector.broadcast %28 : vector<6x1x4xf32> to vector<6x16x4xf32>
    %31 = arith.addf %29, %30 : vector<6x16x4xf32>
    %cst_11 = arith.constant 0.000000e+00 : f32
    %32 = vector.broadcast %cst_11 : f32 to vector<6x16x4xf32>
    %33 = arith.cmpf ogt, %31, %32 : vector<6x16x4xf32>
    %cst_12 = arith.constant 2.000000e-01 : f32
    %34 = vector.broadcast %cst_12 : f32 to vector<6x16x4xf32>
    %35 = arith.mulf %34, %31 : vector<6x16x4xf32>
    %36 = arith.select %33, %31, %35 : vector<6x16x4xi1>, vector<6x16x4xf32>
    %37 = vector.shape_cast %36 : vector<6x16x4xf32> to vector<96x4xf32>
    %c0_13 = arith.constant 0 : index
    %c0_14 = arith.constant 0 : index
    %38 = vector.load %arg4[%c0_13, %c0_14] : memref<4x64xf32, #tpu.memory_space<vmem>>, vector<4x64xf32>
    %cst_15 = arith.constant dense<0.000000e+00> : vector<96x64xf32>
    %39 = tpu.matmul %37, %38, %cst_15 {dimension_numbers = #tpu.dot_dimension_numbers<[1], [0], [0], [1], [0, 0, 1, 1], [], []>} : vector<96x4xf32>, vector<4x64xf32>, vector<96x64xf32> -> vector<96x64xf32>
    %40 = vector.shape_cast %25 : vector<6x16x64xf32> to vector<96x64xf32>
    %41 = arith.subf %40, %39 : vector<96x64xf32>
    %42 = math.exp %41 : vector<96x64xf32>
    %c0_16 = arith.constant 0 : index
    %c0_17 = arith.constant 0 : index
    %43 = vector.load %arg5[%c0_16, %c0_17] : memref<64x64xf32, #tpu.memory_space<vmem>>, vector<64x64xf32>
    %cst_18 = arith.constant dense<0.000000e+00> : vector<96x64xf32>
    %44 = tpu.matmul %42, %43, %cst_18 {dimension_numbers = #tpu.dot_dimension_numbers<[1], [0], [0], [1], [0, 0, 1, 1], [], []>} : vector<96x64xf32>, vector<64x64xf32>, vector<96x64xf32> -> vector<96x64xf32>
    %45 = arith.divf %42, %44 : vector<96x64xf32>
    %46 = vector.shape_cast %45 : vector<96x64xf32> to vector<6x16x64xf32>
    %c0_19 = arith.constant 0 : index
    %c0_20 = arith.constant 0 : index
    %47 = vector.load %arg7[%c0_19, %c0_20] : memref<16x64xf32, #tpu.memory_space<vmem>>, vector<16x64xf32>
    %48 = vector.shape_cast %47 : vector<16x64xf32> to vector<1x16x64xf32>
    %49 = vector.broadcast %48 : vector<1x16x64xf32> to vector<6x16x64xf32>
    %50 = arith.addf %46, %49 : vector<6x16x64xf32>
    %51 = vector.shape_cast %6 : vector<96x32xf32> to vector<6x16x1x32xf32>
    %52 = vector.shape_cast %51 : vector<6x16x1x32xf32> to vector<6x16x1x32xf32>
    %53 = vector.broadcast %52 : vector<6x16x1x32xf32> to vector<6x16x4x32xf32>
    %54 = vector.shape_cast %53 : vector<6x16x4x32xf32> to vector<6x64x32xf32>
    %c0_21 = arith.constant 0 : index
    %c0_22 = arith.constant 0 : index
    %55 = vector.load %arg6[%c0_21, %c0_22] : memref<64x32xf32, #tpu.memory_space<vmem>>, vector<64x32xf32>
    %56 = vector.shape_cast %55 : vector<64x32xf32> to vector<1x64x32xf32>
    %57 = vector.broadcast %56 : vector<1x64x32xf32> to vector<6x64x32xf32>
    %58 = arith.mulf %54, %57 : vector<6x64x32xf32>
    "tpu.trace_start"() <{level = 10 : i32, message = "bik,bkc->bic"}> : () -> ()
    %cst_23 = arith.constant dense<0.000000e+00> : vector<6x16x32xf32>
    %59 = tpu.matmul %50, %58, %cst_23 {dimension_numbers = #tpu.dot_dimension_numbers<[2], [1], [1], [2], [0, 0, 0, 1, 1, 2], [0], [0]>} : vector<6x16x64xf32>, vector<6x64x32xf32>, vector<6x16x32xf32> -> vector<6x16x32xf32>
    "tpu.trace_stop"() : () -> ()
    %60 = vector.shape_cast %59 : vector<6x16x32xf32> to vector<96x32xf32>
    %c0_24 = arith.constant 0 : index
    %c0_25 = arith.constant 0 : index
    %61 = vector.load %arg8[%c0_24, %c0_25] : memref<32x32xf32, #tpu.memory_space<vmem>>, vector<32x32xf32>
    %cst_26 = arith.constant dense<0.000000e+00> : vector<96x32xf32>
    %62 = tpu.matmul %60, %61, %cst_26 {dimension_numbers = #tpu.dot_dimension_numbers<[1], [0], [0], [1], [0, 0, 1, 1], [], []>} : vector<96x32xf32>, vector<32x32xf32>, vector<96x32xf32> -> vector<96x32xf32>
    %63 = arith.mulf %62, %62 : vector<96x32xf32>
    %64 = tpu.concatenate %62, %63 in 1 : vector<96x32xf32>, vector<96x32xf32> -> vector<96x64xf32>
    %cst_27 = arith.constant 1.000000e+00 : f32
    %65 = vector.broadcast %cst_27 : f32 to vector<1x96xf32>
    %cst_28 = arith.constant dense<0.000000e+00> : vector<1x64xf32>
    %66 = tpu.matmul %65, %64, %cst_28 {dimension_numbers = #tpu.dot_dimension_numbers<[1], [0], [0], [1], [0, 0, 1, 1], [], []>} : vector<1x96xf32>, vector<96x64xf32>, vector<1x64xf32> -> vector<1x64xf32>
    %67 = vector.extract_strided_slice %66 {offsets = [0, 0], sizes = [1, 32], strides = [1, 1]} : vector<1x64xf32> to vector<1x32xf32>
    %cst_29 = arith.constant 0.010416667 : f32
    %68 = vector.broadcast %cst_29 : f32 to vector<1x32xf32>
    %69 = arith.mulf %67, %68 : vector<1x32xf32>
    %70 = vector.extract_strided_slice %66 {offsets = [0, 32], sizes = [1, 32], strides = [1, 1]} : vector<1x64xf32> to vector<1x32xf32>
    %cst_30 = arith.constant 0.010416667 : f32
    %71 = vector.broadcast %cst_30 : f32 to vector<1x32xf32>
    %72 = arith.mulf %70, %71 : vector<1x32xf32>
    %73 = arith.mulf %69, %69 : vector<1x32xf32>
    %74 = arith.subf %72, %73 : vector<1x32xf32>
    %c0_31 = arith.constant 0 : index
    %c0_32 = arith.constant 0 : index
    %75 = vector.load %arg9[%c0_31, %c0_32] : memref<1x32xf32, #tpu.memory_space<vmem>>, vector<1x32xf32>
    %cst_33 = arith.constant 9.99999974E-6 : f32
    %76 = vector.broadcast %cst_33 : f32 to vector<1x32xf32>
    %77 = arith.addf %74, %76 : vector<1x32xf32>
    %78 = math.rsqrt %77 : vector<1x32xf32>
    %79 = arith.mulf %75, %78 : vector<1x32xf32>
    %c0_34 = arith.constant 0 : index
    %c0_35 = arith.constant 0 : index
    %80 = vector.load %arg10[%c0_34, %c0_35] : memref<1x32xf32, #tpu.memory_space<vmem>>, vector<1x32xf32>
    %81 = arith.mulf %69, %79 : vector<1x32xf32>
    %82 = arith.subf %80, %81 : vector<1x32xf32>
    %83 = vector.broadcast %79 : vector<1x32xf32> to vector<96x32xf32>
    %84 = arith.mulf %62, %83 : vector<96x32xf32>
    %85 = vector.broadcast %82 : vector<1x32xf32> to vector<96x32xf32>
    %86 = arith.addf %84, %85 : vector<96x32xf32>
    %cst_36 = arith.constant 0.000000e+00 : f32
    %87 = vector.broadcast %cst_36 : f32 to vector<96x32xf32>
    %88 = arith.maximumf %86, %87 : vector<96x32xf32>
    %c0_37 = arith.constant 0 : index
    %c0_38 = arith.constant 0 : index
    %89 = vector.load %arg11[%c0_37, %c0_38] : memref<96x32xf32, #tpu.memory_space<vmem>>, vector<96x32xf32>
    tpu.vector_store %arg11[%c0_37, %c0_38], %88 {strides = array<i32>} : memref<96x32xf32, #tpu.memory_space<vmem>>, vector<96x32xf32>,
    return
  }
}

</mosaic_0001>

<llo_original>
// kernel: tile.47
$region0: #{tile.47}
  #allocation0 [shape = 's32[1]{0}', space=sflag, size = 0x4, scoped, tag = 'scoped memory for tile.47']
  %s0 = inlined_call_operand.vmem [shape: f32[4], index: 0, kind: input, shape index: {}]
  %s1 = inlined_call_operand.vmem [shape: f32[16,4], index: 1, kind: output, shape index: {}]
  // Predicated region
  $region2: #{tile.47} parent=0 // pred_check
    _
  $region3: #{tile.47} parent=0 // pred_check_branch
    %3 = sbr.rel (0) target = $region5
  $region4: #{tile.47} parent=0 // pred_region
    _
  $region5: #{tile.47} parent=0 // pred_fallthru
    _
  %v4 = vld [vmem:[%s0] ss:$0 sm:$0xff]
  %5 = vst [vmem:[%s1] sm:$0xff] %v4
  %s6 = scalar_lea.vmem %s1, 8
  %7 = vst [vmem:[%s6] sm:$0xff] %v4

// kernel: tile.48
$region0: #{tile.48}
  %s0 = inlined_call_operand.vmem [shape: f32[16,4], index: 0, kind: input, shape index: {}]
  %s1 = inlined_call_operand.vmem [shape: f32[64], index: 1, kind: output, shape index: {}]
  $region1: #{tile.48} parent=0
    #allocation0 [shape = 'u8[4096]{0}', space=vmem, size = 0x1000, scoped, tag = 'scoped mem for output reshape']
    %v2 = vld [vmem:[%s0] sm:$0x1]
    %vm3 = vcmask 31744
    %4 = vst.msk [vmem:[#allocation0] sm:$0x1] %vm3, %v2
    %s5 = scalar_lea.vmem %s0, 15
    %v6 = vld [vmem:[%s5] sm:$0x1]
    %7 = vrot.lane.b32.xlu0 %v6, 60
    %v8 = vpop.permute.xlu0 %7
    %vm9 = vcmask 523744
    %10 = vst.msk [vmem:[#allocation0] sm:$0x1] %vm9, %v8
    %s11 = scalar_lea.vmem %s0, 14
    %v12 = vld [vmem:[%s11] sm:$0x1]
    %13 = vrot.lane.b32.xlu0 %v12, 56
    %v14 = vpop.permute.xlu0 %13
    %vm15 = vcmask 490944
    %16 = vst.msk [vmem:[#allocation0] sm:$0x1] %vm15, %v14
    %s17 = scalar_lea.vmem %s0, 13
    %v18 = vld [vmem:[%s17] sm:$0x1]
    %19 = vrot.lane.b32.xlu0 %v18, 52
    %v20 = vpop.permute.xlu0 %19
    %vm21 = vcmask 458144
    %22 = vst.msk [vmem:[#allocation0] sm:$0x1] %vm21, %v20
    %s23 = scalar_lea.vmem %s0, 12
    %v24 = vld [vmem:[%s23] sm:$0x1]
    %25 = vrot.lane.b32.xlu0 %v24, 48
    %v26 = vpop.permute.xlu0 %25
    %vm27 = vcmask 425344
    %28 = vst.msk [vmem:[#allocation0] sm:$0x1] %vm27, %v26
    %s29 = scalar_lea.vmem %s0, 11
    %v30 = vld [vmem:[%s29] sm:$0x1]
    %31 = vrot.lane.b32.xlu0 %v30, 44
    %v32 = vpop.permute.xlu0 %31
    %vm33 = vcmask 392544
    %34 = vst.msk [vmem:[#allocation0] sm:$0x1] %vm33, %v32
    %s35 = scalar_lea.vmem %s0, 10
    %v36 = vld [vmem:[%s35] sm:$0x1]
    %37 = vrot.lane.b32.xlu0 %v36, 40
    %v38 = vpop.permute.xlu0 %37
    %vm39 = vcmask 359744
    %40 = vst.msk [vmem:[#allocation0] sm:$0x1] %vm39, %v38
    %s41 = scalar_lea.vmem %s0, 9
    %v42 = vld [vmem:[%s41] sm:$0x1]
    %43 = vrot.lane.b32.xlu0 %v42, 36
    %v44 = vpop.permute.xlu0 %43
    %vm45 = vcmask 326944
    %46 = vst.msk [vmem:[#allocation0] sm:$0x1] %vm45, %v44
    %s47 = scalar_lea.vmem %s0, 8
    %v48 = vld [vmem:[%s47] sm:$0x1]
    %49 = vrot.lane.b32.xlu0 %v48, 32
    %v50 = vpop.permute.xlu0 %49
    %vm51 = vcmask 294144
    %52 = vst.msk [vmem:[#allocation0] sm:$0x1] %vm51, %v50
    %s53 = scalar_lea.vmem %s0, 7
    %v54 = vld [vmem:[%s53] sm:$0x1]
    %55 = vrot.lane.b32.xlu0 %v54, 28
    %v56 = vpop.permute.xlu0 %55
    %vm57 = vcmask 261344
    %58 = vst.msk [vmem:[#allocation0] sm:$0x1] %vm57, %v56
    %s59 = scalar_lea.vmem %s0, 6
    %v60 = vld [vmem:[%s59] sm:$0x1]
    %61 = vrot.lane.b32.xlu0 %v60, 24
    %v62 = vpop.permute.xlu0 %61
    %vm63 = vcmask 228544
    %64 = vst.msk [vmem:[#allocation0] sm:$0x1] %vm63, %v62
    %s65 = scalar_lea.vmem %s0, 5
    %v66 = vld [vmem:[%s65] sm:$0x1]
    %67 = vrot.lane.b32.xlu0 %v66, 20
    %v68 = vpop.permute.xlu0 %67
    %vm69 = vcmask 195744
    %70 = vst.msk [vmem:[#allocation0] sm:$0x1] %vm69, %v68
    %s71 = scalar_lea.vmem %s0, 4
    %v72 = vld [vmem:[%s71] sm:$0x1]
    %73 = vrot.lane.b32.xlu0 %v72, 16
    %v74 = vpop.permute.xlu0 %73
    %vm75 = vcmask 162944
    %76 = vst.msk [vmem:[#allocation0] sm:$0x1] %vm75, %v74
    %s77 = scalar_lea.vmem %s0, 3
    %v78 = vld [vmem:[%s77] sm:$0x1]
    %79 = vrot.lane.b32.xlu0 %v78, 12
    %v80 = vpop.permute.xlu0 %79
    %vm81 = vcmask 130144
    %82 = vst.msk [vmem:[#allocation0] sm:$0x1] %vm81, %v80
    %s83 = scalar_lea.vmem %s0, 2
    %v84 = vld [vmem:[%s83] sm:$0x1]
    %85 = vrot.lane.b32.xlu0 %v84, 8
    %v86 = vpop.permute.xlu0 %85
    %vm87 = vcmask 97344
    %88 = vst.msk [vmem:[#allocation0] sm:$0x1] %vm87, %v86
    %s89 = scalar_lea.vmem %s0, 1
    %v90 = vld [vmem:[%s89] sm:$0x1]
    %91 = vrot.lane.b32.xlu0 %v90, 4
    %v92 = vpop.permute.xlu0 %91
    %vm93 = vcmask 64544
    %94 = vst.msk [vmem:[#allocation0] sm:$0x1] %vm93, %v92
    %s96 = sshll.u32 1, 1
    %s97 = ssub.s32 %s96, 1
    %v99 = vld [vmem:[#allocation0] sm:%s97]
    %s100 = sshll.u32 1, 1
    %s101 = ssub.s32 %s100, 1
    %102 = vst [vmem:[%s1] sm:%s101] %v99

// kernel: tile.62
$region0: #{tile.62}
  #allocation0 [shape = 's32[1]{0}', space=sflag, size = 0x4, scoped, tag = 'scoped memory for tile.62']
  %s0 = inlined_call_operand.vmem [shape: f32[4,4], index: 0, kind: input, shape index: {}]
  %s1 = inlined_call_operand.vmem [shape: f32[16,4,16,4], index: 1, kind: output, shape index: {}]
  // Predicated region
  $region2: #{tile.62} parent=0 // pred_check
    _
  $region3: #{tile.62} parent=0 // pred_check_branch
    %3 = sbr.rel (0) target = $region5
  $region4: #{tile.62} parent=0 // pred_region
    _
  $region5: #{tile.62} parent=0 // pred_fallthru
    _
  %v4 = vld [vmem:[%s0] ss:$0 sm:$0xff]
  %5 = vst [vmem:[%s1] sm:$0xff] %v4
  %s6 = scalar_lea.vmem %s1, 64
  %7 = vst [vmem:[%s6] sm:$0xff] %v4
  %s8 = scalar_lea.vmem %s1, 128
  %9 = vst [vmem:[%s8] sm:$0xff] %v4
  %s10 = scalar_lea.vmem %s1, 192
  %11 = vst [vmem:[%s10] sm:$0xff] %v4
  %s12 = scalar_lea.vmem %s1, 256
  %13 = vst [vmem:[%s12] sm:$0xff] %v4
  %s14 = scalar_lea.vmem %s1, 320
  %15 = vst [vmem:[%s14] sm:$0xff] %v4
  %s16 = scalar_lea.vmem %s1, 384
  %17 = vst [vmem:[%s16] sm:$0xff] %v4
  %s18 = scalar_lea.vmem %s1, 448
  %19 = vst [vmem:[%s18] sm:$0xff] %v4
  %s20 = scalar_lea.vmem %s1, 512
  %21 = vst [vmem:[%s20] sm:$0xff] %v4
  %s22 = scalar_lea.vmem %s1, 576
  %23 = vst [vmem:[%s22] sm:$0xff] %v4
  %s24 = scalar_lea.vmem %s1, 640
  %25 = vst [vmem:[%s24] sm:$0xff] %v4
  %s26 = scalar_lea.vmem %s1, 704
  %27 = vst [vmem:[%s26] sm:$0xff] %v4
  %s28 = scalar_lea.vmem %s1, 768
  %29 = vst [vmem:[%s28] sm:$0xff] %v4
  %s30 = scalar_lea.vmem %s1, 832
  %31 = vst [vmem:[%s30] sm:$0xff] %v4
  %s32 = scalar_lea.vmem %s1, 896
  %33 = vst [vmem:[%s32] sm:$0xff] %v4
  %s34 = scalar_lea.vmem %s1, 960
  %35 = vst [vmem:[%s34] sm:$0xff] %v4
  %s36 = scalar_lea.vmem %s0, 1
  %v37 = vld [vmem:[%s36] ss:$0 sm:$0xff]
  %s38 = scalar_lea.vmem %s1, 16
  %39 = vst [vmem:[%s38] sm:$0xff] %v37
  %s40 = scalar_lea.vmem %s1, 80
  %41 = vst [vmem:[%s40] sm:$0xff] %v37
  %s42 = scalar_lea.vmem %s1, 144
  %43 = vst [vmem:[%s42] sm:$0xff] %v37
  %s44 = scalar_lea.vmem %s1, 208
  %45 = vst [vmem:[%s44] sm:$0xff] %v37
  %s46 = scalar_lea.vmem %s1, 272
  %47 = vst [vmem:[%s46] sm:$0xff] %v37
  %s48 = scalar_lea.vmem %s1, 336
  %49 = vst [vmem:[%s48] sm:$0xff] %v37
  %s50 = scalar_lea.vmem %s1, 400
  %51 = vst [vmem:[%s50] sm:$0xff] %v37
  %s52 = scalar_lea.vmem %s1, 464
  %53 = vst [vmem:[%s52] sm:$0xff] %v37
  %s54 = scalar_lea.vmem %s1, 528
  %55 = vst [vmem:[%s54] sm:$0xff] %v37
  %s56 = scalar_lea.vmem %s1, 592
  %57 = vst [vmem:[%s56] sm:$0xff] %v37
  %s58 = scalar_lea.vmem %s1, 656
  %59 = vst [vmem:[%s58] sm:$0xff] %v37
  %s60 = scalar_lea.vmem %s1, 720
  %61 = vst [vmem:[%s60] sm:$0xff] %v37
  %s62 = scalar_lea.vmem %s1, 784
  %63 = vst [vmem:[%s62] sm:$0xff] %v37
  %s64 = scalar_lea.vmem %s1, 848
  %65 = vst [vmem:[%s64] sm:$0xff] %v37
  %s66 = scalar_lea.vmem %s1, 912
  %67 = vst [vmem:[%s66] sm:$0xff] %v37
  %s68 = scalar_lea.vmem %s1, 976
  %69 = vst [vmem:[%s68] sm:$0xff] %v37
  %s70 = scalar_lea.vmem %s0, 2
  %v71 = vld [vmem:[%s70] ss:$0 sm:$0xff]
  %s72 = scalar_lea.vmem %s1, 32
  %73 = vst [vmem:[%s72] sm:$0xff] %v71
  %s74 = scalar_lea.vmem %s1, 96
  %75 = vst [vmem:[%s74] sm:$0xff] %v71
  %s76 = scalar_lea.vmem %s1, 160
  %77 = vst [vmem:[%s76] sm:$0xff] %v71
  %s78 = scalar_lea.vmem %s1, 224
  %79 = vst [vmem:[%s78] sm:$0xff] %v71
  %s80 = scalar_lea.vmem %s1, 288
  %81 = vst [vmem:[%s80] sm:$0xff] %v71
  %s82 = scalar_lea.vmem %s1, 352
  %83 = vst [vmem:[%s82] sm:$0xff] %v71
  %s84 = scalar_lea.vmem %s1, 416
  %85 = vst [vmem:[%s84] sm:$0xff] %v71
  %s86 = scalar_lea.vmem %s1, 480
  %87 = vst [vmem:[%s86] sm:$0xff] %v71
  %s88 = scalar_lea.vmem %s1, 544
  %89 = vst [vmem:[%s88] sm:$0xff] %v71
  %s90 = scalar_lea.vmem %s1, 608
  %91 = vst [vmem:[%s90] sm:$0xff] %v71
  %s92 = scalar_lea.vmem %s1, 672
  %93 = vst [vmem:[%s92] sm:$0xff] %v71
  %s94 = scalar_lea.vmem %s1, 736
  %95 = vst [vmem:[%s94] sm:$0xff] %v71
  %s96 = scalar_lea.vmem %s1, 800
  %97 = vst [vmem:[%s96] sm:$0xff] %v71
  %s98 = scalar_lea.vmem %s1, 864
  %99 = vst [vmem:[%s98] sm:$0xff] %v71
  %s100 = scalar_lea.vmem %s1, 928
  %101 = vst [vmem:[%s100] sm:$0xff] %v71
  %s102 = scalar_lea.vmem %s1, 992
  %103 = vst [vmem:[%s102] sm:$0xff] %v71
  %s104 = scalar_lea.vmem %s0, 3
  %v105 = vld [vmem:[%s104] ss:$0 sm:$0xff]
  %s106 = scalar_lea.vmem %s1, 48
  %107 = vst [vmem:[%s106] sm:$0xff] %v105
  %s108 = scalar_lea.vmem %s1, 112
  %109 = vst [vmem:[%s108] sm:$0xff] %v105
  %s110 = scalar_lea.vmem %s1, 176
  %111 = vst [vmem:[%s110] sm:$0xff] %v105
  %s112 = scalar_lea.vmem %s1, 240
  %113 = vst [vmem:[%s112] sm:$0xff] %v105
  %s114 = scalar_lea.vmem %s1, 304
  %115 = vst [vmem:[%s114] sm:$0xff] %v105
  %s116 = scalar_lea.vmem %s1, 368
  %117 = vst [vmem:[%s116] sm:$0xff] %v105
  %s118 = scalar_lea.vmem %s1, 432
  %119 = vst [vmem:[%s118] sm:$0xff] %v105
  %s120 = scalar_lea.vmem %s1, 496
  %121 = vst [vmem:[%s120] sm:$0xff] %v105
  %s122 = scalar_lea.vmem %s1, 560
  %123 = vst [vmem:[%s122] sm:$0xff] %v105
  %s124 = scalar_lea.vmem %s1, 624
  %125 = vst [vmem:[%s124] sm:$0xff] %v105
  %s126 = scalar_lea.vmem %s1, 688
  %127 = vst [vmem:[%s126] sm:$0xff] %v105
  %s128 = scalar_lea.vmem %s1, 752
  %129 = vst [vmem:[%s128] sm:$0xff] %v105
  %s130 = scalar_lea.vmem %s1, 816
  %131 = vst [vmem:[%s130] sm:$0xff] %v105
  %s132 = scalar_lea.vmem %s1, 880
  %133 = vst [vmem:[%s132] sm:$0xff] %v105
  %s134 = scalar_lea.vmem %s1, 944
  %135 = vst [vmem:[%s134] sm:$0xff] %v105
  %s136 = scalar_lea.vmem %s1, 1008
  %137 = vst [vmem:[%s136] sm:$0xff] %v105
  %s138 = scalar_lea.vmem %s1, 8
  %139 = vst [vmem:[%s138] sm:$0xff] %v4
  %s140 = scalar_lea.vmem %s1, 72
  %141 = vst [vmem:[%s140] sm:$0xff] %v4
  %s142 = scalar_lea.vmem %s1, 136
  %143 = vst [vmem:[%s142] sm:$0xff] %v4
  %s144 = scalar_lea.vmem %s1, 200
  %145 = vst [vmem:[%s144] sm:$0xff] %v4
  %s146 = scalar_lea.vmem %s1, 264
  %147 = vst [vmem:[%s146] sm:$0xff] %v4
  %s148 = scalar_lea.vmem %s1, 328
  %149 = vst [vmem:[%s148] sm:$0xff] %v4
  %s150 = scalar_lea.vmem %s1, 392
  %151 = vst [vmem:[%s150] sm:$0xff] %v4
  %s152 = scalar_lea.vmem %s1, 456
  %153 = vst [vmem:[%s152] sm:$0xff] %v4
  %s154 = scalar_lea.vmem %s1, 520
  %155 = vst [vmem:[%s154] sm:$0xff] %v4
  %s156 = scalar_lea.vmem %s1, 584
  %157 = vst [vmem:[%s156] sm:$0xff] %v4
  %s158 = scalar_lea.vmem %s1, 648
  %159 = vst [vmem:[%s158] sm:$0xff] %v4
  %s160 = scalar_lea.vmem %s1, 712
  %161 = vst [vmem:[%s160] sm:$0xff] %v4
  %s162 = scalar_lea.vmem %s1, 776
  %163 = vst [vmem:[%s162] sm:$0xff] %v4
  %s164 = scalar_lea.vmem %s1, 840
  %165 = vst [vmem:[%s164] sm:$0xff] %v4
  %s166 = scalar_lea.vmem %s1, 904
  %167 = vst [vmem:[%s166] sm:$0xff] %v4
  %s168 = scalar_lea.vmem %s1, 968
  %169 = vst [vmem:[%s168] sm:$0xff] %v4
  %s170 = scalar_lea.vmem %s1, 24
  %171 = vst [vmem:[%s170] sm:$0xff] %v37
  %s172 = scalar_lea.vmem %s1, 88
  %173 = vst [vmem:[%s172] sm:$0xff] %v37
  %s174 = scalar_lea.vmem %s1, 152
  %175 = vst [vmem:[%s174] sm:$0xff] %v37
  %s176 = scalar_lea.vmem %s1, 216
  %177 = vst [vmem:[%s176] sm:$0xff] %v37
  %s178 = scalar_lea.vmem %s1, 280
  %179 = vst [vmem:[%s178] sm:$0xff] %v37
  %s180 = scalar_lea.vmem %s1, 344
  %181 = vst [vmem:[%s180] sm:$0xff] %v37
  %s182 = scalar_lea.vmem %s1, 408
  %183 = vst [vmem:[%s182] sm:$0xff] %v37
  %s184 = scalar_lea.vmem %s1, 472
  %185 = vst [vmem:[%s184] sm:$0xff] %v37
  %s186 = scalar_lea.vmem %s1, 536
  %187 = vst [vmem:[%s186] sm:$0xff] %v37
  %s188 = scalar_lea.vmem %s1, 600
  %189 = vst [vmem:[%s188] sm:$0xff] %v37
  %s190 = scalar_lea.vmem %s1, 664
  %191 = vst [vmem:[%s190] sm:$0xff] %v37
  %s192 = scalar_lea.vmem %s1, 728
  %193 = vst [vmem:[%s192] sm:$0xff] %v37
  %s194 = scalar_lea.vmem %s1, 792
  %195 = vst [vmem:[%s194] sm:$0xff] %v37
  %s196 = scalar_lea.vmem %s1, 856
  %197 = vst [vmem:[%s196] sm:$0xff] %v37
  %s198 = scalar_lea.vmem %s1, 920
  %199 = vst [vmem:[%s198] sm:$0xff] %v37
  %s200 = scalar_lea.vmem %s1, 984
  %201 = vst [vmem:[%s200] sm:$0xff] %v37
  %s202 = scalar_lea.vmem %s1, 40
  %203 = vst [vmem:[%s202] sm:$0xff] %v71
  %s204 = scalar_lea.vmem %s1, 104
  %205 = vst [vmem:[%s204] sm:$0xff] %v71
  %s206 = scalar_lea.vmem %s1, 168
  %207 = vst [vmem:[%s206] sm:$0xff] %v71
  %s208 = scalar_lea.vmem %s1, 232
  %209 = vst [vmem:[%s208] sm:$0xff] %v71
  %s210 = scalar_lea.vmem %s1, 296
  %211 = vst [vmem:[%s210] sm:$0xff] %v71
  %s212 = scalar_lea.vmem %s1, 360
  %213 = vst [vmem:[%s212] sm:$0xff] %v71
  %s214 = scalar_lea.vmem %s1, 424
  %215 = vst [vmem:[%s214] sm:$0xff] %v71
  %s216 = scalar_lea.vmem %s1, 488
  %217 = vst [vmem:[%s216] sm:$0xff] %v71
  %s218 = scalar_lea.vmem %s1, 552
  %219 = vst [vmem:[%s218] sm:$0xff] %v71
  %s220 = scalar_lea.vmem %s1, 616
  %221 = vst [vmem:[%s220] sm:$0xff] %v71
  %s222 = scalar_lea.vmem %s1, 680
  %223 = vst [vmem:[%s222] sm:$0xff] %v71
  %s224 = scalar_lea.vmem %s1, 744
  %225 = vst [vmem:[%s224] sm:$0xff] %v71
  %s226 = scalar_lea.vmem %s1, 808
  %227 = vst [vmem:[%s226] sm:$0xff] %v71
  %s228 = scalar_lea.vmem %s1, 872
  %229 = vst [vmem:[%s228] sm:$0xff] %v71
  %s230 = scalar_lea.vmem %s1, 936
  %231 = vst [vmem:[%s230] sm:$0xff] %v71
  %s232 = scalar_lea.vmem %s1, 1000
  %233 = vst [vmem:[%s232] sm:$0xff] %v71
  %s234 = scalar_lea.vmem %s1, 56
  %235 = vst [vmem:[%s234] sm:$0xff] %v105
  %s236 = scalar_lea.vmem %s1, 120
  %237 = vst [vmem:[%s236] sm:$0xff] %v105
  %s238 = scalar_lea.vmem %s1, 184
  %239 = vst [vmem:[%s238] sm:$0xff] %v105
  %s240 = scalar_lea.vmem %s1, 248
  %241 = vst [vmem:[%s240] sm:$0xff] %v105
  %s242 = scalar_lea.vmem %s1, 312
  %243 = vst [vmem:[%s242] sm:$0xff] %v105
  %s244 = scalar_lea.vmem %s1, 376
  %245 = vst [vmem:[%s244] sm:$0xff] %v105
  %s246 = scalar_lea.vmem %s1, 440
  %247 = vst [vmem:[%s246] sm:$0xff] %v105
  %s248 = scalar_lea.vmem %s1, 504
  %249 = vst [vmem:[%s248] sm:$0xff] %v105
  %s250 = scalar_lea.vmem %s1, 568
  %251 = vst [vmem:[%s250] sm:$0xff] %v105
  %s252 = scalar_lea.vmem %s1, 632
  %253 = vst [vmem:[%s252] sm:$0xff] %v105
  %s254 = scalar_lea.vmem %s1, 696
  %255 = vst [vmem:[%s254] sm:$0xff] %v105
  %s256 = scalar_lea.vmem %s1, 760
  %257 = vst [vmem:[%s256] sm:$0xff] %v105
  %s258 = scalar_lea.vmem %s1, 824
  %259 = vst [vmem:[%s258] sm:$0xff] %v105
  %s260 = scalar_lea.vmem %s1, 888
  %261 = vst [vmem:[%s260] sm:$0xff] %v105
  %s262 = scalar_lea.vmem %s1, 952
  %263 = vst [vmem:[%s262] sm:$0xff] %v105
  %s264 = scalar_lea.vmem %s1, 1016
  %265 = vst [vmem:[%s264] sm:$0xff] %v105

// kernel: tile.58
$region0: #{tile.58}
  %s0 = inlined_call_operand.vmem [shape: f32[4,16,4], index: 0, kind: input, shape index: {}]
  %s1 = inlined_call_operand.vmem [shape: f32[4,64], index: 1, kind: output, shape index: {}]
  $region1: #{tile.58} parent=0
    #allocation0 [shape = 'u8[4096]{0}', space=vmem, size = 0x1000, scoped, tag = 'scoped mem for output reshape']
    %s2 = smov 3
    %v3 = vld [vmem:[%s0] ss:$16 sm:%s2]
    %s4 = smov 12
    %v5 = vld [vmem:[%s0] ss:$16 sm:%s4]
    %vm6 = vcmask 1043458
    %v7 = vsel %vm6, %v5, %v3
    %vm8 = vcmask 31744
    %9 = vst.msk [vmem:[#allocation0] sm:$0xf] %vm8, %v7
    %s10 = scalar_lea.vmem %s0, 15
    %s11 = smov 3
    %v12 = vld [vmem:[%s10] ss:$16 sm:%s11]
    %s13 = scalar_lea.vmem %s0, 15
    %s14 = smov 12
    %v15 = vld [vmem:[%s13] ss:$16 sm:%s14]
    %vm16 = vcmask 1043458
    %v17 = vsel %vm16, %v15, %v12
    %18 = vrot.lane.b32.xlu0 %v17, 60
    %v19 = vpop.permute.xlu0 %18
    %vm20 = vcmask 523744
    %21 = vst.msk [vmem:[#allocation0] sm:$0xf] %vm20, %v19
    %s22 = scalar_lea.vmem %s0, 14
    %s23 = smov 3
    %v24 = vld [vmem:[%s22] ss:$16 sm:%s23]
    %s25 = scalar_lea.vmem %s0, 14
    %s26 = smov 12
    %v27 = vld [vmem:[%s25] ss:$16 sm:%s26]
    %vm28 = vcmask 1043458
    %v29 = vsel %vm28, %v27, %v24
    %30 = vrot.lane.b32.xlu0 %v29, 56
    %v31 = vpop.permute.xlu0 %30
    %vm32 = vcmask 490944
    %33 = vst.msk [vmem:[#allocation0] sm:$0xf] %vm32, %v31
    %s34 = scalar_lea.vmem %s0, 13
    %s35 = smov 3
    %v36 = vld [vmem:[%s34] ss:$16 sm:%s35]
    %s37 = scalar_lea.vmem %s0, 13
    %s38 = smov 12
    %v39 = vld [vmem:[%s37] ss:$16 sm:%s38]
    %vm40 = vcmask 1043458
    %v41 = vsel %vm40, %v39, %v36
    %42 = vrot.lane.b32.xlu0 %v41, 52
    %v43 = vpop.permute.xlu0 %42
    %vm44 = vcmask 458144
    %45 = vst.msk [vmem:[#allocation0] sm:$0xf] %vm44, %v43
    %s46 = scalar_lea.vmem %s0, 12
    %s47 = smov 3
    %v48 = vld [vmem:[%s46] ss:$16 sm:%s47]
    %s49 = scalar_lea.vmem %s0, 12
    %s50 = smov 12
    %v51 = vld [vmem:[%s49] ss:$16 sm:%s50]
    %vm52 = vcmask 1043458
    %v53 = vsel %vm52, %v51, %v48
    %54 = vrot.lane.b32.xlu0 %v53, 48
    %v55 = vpop.permute.xlu0 %54
    %vm56 = vcmask 425344
    %57 = vst.msk [vmem:[#allocation0] sm:$0xf] %vm56, %v55
    %s58 = scalar_lea.vmem %s0, 11
    %s59 = smov 3
    %v60 = vld [vmem:[%s58] ss:$16 sm:%s59]
    %s61 = scalar_lea.vmem %s0, 11
    %s62 = smov 12
    %v63 = vld [vmem:[%s61] ss:$16 sm:%s62]
    %vm64 = vcmask 1043458
    %v65 = vsel %vm64, %v63, %v60
    %66 = vrot.lane.b32.xlu0 %v65, 44
    %v67 = vpop.permute.xlu0 %66
    %vm68 = vcmask 392544
    %69 = vst.msk [vmem:[#allocation0] sm:$0xf] %vm68, %v67
    %s70 = scalar_lea.vmem %s0, 10
    %s71 = smov 3
    %v72 = vld [vmem:[%s70] ss:$16 sm:%s71]
    %s73 = scalar_lea.vmem %s0, 10
    %s74 = smov 12
    %v75 = vld [vmem:[%s73] ss:$16 sm:%s74]
    %vm76 = vcmask 1043458
    %v77 = vsel %vm76, %v75, %v72
    %78 = vrot.lane.b32.xlu0 %v77, 40
    %v79 = vpop.permute.xlu0 %78
    %vm80 = vcmask 359744
    %81 = vst.msk [vmem:[#allocation0] sm:$0xf] %vm80, %v79
    %s82 = scalar_lea.vmem %s0, 9
    %s83 = smov 3
    %v84 = vld [vmem:[%s82] ss:$16 sm:%s83]
    %s85 = scalar_lea.vmem %s0, 9
    %s86 = smov 12
    %v87 = vld [vmem:[%s85] ss:$16 sm:%s86]
    %vm88 = vcmask 1043458
    %v89 = vsel %vm88, %v87, %v84
    %90 = vrot.lane.b32.xlu0 %v89, 36
    %v91 = vpop.permute.xlu0 %90
    %vm92 = vcmask 326944
    %93 = vst.msk [vmem:[#allocation0] sm:$0xf] %vm92, %v91
    %s94 = scalar_lea.vmem %s0, 8
    %s95 = smov 3
    %v96 = vld [vmem:[%s94] ss:$16 sm:%s95]
    %s97 = scalar_lea.vmem %s0, 8
    %s98 = smov 12
    %v99 = vld [vmem:[%s97] ss:$16 sm:%s98]
    %vm100 = vcmask 1043458
    %v101 = vsel %vm100, %v99, %v96
    %102 = vrot.lane.b32.xlu0 %v101, 32
    %v103 = vpop.permute.xlu0 %102
    %vm104 = vcmask 294144
    %105 = vst.msk [vmem:[#allocation0] sm:$0xf] %vm104, %v103
    %s106 = scalar_lea.vmem %s0, 7
    %s107 = smov 3
    %v108 = vld [vmem:[%s106] ss:$16 sm:%s107]
    %s109 = scalar_lea.vmem %s0, 7
    %s110 = smov 12
    %v111 = vld [vmem:[%s109] ss:$16 sm:%s110]
    %vm112 = vcmask 1043458
    %v113 = vsel %vm112, %v111, %v108
    %114 = vrot.lane.b32.xlu0 %v113, 28
    %v115 = vpop.permute.xlu0 %114
    %vm116 = vcmask 261344
    %117 = vst.msk [vmem:[#allocation0] sm:$0xf] %vm116, %v115
    %s118 = scalar_lea.vmem %s0, 6
    %s119 = smov 3
    %v120 = vld [vmem:[%s118] ss:$16 sm:%s119]
    %s121 = scalar_lea.vmem %s0, 6
    %s122 = smov 12
    %v123 = vld [vmem:[%s121] ss:$16 sm:%s122]
    %vm124 = vcmask 1043458
    %v125 = vsel %vm124, %v123, %v120
    %126 = vrot.lane.b32.xlu0 %v125, 24
    %v127 = vpop.permute.xlu0 %126
    %vm128 = vcmask 228544
    %129 = vst.msk [vmem:[#allocation0] sm:$0xf] %vm128, %v127
    %s130 = scalar_lea.vmem %s0, 5
    %s131 = smov 3
    %v132 = vld [vmem:[%s130] ss:$16 sm:%s131]
    %s133 = scalar_lea.vmem %s0, 5
    %s134 = smov 12
    %v135 = vld [vmem:[%s133] ss:$16 sm:%s134]
    %vm136 = vcmask 1043458
    %v137 = vsel %vm136, %v135, %v132
    %138 = vrot.lane.b32.xlu0 %v137, 20
    %v139 = vpop.permute.xlu0 %138
    %vm140 = vcmask 195744
    %141 = vst.msk [vmem:[#allocation0] sm:$0xf] %vm140, %v139
    %s142 = scalar_lea.vmem %s0, 4
    %s143 = smov 3
    %v144 = vld [vmem:[%s142] ss:$16 sm:%s143]
    %s145 = scalar_lea.vmem %s0, 4
    %s146 = smov 12
    %v147 = vld [vmem:[%s145] ss:$16 sm:%s146]
    %vm148 = vcmask 1043458
    %v149 = vsel %vm148, %v147, %v144
    %150 = vrot.lane.b32.xlu0 %v149, 16
    %v151 = vpop.permute.xlu0 %150
    %vm152 = vcmask 162944
    %153 = vst.msk [vmem:[#allocation0] sm:$0xf] %vm152, %v151
    %s154 = scalar_lea.vmem %s0, 3
    %s155 = smov 3
    %v156 = vld [vmem:[%s154] ss:$16 sm:%s155]
    %s157 = scalar_lea.vmem %s0, 3
    %s158 = smov 12
    %v159 = vld [vmem:[%s157] ss:$16 sm:%s158]
    %vm160 = vcmask 1043458
    %v161 = vsel %vm160, %v159, %v156
    %162 = vrot.lane.b32.xlu0 %v161, 12
    %v163 = vpop.permute.xlu0 %162
    %vm164 = vcmask 130144
    %165 = vst.msk [vmem:[#allocation0] sm:$0xf] %vm164, %v163
    %s166 = scalar_lea.vmem %s0, 2
    %s167 = smov 3
    %v168 = vld [vmem:[%s166] ss:$16 sm:%s167]
    %s169 = scalar_lea.vmem %s0, 2
    %s170 = smov 12
    %v171 = vld [vmem:[%s169] ss:$16 sm:%s170]
    %vm172 = vcmask 1043458
    %v173 = vsel %vm172, %v171, %v168
    %174 = vrot.lane.b32.xlu0 %v173, 8
    %v175 = vpop.permute.xlu0 %174
    %vm176 = vcmask 97344
    %177 = vst.msk [vmem:[#allocation0] sm:$0xf] %vm176, %v175
    %s178 = scalar_lea.vmem %s0, 1
    %s179 = smov 3
    %v180 = vld [vmem:[%s178] ss:$16 sm:%s179]
    %s181 = scalar_lea.vmem %s0, 1
    %s182 = smov 12
    %v183 = vld [vmem:[%s181] ss:$16 sm:%s182]
    %vm184 = vcmask 1043458
    %v185 = vsel %vm184, %v183, %v180
    %186 = vrot.lane.b32.xlu0 %v185, 4
    %v187 = vpop.permute.xlu0 %186
    %vm188 = vcmask 64544
    %189 = vst.msk [vmem:[#allocation0] sm:$0xf] %vm188, %v187
    %s191 = sshll.u32 1, 4
    %s192 = ssub.s32 %s191, 1
    %v194 = vld [vmem:[#allocation0] sm:%s192]
    %s195 = sshll.u32 1, 4
    %s196 = ssub.s32 %s195, 1
    %197 = vst [vmem:[%s1] sm:%s196] %v194

// kernel: tile.63
$region0: #{tile.63}
  %s0 = inlined_call_operand.vmem [shape: f32[16,4,16,4], index: 0, kind: input, shape index: {}]
  %s1 = inlined_call_operand.vmem [shape: f32[64,64], index: 1, kind: output, shape index: {}]
  %s2 = smov 3
  %v3 = vld [vmem:[%s0] ss:$16 sm:%s2]
  %s4 = smov 12
  %v5 = vld [vmem:[%s0] ss:$16 sm:%s4]
  %vm6 = vcmask 1043458
  %v7 = vsel %vm6, %v5, %v3
  %s8 = smov 48
  %v9 = vld [vmem:[%s0] ss:$16 sm:%s8]
  %vm10 = vcmask 1045508
  %v11 = vsel %vm10, %v9, %v7
  %s12 = smov 192
  %v13 = vld [vmem:[%s0] ss:$16 sm:%s12]
  %vm14 = vcmask 1047558
  %v15 = vsel %vm14, %v13, %v11
  %vm16 = vcmask 31744
  %17 = vst.msk [vmem:[%s1] sm:$0xff] %vm16, %v15
  %s18 = scalar_lea.vmem %s0, 128
  %s19 = smov 3
  %v20 = vld [vmem:[%s18] ss:$16 sm:%s19]
  %s21 = scalar_lea.vmem %s0, 128
  %s22 = smov 12
  %v23 = vld [vmem:[%s21] ss:$16 sm:%s22]
  %vm24 = vcmask 1043458
  %v25 = vsel %vm24, %v23, %v20
  %s26 = scalar_lea.vmem %s0, 128
  %s27 = smov 48
  %v28 = vld [vmem:[%s26] ss:$16 sm:%s27]
  %vm29 = vcmask 1045508
  %v30 = vsel %vm29, %v28, %v25
  %s31 = scalar_lea.vmem %s0, 128
  %s32 = smov 192
  %v33 = vld [vmem:[%s31] ss:$16 sm:%s32]
  %vm34 = vcmask 1047558
  %v35 = vsel %vm34, %v33, %v30
  %vm36 = vcmask 31744
  %s37 = scalar_lea.vmem %s1, 8
  %38 = vst.msk [vmem:[%s37] sm:$0xff] %vm36, %v35
  %s39 = scalar_lea.vmem %s0, 256
  %s40 = smov 3
  %v41 = vld [vmem:[%s39] ss:$16 sm:%s40]
  %s42 = scalar_lea.vmem %s0, 256
  %s43 = smov 12
  %v44 = vld [vmem:[%s42] ss:$16 sm:%s43]
  %vm45 = vcmask 1043458
  %v46 = vsel %vm45, %v44, %v41
  %s47 = scalar_lea.vmem %s0, 256
  %s48 = smov 48
  %v49 = vld [vmem:[%s47] ss:$16 sm:%s48]
  %vm50 = vcmask 1045508
  %v51 = vsel %vm50, %v49, %v46
  %s52 = scalar_lea.vmem %s0, 256
  %s53 = smov 192
  %v54 = vld [vmem:[%s52] ss:$16 sm:%s53]
  %vm55 = vcmask 1047558
  %v56 = vsel %vm55, %v54, %v51
  %vm57 = vcmask 31744
  %s58 = scalar_lea.vmem %s1, 16
  %59 = vst.msk [vmem:[%s58] sm:$0xff] %vm57, %v56
  %s60 = scalar_lea.vmem %s0, 384
  %s61 = smov 3
  %v62 = vld [vmem:[%s60] ss:$16 sm:%s61]
  %s63 = scalar_lea.vmem %s0, 384
  %s64 = smov 12
  %v65 = vld [vmem:[%s63] ss:$16 sm:%s64]
  %vm66 = vcmask 1043458
  %v67 = vsel %vm66, %v65, %v62
  %s68 = scalar_lea.vmem %s0, 384
  %s69 = smov 48
  %v70 = vld [vmem:[%s68] ss:$16 sm:%s69]
  %vm71 = vcmask 1045508
  %v72 = vsel %vm71, %v70, %v67
  %s73 = scalar_lea.vmem %s0, 384
  %s74 = smov 192
  %v75 = vld [vmem:[%s73] ss:$16 sm:%s74]
  %vm76 = vcmask 1047558
  %v77 = vsel %vm76, %v75, %v72
  %vm78 = vcmask 31744
  %s79 = scalar_lea.vmem %s1, 24
  %80 = vst.msk [vmem:[%s79] sm:$0xff] %vm78, %v77
  %s81 = scalar_lea.vmem %s0, 512
  %s82 = smov 3
  %v83 = vld [vmem:[%s81] ss:$16 sm:%s82]
  %s84 = scalar_lea.vmem %s0, 512
  %s85 = smov 12
  %v86 = vld [vmem:[%s84] ss:$16 sm:%s85]
  %vm87 = vcmask 1043458
  %v88 = vsel %vm87, %v86, %v83
  %s89 = scalar_lea.vmem %s0, 512
  %s90 = smov 48
  %v91 = vld [vmem:[%s89] ss:$16 sm:%s90]
  %vm92 = vcmask 1045508
  %v93 = vsel %vm92, %v91, %v88
  %s94 = scalar_lea.vmem %s0, 512
  %s95 = smov 192
  %v96 = vld [vmem:[%s94] ss:$16 sm:%s95]
  %vm97 = vcmask 1047558
  %v98 = vsel %vm97, %v96, %v93
  %vm99 = vcmask 31744
  %s100 = scalar_lea.vmem %s1, 32
  %101 = vst.msk [vmem:[%s100] sm:$0xff] %vm99, %v98
  %s102 = scalar_lea.vmem %s0, 640
  %s103 = smov 3
  %v104 = vld [vmem:[%s102] ss:$16 sm:%s103]
  %s105 = scalar_lea.vmem %s0, 640
  %s106 = smov 12
  %v107 = vld [vmem:[%s105] ss:$16 sm:%s106]
  %vm108 = vcmask 1043458
  %v109 = vsel %vm108, %v107, %v104
  %s110 = scalar_lea.vmem %s0, 640
  %s111 = smov 48
  %v112 = vld [vmem:[%s110] ss:$16 sm:%s111]
  %vm113 = vcmask 1045508
  %v114 = vsel %vm113, %v112, %v109
  %s115 = scalar_lea.vmem %s0, 640
  %s116 = smov 192
  %v117 = vld [vmem:[%s115] ss:$16 sm:%s116]
  %vm118 = vcmask 1047558
  %v119 = vsel %vm118, %v117, %v114
  %vm120 = vcmask 31744
  %s121 = scalar_lea.vmem %s1, 40
  %122 = vst.msk [vmem:[%s121] sm:$0xff] %vm120, %v119
  %s123 = scalar_lea.vmem %s0, 768
  %s124 = smov 3
  %v125 = vld [vmem:[%s123] ss:$16 sm:%s124]
  %s126 = scalar_lea.vmem %s0, 768
  %s127 = smov 12
  %v128 = vld [vmem:[%s126] ss:$16 sm:%s127]
  %vm129 = vcmask 1043458
  %v130 = vsel %vm129, %v128, %v125
  %s131 = scalar_lea.vmem %s0, 768
  %s132 = smov 48
  %v133 = vld [vmem:[%s131] ss:$16 sm:%s132]
  %vm134 = vcmask 1045508
  %v135 = vsel %vm134, %v133, %v130
  %s136 = scalar_lea.vmem %s0, 768
  %s137 = smov 192
  %v138 = vld [vmem:[%s136] ss:$16 sm:%s137]
  %vm139 = vcmask 1047558
  %v140 = vsel %vm139, %v138, %v135
  %vm141 = vcmask 31744
  %s142 = scalar_lea.vmem %s1, 48
  %143 = vst.msk [vmem:[%s142] sm:$0xff] %vm141, %v140
  %s144 = scalar_lea.vmem %s0, 896
  %s145 = smov 3
  %v146 = vld [vmem:[%s144] ss:$16 sm:%s145]
  %s147 = scalar_lea.vmem %s0, 896
  %s148 = smov 12
  %v149 = vld [vmem:[%s147] ss:$16 sm:%s148]
  %vm150 = vcmask 1043458
  %v151 = vsel %vm150, %v149, %v146
  %s152 = scalar_lea.vmem %s0, 896
  %s153 = smov 48
  %v154 = vld [vmem:[%s152] ss:$16 sm:%s153]
  %vm155 = vcmask 1045508
  %v156 = vsel %vm155, %v154, %v151
  %s157 = scalar_lea.vmem %s0, 896
  %s158 = smov 192
  %v159 = vld [vmem:[%s157] ss:$16 sm:%s158]
  %vm160 = vcmask 1047558
  %v161 = vsel %vm160, %v159, %v156
  %vm162 = vcmask 31744
  %s163 = scalar_lea.vmem %s1, 56
  %164 = vst.msk [vmem:[%s163] sm:$0xff] %vm162, %v161
  %s165 = scalar_lea.vmem %s0, 15
  %s166 = smov 3
  %v167 = vld [vmem:[%s165] ss:$16 sm:%s166]
  %s168 = scalar_lea.vmem %s0, 15
  %s169 = smov 12
  %v170 = vld [vmem:[%s168] ss:$16 sm:%s169]
  %vm171 = vcmask 1043458
  %v172 = vsel %vm171, %v170, %v167
  %s173 = scalar_lea.vmem %s0, 15
  %s174 = smov 48
  %v175 = vld [vmem:[%s173] ss:$16 sm:%s174]
  %vm176 = vcmask 1045508
  %v177 = vsel %vm176, %v175, %v172
  %s178 = scalar_lea.vmem %s0, 15
  %s179 = smov 192
  %v180 = vld [vmem:[%s178] ss:$16 sm:%s179]
  %vm181 = vcmask 1047558
  %v182 = vsel %vm181, %v180, %v177
  %183 = vrot.lane.b32.xlu0 %v182, 60
  %v184 = vpop.permute.xlu0 %183
  %vm185 = vcmask 523744
  %186 = vst.msk [vmem:[%s1] sm:$0xff] %vm185, %v184
  %s187 = scalar_lea.vmem %s0, 527
  %s188 = smov 3
  %v189 = vld [vmem:[%s187] ss:$16 sm:%s188]
  %s190 = scalar_lea.vmem %s0, 527
  %s191 = smov 12
  %v192 = vld [vmem:[%s190] ss:$16 sm:%s191]
  %vm193 = vcmask 1043458
  %v194 = vsel %vm193, %v192, %v189
  %s195 = scalar_lea.vmem %s0, 527
  %s196 = smov 48
  %v197 = vld [vmem:[%s195] ss:$16 sm:%s196]
  %vm198 = vcmask 1045508
  %v199 = vsel %vm198, %v197, %v194
  %s200 = scalar_lea.vmem %s0, 527
  %s201 = smov 192
  %v202 = vld [vmem:[%s200] ss:$16 sm:%s201]
  %vm203 = vcmask 1047558
  %v204 = vsel %vm203, %v202, %v199
  %205 = vrot.lane.b32.xlu0 %v204, 60
  %v206 = vpop.permute.xlu0 %205
  %vm207 = vcmask 523744
  %s208 = scalar_lea.vmem %s1, 32
  %209 = vst.msk [vmem:[%s208] sm:$0xff] %vm207, %v206
  %s210 = scalar_lea.vmem %s0, 143
  %s211 = smov 3
  %v212 = vld [vmem:[%s210] ss:$16 sm:%s211]
  %s213 = scalar_lea.vmem %s0, 143
  %s214 = smov 12
  %v215 = vld [vmem:[%s213] ss:$16 sm:%s214]
  %vm216 = vcmask 1043458
  %v217 = vsel %vm216, %v215, %v212
  %s218 = scalar_lea.vmem %s0, 143
  %s219 = smov 48
  %v220 = vld [vmem:[%s218] ss:$16 sm:%s219]
  %vm221 = vcmask 1045508
  %v222 = vsel %vm221, %v220, %v217
  %s223 = scalar_lea.vmem %s0, 143
  %s224 = smov 192
  %v225 = vld [vmem:[%s223] ss:$16 sm:%s224]
  %vm226 = vcmask 1047558
  %v227 = vsel %vm226, %v225, %v222
  %228 = vrot.lane.b32.xlu0 %v227, 60
  %v229 = vpop.permute.xlu0 %228
  %vm230 = vcmask 523744
  %s231 = scalar_lea.vmem %s1, 8
  %232 = vst.msk [vmem:[%s231] sm:$0xff] %vm230, %v229
  %s233 = scalar_lea.vmem %s0, 655
  %s234 = smov 3
  %v235 = vld [vmem:[%s233] ss:$16 sm:%s234]
  %s236 = scalar_lea.vmem %s0, 655
  %s237 = smov 12
  %v238 = vld [vmem:[%s236] ss:$16 sm:%s237]
  %vm239 = vcmask 1043458
  %v240 = vsel %vm239, %v238, %v235
  %s241 = scalar_lea.vmem %s0, 655
  %s242 = smov 48
  %v243 = vld [vmem:[%s241] ss:$16 sm:%s242]
  %vm244 = vcmask 1045508
  %v245 = vsel %vm244, %v243, %v240
  %s246 = scalar_lea.vmem %s0, 655
  %s247 = smov 192
  %v248 = vld [vmem:[%s246] ss:$16 sm:%s247]
  %vm249 = vcmask 1047558
  %v250 = vsel %vm249, %v248, %v245
  %251 = vrot.lane.b32.xlu0 %v250, 60
  %v252 = vpop.permute.xlu0 %251
  %vm253 = vcmask 523744
  %s254 = scalar_lea.vmem %s1, 40
  %255 = vst.msk [vmem:[%s254] sm:$0xff] %vm253, %v252
  %s256 = scalar_lea.vmem %s0, 271
  %s257 = smov 3
  %v258 = vld [vmem:[%s256] ss:$16 sm:%s257]
  %s259 = scalar_lea.vmem %s0, 271
  %s260 = smov 12
  %v261 = vld [vmem:[%s259] ss:$16 sm:%s260]
  %vm262 = vcmask 1043458
  %v263 = vsel %vm262, %v261, %v258
  %s264 = scalar_lea.vmem %s0, 271
  %s265 = smov 48
  %v266 = vld [vmem:[%s264] ss:$16 sm:%s265]
  %vm267 = vcmask 1045508
  %v268 = vsel %vm267, %v266, %v263
  %s269 = scalar_lea.vmem %s0, 271
  %s270 = smov 192
  %v271 = vld [vmem:[%s269] ss:$16 sm:%s270]
  %vm272 = vcmask 1047558
  %v273 = vsel %vm272, %v271, %v268
  %274 = vrot.lane.b32.xlu0 %v273, 60
  %v275 = vpop.permute.xlu0 %274
  %vm276 = vcmask 523744
  %s277 = scalar_lea.vmem %s1, 16
  %278 = vst.msk [vmem:[%s277] sm:$0xff] %vm276, %v275
  %s279 = scalar_lea.vmem %s0, 783
  %s280 = smov 3
  %v281 = vld [vmem:[%s279] ss:$16 sm:%s280]
  %s282 = scalar_lea.vmem %s0, 783
  %s283 = smov 12
  %v284 = vld [vmem:[%s282] ss:$16 sm:%s283]
  %vm285 = vcmask 1043458
  %v286 = vsel %vm285, %v284, %v281
  %s287 = scalar_lea.vmem %s0, 783
  %s288 = smov 48
  %v289 = vld [vmem:[%s287] ss:$16 sm:%s288]
  %vm290 = vcmask 1045508
  %v291 = vsel %vm290, %v289, %v286
  %s292 = scalar_lea.vmem %s0, 783
  %s293 = smov 192
  %v294 = vld [vmem:[%s292] ss:$16 sm:%s293]
  %vm295 = vcmask 1047558
  %v296 = vsel %vm295, %v294, %v291
  %297 = vrot.lane.b32.xlu0 %v296, 60
  %v298 = vpop.permute.xlu0 %297
  %vm299 = vcmask 523744
  %s300 = scalar_lea.vmem %s1, 48
  %301 = vst.msk [vmem:[%s300] sm:$0xff] %vm299, %v298
  %s302 = scalar_lea.vmem %s0, 399
  %s303 = smov 3
  %v304 = vld [vmem:[%s302] ss:$16 sm:%s303]
  %s305 = scalar_lea.vmem %s0, 399
  %s306 = smov 12
  %v307 = vld [vmem:[%s305] ss:$16 sm:%s306]
  %vm308 = vcmask 1043458
  %v309 = vsel %vm308, %v307, %v304
  %s310 = scalar_lea.vmem %s0, 399
  %s311 = smov 48
  %v312 = vld [vmem:[%s310] ss:$16 sm:%s311]
  %vm313 = vcmask 1045508
  %v314 = vsel %vm313, %v312, %v309
  %s315 = scalar_lea.vmem %s0, 399
  %s316 = smov 192
  %v317 = vld [vmem:[%s315] ss:$16 sm:%s316]
  %vm318 = vcmask 1047558
  %v319 = vsel %vm318, %v317, %v314
  %320 = vrot.lane.b32.xlu0 %v319, 60
  %v321 = vpop.permute.xlu0 %320
  %vm322 = vcmask 523744
  %s323 = scalar_lea.vmem %s1, 24
  %324 = vst.msk [vmem:[%s323] sm:$0xff] %vm322, %v321
  %s325 = scalar_lea.vmem %s0, 911
  %s326 = smov 3
  %v327 = vld [vmem:[%s325] ss:$16 sm:%s326]
  %s328 = scalar_lea.vmem %s0, 911
  %s329 = smov 12
  %v330 = vld [vmem:[%s328] ss:$16 sm:%s329]
  %vm331 = vcmask 1043458
  %v332 = vsel %vm331, %v330, %v327
  %s333 = scalar_lea.vmem %s0, 911
  %s334 = smov 48
  %v335 = vld [vmem:[%s333] ss:$16 sm:%s334]
  %vm336 = vcmask 1045508
  %v337 = vsel %vm336, %v335, %v332
  %s338 = scalar_lea.vmem %s0, 911
  %s339 = smov 192
  %v340 = vld [vmem:[%s338] ss:$16 sm:%s339]
  %vm341 = vcmask 1047558
  %v342 = vsel %vm341, %v340, %v337
  %343 = vrot.lane.b32.xlu0 %v342, 60
  %v344 = vpop.permute.xlu0 %343
  %vm345 = vcmask 523744
  %s346 = scalar_lea.vmem %s1, 56
  %347 = vst.msk [vmem:[%s346] sm:$0xff] %vm345, %v344
  %s348 = scalar_lea.vmem %s0, 14
  %s349 = smov 3
  %v350 = vld [vmem:[%s348] ss:$16 sm:%s349]
  %s351 = scalar_lea.vmem %s0, 14
  %s352 = smov 12
  %v353 = vld [vmem:[%s351] ss:$16 sm:%s352]
  %vm354 = vcmask 1043458
  %v355 = vsel %vm354, %v353, %v350
  %s356 = scalar_lea.vmem %s0, 14
  %s357 = smov 48
  %v358 = vld [vmem:[%s356] ss:$16 sm:%s357]
  %vm359 = vcmask 1045508
  %v360 = vsel %vm359, %v358, %v355
  %s361 = scalar_lea.vmem %s0, 14
  %s362 = smov 192
  %v363 = vld [vmem:[%s361] ss:$16 sm:%s362]
  %vm364 = vcmask 1047558
  %v365 = vsel %vm364, %v363, %v360
  %366 = vrot.lane.b32.xlu0 %v365, 56
  %v367 = vpop.permute.xlu0 %366
  %vm368 = vcmask 490944
  %369 = vst.msk [vmem:[%s1] sm:$0xff] %vm368, %v367
  %s370 = scalar_lea.vmem %s0, 526
  %s371 = smov 3
  %v372 = vld [vmem:[%s370] ss:$16 sm:%s371]
  %s373 = scalar_lea.vmem %s0, 526
  %s374 = smov 12
  %v375 = vld [vmem:[%s373] ss:$16 sm:%s374]
  %vm376 = vcmask 1043458
  %v377 = vsel %vm376, %v375, %v372
  %s378 = scalar_lea.vmem %s0, 526
  %s379 = smov 48
  %v380 = vld [vmem:[%s378] ss:$16 sm:%s379]
  %vm381 = vcmask 1045508
  %v382 = vsel %vm381, %v380, %v377
  %s383 = scalar_lea.vmem %s0, 526
  %s384 = smov 192
  %v385 = vld [vmem:[%s383] ss:$16 sm:%s384]
  %vm386 = vcmask 1047558
  %v387 = vsel %vm386, %v385, %v382
  %388 = vrot.lane.b32.xlu0 %v387, 56
  %v389 = vpop.permute.xlu0 %388
  %vm390 = vcmask 490944
  %s391 = scalar_lea.vmem %s1, 32
  %392 = vst.msk [vmem:[%s391] sm:$0xff] %vm390, %v389
  %s393 = scalar_lea.vmem %s0, 142
  %s394 = smov 3
  %v395 = vld [vmem:[%s393] ss:$16 sm:%s394]
  %s396 = scalar_lea.vmem %s0, 142
  %s397 = smov 12
  %v398 = vld [vmem:[%s396] ss:$16 sm:%s397]
  %vm399 = vcmask 1043458
  %v400 = vsel %vm399, %v398, %v395
  %s401 = scalar_lea.vmem %s0, 142
  %s402 = smov 48
  %v403 = vld [vmem:[%s401] ss:$16 sm:%s402]
  %vm404 = vcmask 1045508
  %v405 = vsel %vm404, %v403, %v400
  %s406 = scalar_lea.vmem %s0, 142
  %s407 = smov 192
  %v408 = vld [vmem:[%s406] ss:$16 sm:%s407]
  %vm409 = vcmask 1047558
  %v410 = vsel %vm409, %v408, %v405
  %411 = vrot.lane.b32.xlu0 %v410, 56
  %v412 = vpop.permute.xlu0 %411
  %vm413 = vcmask 490944
  %s414 = scalar_lea.vmem %s1, 8
  %415 = vst.msk [vmem:[%s414] sm:$0xff] %vm413, %v412
  %s416 = scalar_lea.vmem %s0, 654
  %s417 = smov 3
  %v418 = vld [vmem:[%s416] ss:$16 sm:%s417]
  %s419 = scalar_lea.vmem %s0, 654
  %s420 = smov 12
  %v421 = vld [vmem:[%s419] ss:$16 sm:%s420]
  %vm422 = vcmask 1043458
  %v423 = vsel %vm422, %v421, %v418
  %s424 = scalar_lea.vmem %s0, 654
  %s425 = smov 48
  %v426 = vld [vmem:[%s424] ss:$16 sm:%s425]
  %vm427 = vcmask 1045508
  %v428 = vsel %vm427, %v426, %v423
  %s429 = scalar_lea.vmem %s0, 654
  %s430 = smov 192
  %v431 = vld [vmem:[%s429] ss:$16 sm:%s430]
  %vm432 = vcmask 1047558
  %v433 = vsel %vm432, %v431, %v428
  %434 = vrot.lane.b32.xlu0 %v433, 56
  %v435 = vpop.permute.xlu0 %434
  %vm436 = vcmask 490944
  %s437 = scalar_lea.vmem %s1, 40
  %438 = vst.msk [vmem:[%s437] sm:$0xff] %vm436, %v435
  %s439 = scalar_lea.vmem %s0, 270
  %s440 = smov 3
  %v441 = vld [vmem:[%s439] ss:$16 sm:%s440]
  %s442 = scalar_lea.vmem %s0, 270
  %s443 = smov 12
  %v444 = vld [vmem:[%s442] ss:$16 sm:%s443]
  %vm445 = vcmask 1043458
  %v446 = vsel %vm445, %v444, %v441
  %s447 = scalar_lea.vmem %s0, 270
  %s448 = smov 48
  %v449 = vld [vmem:[%s447] ss:$16 sm:%s448]
  %vm450 = vcmask 1045508
  %v451 = vsel %vm450, %v449, %v446
  %s452 = scalar_lea.vmem %s0, 270
  %s453 = smov 192
  %v454 = vld [vmem:[%s452] ss:$16 sm:%s453]
  %vm455 = vcmask 1047558
  %v456 = vsel %vm455, %v454, %v451
  %457 = vrot.lane.b32.xlu0 %v456, 56
  %v458 = vpop.permute.xlu0 %457
  %vm459 = vcmask 490944
  %s460 = scalar_lea.vmem %s1, 16
  %461 = vst.msk [vmem:[%s460] sm:$0xff] %vm459, %v458
  %s462 = scalar_lea.vmem %s0, 782
  %s463 = smov 3
  %v464 = vld [vmem:[%s462] ss:$16 sm:%s463]
  %s465 = scalar_lea.vmem %s0, 782
  %s466 = smov 12
  %v467 = vld [vmem:[%s465] ss:$16 sm:%s466]
  %vm468 = vcmask 1043458
  %v469 = vsel %vm468, %v467, %v464
  %s470 = scalar_lea.vmem %s0, 782
  %s471 = smov 48
  %v472 = vld [vmem:[%s470] ss:$16 sm:%s471]
  %vm473 = vcmask 1045508
  %v474 = vsel %vm473, %v472, %v469
  %s475 = scalar_lea.vmem %s0, 782
  %s476 = smov 192
  %v477 = vld [vmem:[%s475] ss:$16 sm:%s476]
  %vm478 = vcmask 1047558
  %v479 = vsel %vm478, %v477, %v474
  %480 = vrot.lane.b32.xlu0 %v479, 56
  %v481 = vpop.permute.xlu0 %480
  %vm482 = vcmask 490944
  %s483 = scalar_lea.vmem %s1, 48
  %484 = vst.msk [vmem:[%s483] sm:$0xff] %vm482, %v481
  %s485 = scalar_lea.vmem %s0, 398
  %s486 = smov 3
  %v487 = vld [vmem:[%s485] ss:$16 sm:%s486]
  %s488 = scalar_lea.vmem %s0, 398
  %s489 = smov 12
  %v490 = vld [vmem:[%s488] ss:$16 sm:%s489]
  %vm491 = vcmask 1043458
  %v492 = vsel %vm491, %v490, %v487
  %s493 = scalar_lea.vmem %s0, 398
  %s494 = smov 48
  %v495 = vld [vmem:[%s493] ss:$16 sm:%s494]
  %vm496 = vcmask 1045508
  %v497 = vsel %vm496, %v495, %v492
  %s498 = scalar_lea.vmem %s0, 398
  %s499 = smov 192
  %v500 = vld [vmem:[%s498] ss:$16 sm:%s499]
  %vm501 = vcmask 1047558
  %v502 = vsel %vm501, %v500, %v497
  %503 = vrot.lane.b32.xlu0 %v502, 56
  %v504 = vpop.permute.xlu0 %503
  %vm505 = vcmask 490944
  %s506 = scalar_lea.vmem %s1, 24
  %507 = vst.msk [vmem:[%s506] sm:$0xff] %vm505, %v504
  %s508 = scalar_lea.vmem %s0, 910
  %s509 = smov 3
  %v510 = vld [vmem:[%s508] ss:$16 sm:%s509]
  %s511 = scalar_lea.vmem %s0, 910
  %s512 = smov 12
  %v513 = vld [vmem:[%s511] ss:$16 sm:%s512]
  %vm514 = vcmask 1043458
  %v515 = vsel %vm514, %v513, %v510
  %s516 = scalar_lea.vmem %s0, 910
  %s517 = smov 48
  %v518 = vld [vmem:[%s516] ss:$16 sm:%s517]
  %vm519 = vcmask 1045508
  %v520 = vsel %vm519, %v518, %v515
  %s521 = scalar_lea.vmem %s0, 910
  %s522 = smov 192
  %v523 = vld [vmem:[%s521] ss:$16 sm:%s522]
  %vm524 = vcmask 1047558
  %v525 = vsel %vm524, %v523, %v520
  %526 = vrot.lane.b32.xlu0 %v525, 56
  %v527 = vpop.permute.xlu0 %526
  %vm528 = vcmask 490944
  %s529 = scalar_lea.vmem %s1, 56
  %530 = vst.msk [vmem:[%s529] sm:$0xff] %vm528, %v527
  %s531 = scalar_lea.vmem %s0, 13
  %s532 = smov 3
  %v533 = vld [vmem:[%s531] ss:$16 sm:%s532]
  %s534 = scalar_lea.vmem %s0, 13
  %s535 = smov 12
  %v536 = vld [vmem:[%s534] ss:$16 sm:%s535]
  %vm537 = vcmask 1043458
  %v538 = vsel %vm537, %v536, %v533
  %s539 = scalar_lea.vmem %s0, 13
  %s540 = smov 48
  %v541 = vld [vmem:[%s539] ss:$16 sm:%s540]
  %vm542 = vcmask 1045508
  %v543 = vsel %vm542, %v541, %v538
  %s544 = scalar_lea.vmem %s0, 13
  %s545 = smov 192
  %v546 = vld [vmem:[%s544] ss:$16 sm:%s545]
  %vm547 = vcmask 1047558
  %v548 = vsel %vm547, %v546, %v543
  %549 = vrot.lane.b32.xlu0 %v548, 52
  %v550 = vpop.permute.xlu0 %549
  %vm551 = vcmask 458144
  %552 = vst.msk [vmem:[%s1] sm:$0xff] %vm551, %v550
  %s553 = scalar_lea.vmem %s0, 525
  %s554 = smov 3
  %v555 = vld [vmem:[%s553] ss:$16 sm:%s554]
  %s556 = scalar_lea.vmem %s0, 525
  %s557 = smov 12
  %v558 = vld [vmem:[%s556] ss:$16 sm:%s557]
  %vm559 = vcmask 1043458
  %v560 = vsel %vm559, %v558, %v555
  %s561 = scalar_lea.vmem %s0, 525
  %s562 = smov 48
  %v563 = vld [vmem:[%s561] ss:$16 sm:%s562]
  %vm564 = vcmask 1045508
  %v565 = vsel %vm564, %v563, %v560
  %s566 = scalar_lea.vmem %s0, 525
  %s567 = smov 192
  %v568 = vld [vmem:[%s566] ss:$16 sm:%s567]
  %vm569 = vcmask 1047558
  %v570 = vsel %vm569, %v568, %v565
  %571 = vrot.lane.b32.xlu0 %v570, 52
  %v572 = vpop.permute.xlu0 %571
  %vm573 = vcmask 458144
  %s574 = scalar_lea.vmem %s1, 32
  %575 = vst.msk [vmem:[%s574] sm:$0xff] %vm573, %v572
  %s576 = scalar_lea.vmem %s0, 141
  %s577 = smov 3
  %v578 = vld [vmem:[%s576] ss:$16 sm:%s577]
  %s579 = scalar_lea.vmem %s0, 141
  %s580 = smov 12
  %v581 = vld [vmem:[%s579] ss:$16 sm:%s580]
  %vm582 = vcmask 1043458
  %v583 = vsel %vm582, %v581, %v578
  %s584 = scalar_lea.vmem %s0, 141
  %s585 = smov 48
  %v586 = vld [vmem:[%s584] ss:$16 sm:%s585]
  %vm587 = vcmask 1045508
  %v588 = vsel %vm587, %v586, %v583
  %s589 = scalar_lea.vmem %s0, 141
  %s590 = smov 192
  %v591 = vld [vmem:[%s589] ss:$16 sm:%s590]
  %vm592 = vcmask 1047558
  %v593 = vsel %vm592, %v591, %v588
  %594 = vrot.lane.b32.xlu0 %v593, 52
  %v595 = vpop.permute.xlu0 %594
  %vm596 = vcmask 458144
  %s597 = scalar_lea.vmem %s1, 8
  %598 = vst.msk [vmem:[%s597] sm:$0xff] %vm596, %v595
  %s599 = scalar_lea.vmem %s0, 653
  %s600 = smov 3
  %v601 = vld [vmem:[%s599] ss:$16 sm:%s600]
  %s602 = scalar_lea.vmem %s0, 653
  %s603 = smov 12
  %v604 = vld [vmem:[%s602] ss:$16 sm:%s603]
  %vm605 = vcmask 1043458
  %v606 = vsel %vm605, %v604, %v601
  %s607 = scalar_lea.vmem %s0, 653
  %s608 = smov 48
  %v609 = vld [vmem:[%s607] ss:$16 sm:%s608]
  %vm610 = vcmask 1045508
  %v611 = vsel %vm610, %v609, %v606
  %s612 = scalar_lea.vmem %s0, 653
  %s613 = smov 192
  %v614 = vld [vmem:[%s612] ss:$16 sm:%s613]
  %vm615 = vcmask 1047558
  %v616 = vsel %vm615, %v614, %v611
  %617 = vrot.lane.b32.xlu0 %v616, 52
  %v618 = vpop.permute.xlu0 %617
  %vm619 = vcmask 458144
  %s620 = scalar_lea.vmem %s1, 40
  %621 = vst.msk [vmem:[%s620] sm:$0xff] %vm619, %v618
  %s622 = scalar_lea.vmem %s0, 269
  %s623 = smov 3
  %v624 = vld [vmem:[%s622] ss:$16 sm:%s623]
  %s625 = scalar_lea.vmem %s0, 269
  %s626 = smov 12
  %v627 = vld [vmem:[%s625] ss:$16 sm:%s626]
  %vm628 = vcmask 1043458
  %v629 = vsel %vm628, %v627, %v624
  %s630 = scalar_lea.vmem %s0, 269
  %s631 = smov 48
  %v632 = vld [vmem:[%s630] ss:$16 sm:%s631]
  %vm633 = vcmask 1045508
  %v634 = vsel %vm633, %v632, %v629
  %s635 = scalar_lea.vmem %s0, 269
  %s636 = smov 192
  %v637 = vld [vmem:[%s635] ss:$16 sm:%s636]
  %vm638 = vcmask 1047558
  %v639 = vsel %vm638, %v637, %v634
  %640 = vrot.lane.b32.xlu0 %v639, 52
  %v641 = vpop.permute.xlu0 %640
  %vm642 = vcmask 458144
  %s643 = scalar_lea.vmem %s1, 16
  %644 = vst.msk [vmem:[%s643] sm:$0xff] %vm642, %v641
  %s645 = scalar_lea.vmem %s0, 781
  %s646 = smov 3
  %v647 = vld [vmem:[%s645] ss:$16 sm:%s646]
  %s648 = scalar_lea.vmem %s0, 781
  %s649 = smov 12
  %v650 = vld [vmem:[%s648] ss:$16 sm:%s649]
  %vm651 = vcmask 1043458
  %v652 = vsel %vm651, %v650, %v647
  %s653 = scalar_lea.vmem %s0, 781
  %s654 = smov 48
  %v655 = vld [vmem:[%s653] ss:$16 sm:%s654]
  %vm656 = vcmask 1045508
  %v657 = vsel %vm656, %v655, %v652
  %s658 = scalar_lea.vmem %s0, 781
  %s659 = smov 192
  %v660 = vld [vmem:[%s658] ss:$16 sm:%s659]
  %vm661 = vcmask 1047558
  %v662 = vsel %vm661, %v660, %v657
  %663 = vrot.lane.b32.xlu0 %v662, 52
  %v664 = vpop.permute.xlu0 %663
  %vm665 = vcmask 458144
  %s666 = scalar_lea.vmem %s1, 48
  %667 = vst.msk [vmem:[%s666] sm:$0xff] %vm665, %v664
  %s668 = scalar_lea.vmem %s0, 397
  %s669 = smov 3
  %v670 = vld [vmem:[%s668] ss:$16 sm:%s669]
  %s671 = scalar_lea.vmem %s0, 397
  %s672 = smov 12
  %v673 = vld [vmem:[%s671] ss:$16 sm:%s672]
  %vm674 = vcmask 1043458
  %v675 = vsel %vm674, %v673, %v670
  %s676 = scalar_lea.vmem %s0, 397
  %s677 = smov 48
  %v678 = vld [vmem:[%s676] ss:$16 sm:%s677]
  %vm679 = vcmask 1045508
  %v680 = vsel %vm679, %v678, %v675
  %s681 = scalar_lea.vmem %s0, 397
  %s682 = smov 192
  %v683 = vld [vmem:[%s681] ss:$16 sm:%s682]
  %vm684 = vcmask 1047558
  %v685 = vsel %vm684, %v683, %v680
  %686 = vrot.lane.b32.xlu0 %v685, 52
  %v687 = vpop.permute.xlu0 %686
  %vm688 = vcmask 458144
  %s689 = scalar_lea.vmem %s1, 24
  %690 = vst.msk [vmem:[%s689] sm:$0xff] %vm688, %v687
  %s691 = scalar_lea.vmem %s0, 909
  %s692 = smov 3
  %v693 = vld [vmem:[%s691] ss:$16 sm:%s692]
  %s694 = scalar_lea.vmem %s0, 909
  %s695 = smov 12
  %v696 = vld [vmem:[%s694] ss:$16 sm:%s695]
  %vm697 = vcmask 1043458
  %v698 = vsel %vm697, %v696, %v693
  %s699 = scalar_lea.vmem %s0, 909
  %s700 = smov 48
  %v701 = vld [vmem:[%s699] ss:$16 sm:%s700]
  %vm702 = vcmask 1045508
  %v703 = vsel %vm702, %v701, %v698
  %s704 = scalar_lea.vmem %s0, 909
  %s705 = smov 192
  %v706 = vld [vmem:[%s704] ss:$16 sm:%s705]
  %vm707 = vcmask 1047558
  %v708 = vsel %vm707, %v706, %v703
  %709 = vrot.lane.b32.xlu0 %v708, 52
  %v710 = vpop.permute.xlu0 %709
  %vm711 = vcmask 458144
  %s712 = scalar_lea.vmem %s1, 56
  %713 = vst.msk [vmem:[%s712] sm:$0xff] %vm711, %v710
  %s714 = scalar_lea.vmem %s0, 12
  %s715 = smov 3
  %v716 = vld [vmem:[%s714] ss:$16 sm:%s715]
  %s717 = scalar_lea.vmem %s0, 12
  %s718 = smov 12
  %v719 = vld [vmem:[%s717] ss:$16 sm:%s718]
  %vm720 = vcmask 1043458
  %v721 = vsel %vm720, %v719, %v716
  %s722 = scalar_lea.vmem %s0, 12
  %s723 = smov 48
  %v724 = vld [vmem:[%s722] ss:$16 sm:%s723]
  %vm725 = vcmask 1045508
  %v726 = vsel %vm725, %v724, %v721
  %s727 = scalar_lea.vmem %s0, 12
  %s728 = smov 192
  %v729 = vld [vmem:[%s727] ss:$16 sm:%s728]
  %vm730 = vcmask 1047558
  %v731 = vsel %vm730, %v729, %v726
  %732 = vrot.lane.b32.xlu0 %v731, 48
  %v733 = vpop.permute.xlu0 %732
  %vm734 = vcmask 425344
  %735 = vst.msk [vmem:[%s1] sm:$0xff] %vm734, %v733
  %s736 = scalar_lea.vmem %s0, 524
  %s737 = smov 3
  %v738 = vld [vmem:[%s736] ss:$16 sm:%s737]
  %s739 = scalar_lea.vmem %s0, 524
  %s740 = smov 12
  %v741 = vld [vmem:[%s739] ss:$16 sm:%s740]
  %vm742 = vcmask 1043458
  %v743 = vsel %vm742, %v741, %v738
  %s744 = scalar_lea.vmem %s0, 524
  %s745 = smov 48
  %v746 = vld [vmem:[%s744] ss:$16 sm:%s745]
  %vm747 = vcmask 1045508
  %v748 = vsel %vm747, %v746, %v743
  %s749 = scalar_lea.vmem %s0, 524
  %s750 = smov 192
  %v751 = vld [vmem:[%s749] ss:$16 sm:%s750]
  %vm752 = vcmask 1047558
  %v753 = vsel %vm752, %v751, %v748
  %754 = vrot.lane.b32.xlu0 %v753, 48
  %v755 = vpop.permute.xlu0 %754
  %vm756 = vcmask 425344
  %s757 = scalar_lea.vmem %s1, 32
  %758 = vst.msk [vmem:[%s757] sm:$0xff] %vm756, %v755
  %s759 = scalar_lea.vmem %s0, 140
  %s760 = smov 3
  %v761 = vld [vmem:[%s759] ss:$16 sm:%s760]
  %s762 = scalar_lea.vmem %s0, 140
  %s763 = smov 12
  %v764 = vld [vmem:[%s762] ss:$16 sm:%s763]
  %vm765 = vcmask 1043458
  %v766 = vsel %vm765, %v764, %v761
  %s767 = scalar_lea.vmem %s0, 140
  %s768 = smov 48
  %v769 = vld [vmem:[%s767] ss:$16 sm:%s768]
  %vm770 = vcmask 1045508
  %v771 = vsel %vm770, %v769, %v766
  %s772 = scalar_lea.vmem %s0, 140
  %s773 = smov 192
  %v774 = vld [vmem:[%s772] ss:$16 sm:%s773]
  %vm775 = vcmask 1047558
  %v776 = vsel %vm775, %v774, %v771
  %777 = vrot.lane.b32.xlu0 %v776, 48
  %v778 = vpop.permute.xlu0 %777
  %vm779 = vcmask 425344
  %s780 = scalar_lea.vmem %s1, 8
  %781 = vst.msk [vmem:[%s780] sm:$0xff] %vm779, %v778
  %s782 = scalar_lea.vmem %s0, 652
  %s783 = smov 3
  %v784 = vld [vmem:[%s782] ss:$16 sm:%s783]
  %s785 = scalar_lea.vmem %s0, 652
  %s786 = smov 12
  %v787 = vld [vmem:[%s785] ss:$16 sm:%s786]
  %vm788 = vcmask 1043458
  %v789 = vsel %vm788, %v787, %v784
  %s790 = scalar_lea.vmem %s0, 652
  %s791 = smov 48
  %v792 = vld [vmem:[%s790] ss:$16 sm:%s791]
  %vm793 = vcmask 1045508
  %v794 = vsel %vm793, %v792, %v789
  %s795 = scalar_lea.vmem %s0, 652
  %s796 = smov 192
  %v797 = vld [vmem:[%s795] ss:$16 sm:%s796]
  %vm798 = vcmask 1047558
  %v799 = vsel %vm798, %v797, %v794
  %800 = vrot.lane.b32.xlu0 %v799, 48
  %v801 = vpop.permute.xlu0 %800
  %vm802 = vcmask 425344
  %s803 = scalar_lea.vmem %s1, 40
  %804 = vst.msk [vmem:[%s803] sm:$0xff] %vm802, %v801
  %s805 = scalar_lea.vmem %s0, 268
  %s806 = smov 3
  %v807 = vld [vmem:[%s805] ss:$16 sm:%s806]
  %s808 = scalar_lea.vmem %s0, 268
  %s809 = smov 12
  %v810 = vld [vmem:[%s808] ss:$16 sm:%s809]
  %vm811 = vcmask 1043458
  %v812 = vsel %vm811, %v810, %v807
  %s813 = scalar_lea.vmem %s0, 268
  %s814 = smov 48
  %v815 = vld [vmem:[%s813] ss:$16 sm:%s814]
  %vm816 = vcmask 1045508
  %v817 = vsel %vm816, %v815, %v812
  %s818 = scalar_lea.vmem %s0, 268
  %s819 = smov 192
  %v820 = vld [vmem:[%s818] ss:$16 sm:%s819]
  %vm821 = vcmask 1047558
  %v822 = vsel %vm821, %v820, %v817
  %823 = vrot.lane.b32.xlu0 %v822, 48
  %v824 = vpop.permute.xlu0 %823
  %vm825 = vcmask 425344
  %s826 = scalar_lea.vmem %s1, 16
  %827 = vst.msk [vmem:[%s826] sm:$0xff] %vm825, %v824
  %s828 = scalar_lea.vmem %s0, 780
  %s829 = smov 3
  %v830 = vld [vmem:[%s828] ss:$16 sm:%s829]
  %s831 = scalar_lea.vmem %s0, 780
  %s832 = smov 12
  %v833 = vld [vmem:[%s831] ss:$16 sm:%s832]
  %vm834 = vcmask 1043458
  %v835 = vsel %vm834, %v833, %v830
  %s836 = scalar_lea.vmem %s0, 780
  %s837 = smov 48
  %v838 = vld [vmem:[%s836] ss:$16 sm:%s837]
  %vm839 = vcmask 1045508
  %v840 = vsel %vm839, %v838, %v835
  %s841 = scalar_lea.vmem %s0, 780
  %s842 = smov 192
  %v843 = vld [vmem:[%s841] ss:$16 sm:%s842]
  %vm844 = vcmask 1047558
  %v845 = vsel %vm844, %v843, %v840
  %846 = vrot.lane.b32.xlu0 %v845, 48
  %v847 = vpop.permute.xlu0 %846
  %vm848 = vcmask 425344
  %s849 = scalar_lea.vmem %s1, 48
  %850 = vst.msk [vmem:[%s849] sm:$0xff] %vm848, %v847
  %s851 = scalar_lea.vmem %s0, 396
  %s852 = smov 3
  %v853 = vld [vmem:[%s851] ss:$16 sm:%s852]
  %s854 = scalar_lea.vmem %s0, 396
  %s855 = smov 12
  %v856 = vld [vmem:[%s854] ss:$16 sm:%s855]
  %vm857 = vcmask 1043458
  %v858 = vsel %vm857, %v856, %v853
  %s859 = scalar_lea.vmem %s0, 396
  %s860 = smov 48
  %v861 = vld [vmem:[%s859] ss:$16 sm:%s860]
  %vm862 = vcmask 1045508
  %v863 = vsel %vm862, %v861, %v858
  %s864 = scalar_lea.vmem %s0, 396
  %s865 = smov 192
  %v866 = vld [vmem:[%s864] ss:$16 sm:%s865]
  %vm867 = vcmask 1047558
  %v868 = vsel %vm867, %v866, %v863
  %869 = vrot.lane.b32.xlu0 %v868, 48
  %v870 = vpop.permute.xlu0 %869
  %vm871 = vcmask 425344
  %s872 = scalar_lea.vmem %s1, 24
  %873 = vst.msk [vmem:[%s872] sm:$0xff] %vm871, %v870
  %s874 = scalar_lea.vmem %s0, 908
  %s875 = smov 3
  %v876 = vld [vmem:[%s874] ss:$16 sm:%s875]
  %s877 = scalar_lea.vmem %s0, 908
  %s878 = smov 12
  %v879 = vld [vmem:[%s877] ss:$16 sm:%s878]
  %vm880 = vcmask 1043458
  %v881 = vsel %vm880, %v879, %v876
  %s882 = scalar_lea.vmem %s0, 908
  %s883 = smov 48
  %v884 = vld [vmem:[%s882] ss:$16 sm:%s883]
  %vm885 = vcmask 1045508
  %v886 = vsel %vm885, %v884, %v881
  %s887 = scalar_lea.vmem %s0, 908
  %s888 = smov 192
  %v889 = vld [vmem:[%s887] ss:$16 sm:%s888]
  %vm890 = vcmask 1047558
  %v891 = vsel %vm890, %v889, %v886
  %892 = vrot.lane.b32.xlu0 %v891, 48
  %v893 = vpop.permute.xlu0 %892
  %vm894 = vcmask 425344
  %s895 = scalar_lea.vmem %s1, 56
  %896 = vst.msk [vmem:[%s895] sm:$0xff] %vm894, %v893
  %s897 = scalar_lea.vmem %s0, 11
  %s898 = smov 3
  %v899 = vld [vmem:[%s897] ss:$16 sm:%s898]
  %s900 = scalar_lea.vmem %s0, 11
  %s901 = smov 12
  %v902 = vld [vmem:[%s900] ss:$16 sm:%s901]
  %vm903 = vcmask 1043458
  %v904 = vsel %vm903, %v902, %v899
  %s905 = scalar_lea.vmem %s0, 11
  %s906 = smov 48
  %v907 = vld [vmem:[%s905] ss:$16 sm:%s906]
  %vm908 = vcmask 1045508
  %v909 = vsel %vm908, %v907, %v904
  %s910 = scalar_lea.vmem %s0, 11
  %s911 = smov 192
  %v912 = vld [vmem:[%s910] ss:$16 sm:%s911]
  %vm913 = vcmask 1047558
  %v914 = vsel %vm913, %v912, %v909
  %915 = vrot.lane.b32.xlu0 %v914, 44
  %v916 = vpop.permute.xlu0 %915
  %vm917 = vcmask 392544
  %918 = vst.msk [vmem:[%s1] sm:$0xff] %vm917, %v916
  %s919 = scalar_lea.vmem %s0, 523
  %s920 = smov 3
  %v921 = vld [vmem:[%s919] ss:$16 sm:%s920]
  %s922 = scalar_lea.vmem %s0, 523
  %s923 = smov 12
  %v924 = vld [vmem:[%s922] ss:$16 sm:%s923]
  %vm925 = vcmask 1043458
  %v926 = vsel %vm925, %v924, %v921
  %s927 = scalar_lea.vmem %s0, 523
  %s928 = smov 48
  %v929 = vld [vmem:[%s927] ss:$16 sm:%s928]
  %vm930 = vcmask 1045508
  %v931 = vsel %vm930, %v929, %v926
  %s932 = scalar_lea.vmem %s0, 523
  %s933 = smov 192
  %v934 = vld [vmem:[%s932] ss:$16 sm:%s933]
  %vm935 = vcmask 1047558
  %v936 = vsel %vm935, %v934, %v931
  %937 = vrot.lane.b32.xlu0 %v936, 44
  %v938 = vpop.permute.xlu0 %937
  %vm939 = vcmask 392544
  %s940 = scalar_lea.vmem %s1, 32
  %941 = vst.msk [vmem:[%s940] sm:$0xff] %vm939, %v938
  %s942 = scalar_lea.vmem %s0, 139
  %s943 = smov 3
  %v944 = vld [vmem:[%s942] ss:$16 sm:%s943]
  %s945 = scalar_lea.vmem %s0, 139
  %s946 = smov 12
  %v947 = vld [vmem:[%s945] ss:$16 sm:%s946]
  %vm948 = vcmask 1043458
  %v949 = vsel %vm948, %v947, %v944
  %s950 = scalar_lea.vmem %s0, 139
  %s951 = smov 48
  %v952 = vld [vmem:[%s950] ss:$16 sm:%s951]
  %vm953 = vcmask 1045508
  %v954 = vsel %vm953, %v952, %v949
  %s955 = scalar_lea.vmem %s0, 139
  %s956 = smov 192
  %v957 = vld [vmem:[%s955] ss:$16 sm:%s956]
  %vm958 = vcmask 1047558
  %v959 = vsel %vm958, %v957, %v954
  %960 = vrot.lane.b32.xlu0 %v959, 44
  %v961 = vpop.permute.xlu0 %960
  %vm962 = vcmask 392544
  %s963 = scalar_lea.vmem %s1, 8
  %964 = vst.msk [vmem:[%s963] sm:$0xff] %vm962, %v961
  %s965 = scalar_lea.vmem %s0, 651
  %s966 = smov 3
  %v967 = vld [vmem:[%s965] ss:$16 sm:%s966]
  %s968 = scalar_lea.vmem %s0, 651
  %s969 = smov 12
  %v970 = vld [vmem:[%s968] ss:$16 sm:%s969]
  %vm971 = vcmask 1043458
  %v972 = vsel %vm971, %v970, %v967
  %s973 = scalar_lea.vmem %s0, 651
  %s974 = smov 48
  %v975 = vld [vmem:[%s973] ss:$16 sm:%s974]
  %vm976 = vcmask 1045508
  %v977 = vsel %vm976, %v975, %v972
  %s978 = scalar_lea.vmem %s0, 651
  %s979 = smov 192
  %v980 = vld [vmem:[%s978] ss:$16 sm:%s979]
  %vm981 = vcmask 1047558
  %v982 = vsel %vm981, %v980, %v977
  %983 = vrot.lane.b32.xlu0 %v982, 44
  %v984 = vpop.permute.xlu0 %983
  %vm985 = vcmask 392544
  %s986 = scalar_lea.vmem %s1, 40
  %987 = vst.msk [vmem:[%s986] sm:$0xff] %vm985, %v984
  %s988 = scalar_lea.vmem %s0, 267
  %s989 = smov 3
  %v990 = vld [vmem:[%s988] ss:$16 sm:%s989]
  %s991 = scalar_lea.vmem %s0, 267
  %s992 = smov 12
  %v993 = vld [vmem:[%s991] ss:$16 sm:%s992]
  %vm994 = vcmask 1043458
  %v995 = vsel %vm994, %v993, %v990
  %s996 = scalar_lea.vmem %s0, 267
  %s997 = smov 48
  %v998 = vld [vmem:[%s996] ss:$16 sm:%s997]
  %vm999 = vcmask 1045508
  %v1000 = vsel %vm999, %v998, %v995
  %s1001 = scalar_lea.vmem %s0, 267
  %s1002 = smov 192
  %v1003 = vld [vmem:[%s1001] ss:$16 sm:%s1002]
  %vm1004 = vcmask 1047558
  %v1005 = vsel %vm1004, %v1003, %v1000
  %1006 = vrot.lane.b32.xlu0 %v1005, 44
  %v1007 = vpop.permute.xlu0 %1006
  %vm1008 = vcmask 392544
  %s1009 = scalar_lea.vmem %s1, 16
  %1010 = vst.msk [vmem:[%s1009] sm:$0xff] %vm1008, %v1007
  %s1011 = scalar_lea.vmem %s0, 779
  %s1012 = smov 3
  %v1013 = vld [vmem:[%s1011] ss:$16 sm:%s1012]
  %s1014 = scalar_lea.vmem %s0, 779
  %s1015 = smov 12
  %v1016 = vld [vmem:[%s1014] ss:$16 sm:%s1015]
  %vm1017 = vcmask 1043458
  %v1018 = vsel %vm1017, %v1016, %v1013
  %s1019 = scalar_lea.vmem %s0, 779
  %s1020 = smov 48
  %v1021 = vld [vmem:[%s1019] ss:$16 sm:%s1020]
  %vm1022 = vcmask 1045508
  %v1023 = vsel %vm1022, %v1021, %v1018
  %s1024 = scalar_lea.vmem %s0, 779
  %s1025 = smov 192
  %v1026 = vld [vmem:[%s1024] ss:$16 sm:%s1025]
  %vm1027 = vcmask 1047558
  %v1028 = vsel %vm1027, %v1026, %v1023
  %1029 = vrot.lane.b32.xlu0 %v1028, 44
  %v1030 = vpop.permute.xlu0 %1029
  %vm1031 = vcmask 392544
  %s1032 = scalar_lea.vmem %s1, 48
  %1033 = vst.msk [vmem:[%s1032] sm:$0xff] %vm1031, %v1030
  %s1034 = scalar_lea.vmem %s0, 395
  %s1035 = smov 3
  %v1036 = vld [vmem:[%s1034] ss:$16 sm:%s1035]
  %s1037 = scalar_lea.vmem %s0, 395
  %s1038 = smov 12
  %v1039 = vld [vmem:[%s1037] ss:$16 sm:%s1038]
  %vm1040 = vcmask 1043458
  %v1041 = vsel %vm1040, %v1039, %v1036
  %s1042 = scalar_lea.vmem %s0, 395
  %s1043 = smov 48
  %v1044 = vld [vmem:[%s1042] ss:$16 sm:%s1043]
  %vm1045 = vcmask 1045508
  %v1046 = vsel %vm1045, %v1044, %v1041
  %s1047 = scalar_lea.vmem %s0, 395
  %s1048 = smov 192
  %v1049 = vld [vmem:[%s1047] ss:$16 sm:%s1048]
  %vm1050 = vcmask 1047558
  %v1051 = vsel %vm1050, %v1049, %v1046
  %1052 = vrot.lane.b32.xlu0 %v1051, 44
  %v1053 = vpop.permute.xlu0 %1052
  %vm1054 = vcmask 392544
  %s1055 = scalar_lea.vmem %s1, 24
  %1056 = vst.msk [vmem:[%s1055] sm:$0xff] %vm1054, %v1053
  %s1057 = scalar_lea.vmem %s0, 907
  %s1058 = smov 3
  %v1059 = vld [vmem:[%s1057] ss:$16 sm:%s1058]
  %s1060 = scalar_lea.vmem %s0, 907
  %s1061 = smov 12
  %v1062 = vld [vmem:[%s1060] ss:$16 sm:%s1061]
  %vm1063 = vcmask 1043458
  %v1064 = vsel %vm1063, %v1062, %v1059
  %s1065 = scalar_lea.vmem %s0, 907
  %s1066 = smov 48
  %v1067 = vld [vmem:[%s1065] ss:$16 sm:%s1066]
  %vm1068 = vcmask 1045508
  %v1069 = vsel %vm1068, %v1067, %v1064
  %s1070 = scalar_lea.vmem %s0, 907
  %s1071 = smov 192
  %v1072 = vld [vmem:[%s1070] ss:$16 sm:%s1071]
  %vm1073 = vcmask 1047558
  %v1074 = vsel %vm1073, %v1072, %v1069
  %1075 = vrot.lane.b32.xlu0 %v1074, 44
  %v1076 = vpop.permute.xlu0 %1075
  %vm1077 = vcmask 392544
  %s1078 = scalar_lea.vmem %s1, 56
  %1079 = vst.msk [vmem:[%s1078] sm:$0xff] %vm1077, %v1076
  %s1080 = scalar_lea.vmem %s0, 10
  %s1081 = smov 3
  %v1082 = vld [vmem:[%s1080] ss:$16 sm:%s1081]
  %s1083 = scalar_lea.vmem %s0, 10
  %s1084 = smov 12
  %v1085 = vld [vmem:[%s1083] ss:$16 sm:%s1084]
  %vm1086 = vcmask 1043458
  %v1087 = vsel %vm1086, %v1085, %v1082
  %s1088 = scalar_lea.vmem %s0, 10
  %s1089 = smov 48
  %v1090 = vld [vmem:[%s1088] ss:$16 sm:%s1089]
  %vm1091 = vcmask 1045508
  %v1092 = vsel %vm1091, %v1090, %v1087
  %s1093 = scalar_lea.vmem %s0, 10
  %s1094 = smov 192
  %v1095 = vld [vmem:[%s1093] ss:$16 sm:%s1094]
  %vm1096 = vcmask 1047558
  %v1097 = vsel %vm1096, %v1095, %v1092
  %1098 = vrot.lane.b32.xlu0 %v1097, 40
  %v1099 = vpop.permute.xlu0 %1098
  %vm1100 = vcmask 359744
  %1101 = vst.msk [vmem:[%s1] sm:$0xff] %vm1100, %v1099
  %s1102 = scalar_lea.vmem %s0, 522
  %s1103 = smov 3
  %v1104 = vld [vmem:[%s1102] ss:$16 sm:%s1103]
  %s1105 = scalar_lea.vmem %s0, 522
  %s1106 = smov 12
  %v1107 = vld [vmem:[%s1105] ss:$16 sm:%s1106]
  %vm1108 = vcmask 1043458
  %v1109 = vsel %vm1108, %v1107, %v1104
  %s1110 = scalar_lea.vmem %s0, 522
  %s1111 = smov 48
  %v1112 = vld [vmem:[%s1110] ss:$16 sm:%s1111]
  %vm1113 = vcmask 1045508
  %v1114 = vsel %vm1113, %v1112, %v1109
  %s1115 = scalar_lea.vmem %s0, 522
  %s1116 = smov 192
  %v1117 = vld [vmem:[%s1115] ss:$16 sm:%s1116]
  %vm1118 = vcmask 1047558
  %v1119 = vsel %vm1118, %v1117, %v1114
  %1120 = vrot.lane.b32.xlu0 %v1119, 40
  %v1121 = vpop.permute.xlu0 %1120
  %vm1122 = vcmask 359744
  %s1123 = scalar_lea.vmem %s1, 32
  %1124 = vst.msk [vmem:[%s1123] sm:$0xff] %vm1122, %v1121
  %s1125 = scalar_lea.vmem %s0, 138
  %s1126 = smov 3
  %v1127 = vld [vmem:[%s1125] ss:$16 sm:%s1126]
  %s1128 = scalar_lea.vmem %s0, 138
  %s1129 = smov 12
  %v1130 = vld [vmem:[%s1128] ss:$16 sm:%s1129]
  %vm1131 = vcmask 1043458
  %v1132 = vsel %vm1131, %v1130, %v1127
  %s1133 = scalar_lea.vmem %s0, 138
  %s1134 = smov 48
  %v1135 = vld [vmem:[%s1133] ss:$16 sm:%s1134]
  %vm1136 = vcmask 1045508
  %v1137 = vsel %vm1136, %v1135, %v1132
  %s1138 = scalar_lea.vmem %s0, 138
  %s1139 = smov 192
  %v1140 = vld [vmem:[%s1138] ss:$16 sm:%s1139]
  %vm1141 = vcmask 1047558
  %v1142 = vsel %vm1141, %v1140, %v1137
  %1143 = vrot.lane.b32.xlu0 %v1142, 40
  %v1144 = vpop.permute.xlu0 %1143
  %vm1145 = vcmask 359744
  %s1146 = scalar_lea.vmem %s1, 8
  %1147 = vst.msk [vmem:[%s1146] sm:$0xff] %vm1145, %v1144
  %s1148 = scalar_lea.vmem %s0, 650
  %s1149 = smov 3
  %v1150 = vld [vmem:[%s1148] ss:$16 sm:%s1149]
  %s1151 = scalar_lea.vmem %s0, 650
  %s1152 = smov 12
  %v1153 = vld [vmem:[%s1151] ss:$16 sm:%s1152]
  %vm1154 = vcmask 1043458
  %v1155 = vsel %vm1154, %v1153, %v1150
  %s1156 = scalar_lea.vmem %s0, 650
  %s1157 = smov 48
  %v1158 = vld [vmem:[%s1156] ss:$16 sm:%s1157]
  %vm1159 = vcmask 1045508
  %v1160 = vsel %vm1159, %v1158, %v1155
  %s1161 = scalar_lea.vmem %s0, 650
  %s1162 = smov 192
  %v1163 = vld [vmem:[%s1161] ss:$16 sm:%s1162]
  %vm1164 = vcmask 1047558
  %v1165 = vsel %vm1164, %v1163, %v1160
  %1166 = vrot.lane.b32.xlu0 %v1165, 40
  %v1167 = vpop.permute.xlu0 %1166
  %vm1168 = vcmask 359744
  %s1169 = scalar_lea.vmem %s1, 40
  %1170 = vst.msk [vmem:[%s1169] sm:$0xff] %vm1168, %v1167
  %s1171 = scalar_lea.vmem %s0, 266
  %s1172 = smov 3
  %v1173 = vld [vmem:[%s1171] ss:$16 sm:%s1172]
  %s1174 = scalar_lea.vmem %s0, 266
  %s1175 = smov 12
  %v1176 = vld [vmem:[%s1174] ss:$16 sm:%s1175]
  %vm1177 = vcmask 1043458
  %v1178 = vsel %vm1177, %v1176, %v1173
  %s1179 = scalar_lea.vmem %s0, 266
  %s1180 = smov 48
  %v1181 = vld [vmem:[%s1179] ss:$16 sm:%s1180]
  %vm1182 = vcmask 1045508
  %v1183 = vsel %vm1182, %v1181, %v1178
  %s1184 = scalar_lea.vmem %s0, 266
  %s1185 = smov 192
  %v1186 = vld [vmem:[%s1184] ss:$16 sm:%s1185]
  %vm1187 = vcmask 1047558
  %v1188 = vsel %vm1187, %v1186, %v1183
  %1189 = vrot.lane.b32.xlu0 %v1188, 40
  %v1190 = vpop.permute.xlu0 %1189
  %vm1191 = vcmask 359744
  %s1192 = scalar_lea.vmem %s1, 16
  %1193 = vst.msk [vmem:[%s1192] sm:$0xff] %vm1191, %v1190
  %s1194 = scalar_lea.vmem %s0, 778
  %s1195 = smov 3
  %v1196 = vld [vmem:[%s1194] ss:$16 sm:%s1195]
  %s1197 = scalar_lea.vmem %s0, 778
  %s1198 = smov 12
  %v1199 = vld [vmem:[%s1197] ss:$16 sm:%s1198]
  %vm1200 = vcmask 1043458
  %v1201 = vsel %vm1200, %v1199, %v1196
  %s1202 = scalar_lea.vmem %s0, 778
  %s1203 = smov 48
  %v1204 = vld [vmem:[%s1202] ss:$16 sm:%s1203]
  %vm1205 = vcmask 1045508
  %v1206 = vsel %vm1205, %v1204, %v1201
  %s1207 = scalar_lea.vmem %s0, 778
  %s1208 = smov 192
  %v1209 = vld [vmem:[%s1207] ss:$16 sm:%s1208]
  %vm1210 = vcmask 1047558
  %v1211 = vsel %vm1210, %v1209, %v1206
  %1212 = vrot.lane.b32.xlu0 %v1211, 40
  %v1213 = vpop.permute.xlu0 %1212
  %vm1214 = vcmask 359744
  %s1215 = scalar_lea.vmem %s1, 48
  %1216 = vst.msk [vmem:[%s1215] sm:$0xff] %vm1214, %v1213
  %s1217 = scalar_lea.vmem %s0, 394
  %s1218 = smov 3
  %v1219 = vld [vmem:[%s1217] ss:$16 sm:%s1218]
  %s1220 = scalar_lea.vmem %s0, 394
  %s1221 = smov 12
  %v1222 = vld [vmem:[%s1220] ss:$16 sm:%s1221]
  %vm1223 = vcmask 1043458
  %v1224 = vsel %vm1223, %v1222, %v1219
  %s1225 = scalar_lea.vmem %s0, 394
  %s1226 = smov 48
  %v1227 = vld [vmem:[%s1225] ss:$16 sm:%s1226]
  %vm1228 = vcmask 1045508
  %v1229 = vsel %vm1228, %v1227, %v1224
  %s1230 = scalar_lea.vmem %s0, 394
  %s1231 = smov 192
  %v1232 = vld [vmem:[%s1230] ss:$16 sm:%s1231]
  %vm1233 = vcmask 1047558
  %v1234 = vsel %vm1233, %v1232, %v1229
  %1235 = vrot.lane.b32.xlu0 %v1234, 40
  %v1236 = vpop.permute.xlu0 %1235
  %vm1237 = vcmask 359744
  %s1238 = scalar_lea.vmem %s1, 24
  %1239 = vst.msk [vmem:[%s1238] sm:$0xff] %vm1237, %v1236
  %s1240 = scalar_lea.vmem %s0, 906
  %s1241 = smov 3
  %v1242 = vld [vmem:[%s1240] ss:$16 sm:%s1241]
  %s1243 = scalar_lea.vmem %s0, 906
  %s1244 = smov 12
  %v1245 = vld [vmem:[%s1243] ss:$16 sm:%s1244]
  %vm1246 = vcmask 1043458
  %v1247 = vsel %vm1246, %v1245, %v1242
  %s1248 = scalar_lea.vmem %s0, 906
  %s1249 = smov 48
  %v1250 = vld [vmem:[%s1248] ss:$16 sm:%s1249]
  %vm1251 = vcmask 1045508
  %v1252 = vsel %vm1251, %v1250, %v1247
  %s1253 = scalar_lea.vmem %s0, 906
  %s1254 = smov 192
  %v1255 = vld [vmem:[%s1253] ss:$16 sm:%s1254]
  %vm1256 = vcmask 1047558
  %v1257 = vsel %vm1256, %v1255, %v1252
  %1258 = vrot.lane.b32.xlu0 %v1257, 40
  %v1259 = vpop.permute.xlu0 %1258
  %vm1260 = vcmask 359744
  %s1261 = scalar_lea.vmem %s1, 56
  %1262 = vst.msk [vmem:[%s1261] sm:$0xff] %vm1260, %v1259
  %s1263 = scalar_lea.vmem %s0, 9
  %s1264 = smov 3
  %v1265 = vld [vmem:[%s1263] ss:$16 sm:%s1264]
  %s1266 = scalar_lea.vmem %s0, 9
  %s1267 = smov 12
  %v1268 = vld [vmem:[%s1266] ss:$16 sm:%s1267]
  %vm1269 = vcmask 1043458
  %v1270 = vsel %vm1269, %v1268, %v1265
  %s1271 = scalar_lea.vmem %s0, 9
  %s1272 = smov 48
  %v1273 = vld [vmem:[%s1271] ss:$16 sm:%s1272]
  %vm1274 = vcmask 1045508
  %v1275 = vsel %vm1274, %v1273, %v1270
  %s1276 = scalar_lea.vmem %s0, 9
  %s1277 = smov 192
  %v1278 = vld [vmem:[%s1276] ss:$16 sm:%s1277]
  %vm1279 = vcmask 1047558
  %v1280 = vsel %vm1279, %v1278, %v1275
  %1281 = vrot.lane.b32.xlu0 %v1280, 36
  %v1282 = vpop.permute.xlu0 %1281
  %vm1283 = vcmask 326944
  %1284 = vst.msk [vmem:[%s1] sm:$0xff] %vm1283, %v1282
  %s1285 = scalar_lea.vmem %s0, 521
  %s1286 = smov 3
  %v1287 = vld [vmem:[%s1285] ss:$16 sm:%s1286]
  %s1288 = scalar_lea.vmem %s0, 521
  %s1289 = smov 12
  %v1290 = vld [vmem:[%s1288] ss:$16 sm:%s1289]
  %vm1291 = vcmask 1043458
  %v1292 = vsel %vm1291, %v1290, %v1287
  %s1293 = scalar_lea.vmem %s0, 521
  %s1294 = smov 48
  %v1295 = vld [vmem:[%s1293] ss:$16 sm:%s1294]
  %vm1296 = vcmask 1045508
  %v1297 = vsel %vm1296, %v1295, %v1292
  %s1298 = scalar_lea.vmem %s0, 521
  %s1299 = smov 192
  %v1300 = vld [vmem:[%s1298] ss:$16 sm:%s1299]
  %vm1301 = vcmask 1047558
  %v1302 = vsel %vm1301, %v1300, %v1297
  %1303 = vrot.lane.b32.xlu0 %v1302, 36
  %v1304 = vpop.permute.xlu0 %1303
  %vm1305 = vcmask 326944
  %s1306 = scalar_lea.vmem %s1, 32
  %1307 = vst.msk [vmem:[%s1306] sm:$0xff] %vm1305, %v1304
  %s1308 = scalar_lea.vmem %s0, 137
  %s1309 = smov 3
  %v1310 = vld [vmem:[%s1308] ss:$16 sm:%s1309]
  %s1311 = scalar_lea.vmem %s0, 137
  %s1312 = smov 12
  %v1313 = vld [vmem:[%s1311] ss:$16 sm:%s1312]
  %vm1314 = vcmask 1043458
  %v1315 = vsel %vm1314, %v1313, %v1310
  %s1316 = scalar_lea.vmem %s0, 137
  %s1317 = smov 48
  %v1318 = vld [vmem:[%s1316] ss:$16 sm:%s1317]
  %vm1319 = vcmask 1045508
  %v1320 = vsel %vm1319, %v1318, %v1315
  %s1321 = scalar_lea.vmem %s0, 137
  %s1322 = smov 192
  %v1323 = vld [vmem:[%s1321] ss:$16 sm:%s1322]
  %vm1324 = vcmask 1047558
  %v1325 = vsel %vm1324, %v1323, %v1320
  %1326 = vrot.lane.b32.xlu0 %v1325, 36
  %v1327 = vpop.permute.xlu0 %1326
  %vm1328 = vcmask 326944
  %s1329 = scalar_lea.vmem %s1, 8
  %1330 = vst.msk [vmem:[%s1329] sm:$0xff] %vm1328, %v1327
  %s1331 = scalar_lea.vmem %s0, 649
  %s1332 = smov 3
  %v1333 = vld [vmem:[%s1331] ss:$16 sm:%s1332]
  %s1334 = scalar_lea.vmem %s0, 649
  %s1335 = smov 12
  %v1336 = vld [vmem:[%s1334] ss:$16 sm:%s1335]
  %vm1337 = vcmask 1043458
  %v1338 = vsel %vm1337, %v1336, %v1333
  %s1339 = scalar_lea.vmem %s0, 649
  %s1340 = smov 48
  %v1341 = vld [vmem:[%s1339] ss:$16 sm:%s1340]
  %vm1342 = vcmask 1045508
  %v1343 = vsel %vm1342, %v1341, %v1338
  %s1344 = scalar_lea.vmem %s0, 649
  %s1345 = smov 192
  %v1346 = vld [vmem:[%s1344] ss:$16 sm:%s1345]
  %vm1347 = vcmask 1047558
  %v1348 = vsel %vm1347, %v1346, %v1343
  %1349 = vrot.lane.b32.xlu0 %v1348, 36
  %v1350 = vpop.permute.xlu0 %1349
  %vm1351 = vcmask 326944
  %s1352 = scalar_lea.vmem %s1, 40
  %1353 = vst.msk [vmem:[%s1352] sm:$0xff] %vm1351, %v1350
  %s1354 = scalar_lea.vmem %s0, 265
  %s1355 = smov 3
  %v1356 = vld [vmem:[%s1354] ss:$16 sm:%s1355]
  %s1357 = scalar_lea.vmem %s0, 265
  %s1358 = smov 12
  %v1359 = vld [vmem:[%s1357] ss:$16 sm:%s1358]
  %vm1360 = vcmask 1043458
  %v1361 = vsel %vm1360, %v1359, %v1356
  %s1362 = scalar_lea.vmem %s0, 265
  %s1363 = smov 48
  %v1364 = vld [vmem:[%s1362] ss:$16 sm:%s1363]
  %vm1365 = vcmask 1045508
  %v1366 = vsel %vm1365, %v1364, %v1361
  %s1367 = scalar_lea.vmem %s0, 265
  %s1368 = smov 192
  %v1369 = vld [vmem:[%s1367] ss:$16 sm:%s1368]
  %vm1370 = vcmask 1047558
  %v1371 = vsel %vm1370, %v1369, %v1366
  %1372 = vrot.lane.b32.xlu0 %v1371, 36
  %v1373 = vpop.permute.xlu0 %1372
  %vm1374 = vcmask 326944
  %s1375 = scalar_lea.vmem %s1, 16
  %1376 = vst.msk [vmem:[%s1375] sm:$0xff] %vm1374, %v1373
  %s1377 = scalar_lea.vmem %s0, 777
  %s1378 = smov 3
  %v1379 = vld [vmem:[%s1377] ss:$16 sm:%s1378]
  %s1380 = scalar_lea.vmem %s0, 777
  %s1381 = smov 12
  %v1382 = vld [vmem:[%s1380] ss:$16 sm:%s1381]
  %vm1383 = vcmask 1043458
  %v1384 = vsel %vm1383, %v1382, %v1379
  %s1385 = scalar_lea.vmem %s0, 777
  %s1386 = smov 48
  %v1387 = vld [vmem:[%s1385] ss:$16 sm:%s1386]
  %vm1388 = vcmask 1045508
  %v1389 = vsel %vm1388, %v1387, %v1384
  %s1390 = scalar_lea.vmem %s0, 777
  %s1391 = smov 192
  %v1392 = vld [vmem:[%s1390] ss:$16 sm:%s1391]
  %vm1393 = vcmask 1047558
  %v1394 = vsel %vm1393, %v1392, %v1389
  %1395 = vrot.lane.b32.xlu0 %v1394, 36
  %v1396 = vpop.permute.xlu0 %1395
  %vm1397 = vcmask 326944
  %s1398 = scalar_lea.vmem %s1, 48
  %1399 = vst.msk [vmem:[%s1398] sm:$0xff] %vm1397, %v1396
  %s1400 = scalar_lea.vmem %s0, 393
  %s1401 = smov 3
  %v1402 = vld [vmem:[%s1400] ss:$16 sm:%s1401]
  %s1403 = scalar_lea.vmem %s0, 393
  %s1404 = smov 12
  %v1405 = vld [vmem:[%s1403] ss:$16 sm:%s1404]
  %vm1406 = vcmask 1043458
  %v1407 = vsel %vm1406, %v1405, %v1402
  %s1408 = scalar_lea.vmem %s0, 393
  %s1409 = smov 48
  %v1410 = vld [vmem:[%s1408] ss:$16 sm:%s1409]
  %vm1411 = vcmask 1045508
  %v1412 = vsel %vm1411, %v1410, %v1407
  %s1413 = scalar_lea.vmem %s0, 393
  %s1414 = smov 192
  %v1415 = vld [vmem:[%s1413] ss:$16 sm:%s1414]
  %vm1416 = vcmask 1047558
  %v1417 = vsel %vm1416, %v1415, %v1412
  %1418 = vrot.lane.b32.xlu0 %v1417, 36
  %v1419 = vpop.permute.xlu0 %1418
  %vm1420 = vcmask 326944
  %s1421 = scalar_lea.vmem %s1, 24
  %1422 = vst.msk [vmem:[%s1421] sm:$0xff] %vm1420, %v1419
  %s1423 = scalar_lea.vmem %s0, 905
  %s1424 = smov 3
  %v1425 = vld [vmem:[%s1423] ss:$16 sm:%s1424]
  %s1426 = scalar_lea.vmem %s0, 905
  %s1427 = smov 12
  %v1428 = vld [vmem:[%s1426] ss:$16 sm:%s1427]
  %vm1429 = vcmask 1043458
  %v1430 = vsel %vm1429, %v1428, %v1425
  %s1431 = scalar_lea.vmem %s0, 905
  %s1432 = smov 48
  %v1433 = vld [vmem:[%s1431] ss:$16 sm:%s1432]
  %vm1434 = vcmask 1045508
  %v1435 = vsel %vm1434, %v1433, %v1430
  %s1436 = scalar_lea.vmem %s0, 905
  %s1437 = smov 192
  %v1438 = vld [vmem:[%s1436] ss:$16 sm:%s1437]
  %vm1439 = vcmask 1047558
  %v1440 = vsel %vm1439, %v1438, %v1435
  %1441 = vrot.lane.b32.xlu0 %v1440, 36
  %v1442 = vpop.permute.xlu0 %1441
  %vm1443 = vcmask 326944
  %s1444 = scalar_lea.vmem %s1, 56
  %1445 = vst.msk [vmem:[%s1444] sm:$0xff] %vm1443, %v1442
  %s1446 = scalar_lea.vmem %s0, 8
  %s1447 = smov 3
  %v1448 = vld [vmem:[%s1446] ss:$16 sm:%s1447]
  %s1449 = scalar_lea.vmem %s0, 8
  %s1450 = smov 12
  %v1451 = vld [vmem:[%s1449] ss:$16 sm:%s1450]
  %vm1452 = vcmask 1043458
  %v1453 = vsel %vm1452, %v1451, %v1448
  %s1454 = scalar_lea.vmem %s0, 8
  %s1455 = smov 48
  %v1456 = vld [vmem:[%s1454] ss:$16 sm:%s1455]
  %vm1457 = vcmask 1045508
  %v1458 = vsel %vm1457, %v1456, %v1453
  %s1459 = scalar_lea.vmem %s0, 8
  %s1460 = smov 192
  %v1461 = vld [vmem:[%s1459] ss:$16 sm:%s1460]
  %vm1462 = vcmask 1047558
  %v1463 = vsel %vm1462, %v1461, %v1458
  %1464 = vrot.lane.b32.xlu0 %v1463, 32
  %v1465 = vpop.permute.xlu0 %1464
  %vm1466 = vcmask 294144
  %1467 = vst.msk [vmem:[%s1] sm:$0xff] %vm1466, %v1465
  %s1468 = scalar_lea.vmem %s0, 520
  %s1469 = smov 3
  %v1470 = vld [vmem:[%s1468] ss:$16 sm:%s1469]
  %s1471 = scalar_lea.vmem %s0, 520
  %s1472 = smov 12
  %v1473 = vld [vmem:[%s1471] ss:$16 sm:%s1472]
  %vm1474 = vcmask 1043458
  %v1475 = vsel %vm1474, %v1473, %v1470
  %s1476 = scalar_lea.vmem %s0, 520
  %s1477 = smov 48
  %v1478 = vld [vmem:[%s1476] ss:$16 sm:%s1477]
  %vm1479 = vcmask 1045508
  %v1480 = vsel %vm1479, %v1478, %v1475
  %s1481 = scalar_lea.vmem %s0, 520
  %s1482 = smov 192
  %v1483 = vld [vmem:[%s1481] ss:$16 sm:%s1482]
  %vm1484 = vcmask 1047558
  %v1485 = vsel %vm1484, %v1483, %v1480
  %1486 = vrot.lane.b32.xlu0 %v1485, 32
  %v1487 = vpop.permute.xlu0 %1486
  %vm1488 = vcmask 294144
  %s1489 = scalar_lea.vmem %s1, 32
  %1490 = vst.msk [vmem:[%s1489] sm:$0xff] %vm1488, %v1487
  %s1491 = scalar_lea.vmem %s0, 136
  %s1492 = smov 3
  %v1493 = vld [vmem:[%s1491] ss:$16 sm:%s1492]
  %s1494 = scalar_lea.vmem %s0, 136
  %s1495 = smov 12
  %v1496 = vld [vmem:[%s1494] ss:$16 sm:%s1495]
  %vm1497 = vcmask 1043458
  %v1498 = vsel %vm1497, %v1496, %v1493
  %s1499 = scalar_lea.vmem %s0, 136
  %s1500 = smov 48
  %v1501 = vld [vmem:[%s1499] ss:$16 sm:%s1500]
  %vm1502 = vcmask 1045508
  %v1503 = vsel %vm1502, %v1501, %v1498
  %s1504 = scalar_lea.vmem %s0, 136
  %s1505 = smov 192
  %v1506 = vld [vmem:[%s1504] ss:$16 sm:%s1505]
  %vm1507 = vcmask 1047558
  %v1508 = vsel %vm1507, %v1506, %v1503
  %1509 = vrot.lane.b32.xlu0 %v1508, 32
  %v1510 = vpop.permute.xlu0 %1509
  %vm1511 = vcmask 294144
  %s1512 = scalar_lea.vmem %s1, 8
  %1513 = vst.msk [vmem:[%s1512] sm:$0xff] %vm1511, %v1510
  %s1514 = scalar_lea.vmem %s0, 648
  %s1515 = smov 3
  %v1516 = vld [vmem:[%s1514] ss:$16 sm:%s1515]
  %s1517 = scalar_lea.vmem %s0, 648
  %s1518 = smov 12
  %v1519 = vld [vmem:[%s1517] ss:$16 sm:%s1518]
  %vm1520 = vcmask 1043458
  %v1521 = vsel %vm1520, %v1519, %v1516
  %s1522 = scalar_lea.vmem %s0, 648
  %s1523 = smov 48
  %v1524 = vld [vmem:[%s1522] ss:$16 sm:%s1523]
  %vm1525 = vcmask 1045508
  %v1526 = vsel %vm1525, %v1524, %v1521
  %s1527 = scalar_lea.vmem %s0, 648
  %s1528 = smov 192
  %v1529 = vld [vmem:[%s1527] ss:$16 sm:%s1528]
  %vm1530 = vcmask 1047558
  %v1531 = vsel %vm1530, %v1529, %v1526
  %1532 = vrot.lane.b32.xlu0 %v1531, 32
  %v1533 = vpop.permute.xlu0 %1532
  %vm1534 = vcmask 294144
  %s1535 = scalar_lea.vmem %s1, 40
  %1536 = vst.msk [vmem:[%s1535] sm:$0xff] %vm1534, %v1533
  %s1537 = scalar_lea.vmem %s0, 264
  %s1538 = smov 3
  %v1539 = vld [vmem:[%s1537] ss:$16 sm:%s1538]
  %s1540 = scalar_lea.vmem %s0, 264
  %s1541 = smov 12
  %v1542 = vld [vmem:[%s1540] ss:$16 sm:%s1541]
  %vm1543 = vcmask 1043458
  %v1544 = vsel %vm1543, %v1542, %v1539
  %s1545 = scalar_lea.vmem %s0, 264
  %s1546 = smov 48
  %v1547 = vld [vmem:[%s1545] ss:$16 sm:%s1546]
  %vm1548 = vcmask 1045508
  %v1549 = vsel %vm1548, %v1547, %v1544
  %s1550 = scalar_lea.vmem %s0, 264
  %s1551 = smov 192
  %v1552 = vld [vmem:[%s1550] ss:$16 sm:%s1551]
  %vm1553 = vcmask 1047558
  %v1554 = vsel %vm1553, %v1552, %v1549
  %1555 = vrot.lane.b32.xlu0 %v1554, 32
  %v1556 = vpop.permute.xlu0 %1555
  %vm1557 = vcmask 294144
  %s1558 = scalar_lea.vmem %s1, 16
  %1559 = vst.msk [vmem:[%s1558] sm:$0xff] %vm1557, %v1556
  %s1560 = scalar_lea.vmem %s0, 776
  %s1561 = smov 3
  %v1562 = vld [vmem:[%s1560] ss:$16 sm:%s1561]
  %s1563 = scalar_lea.vmem %s0, 776
  %s1564 = smov 12
  %v1565 = vld [vmem:[%s1563] ss:$16 sm:%s1564]
  %vm1566 = vcmask 1043458
  %v1567 = vsel %vm1566, %v1565, %v1562
  %s1568 = scalar_lea.vmem %s0, 776
  %s1569 = smov 48
  %v1570 = vld [vmem:[%s1568] ss:$16 sm:%s1569]
  %vm1571 = vcmask 1045508
  %v1572 = vsel %vm1571, %v1570, %v1567
  %s1573 = scalar_lea.vmem %s0, 776
  %s1574 = smov 192
  %v1575 = vld [vmem:[%s1573] ss:$16 sm:%s1574]
  %vm1576 = vcmask 1047558
  %v1577 = vsel %vm1576, %v1575, %v1572
  %1578 = vrot.lane.b32.xlu0 %v1577, 32
  %v1579 = vpop.permute.xlu0 %1578
  %vm1580 = vcmask 294144
  %s1581 = scalar_lea.vmem %s1, 48
  %1582 = vst.msk [vmem:[%s1581] sm:$0xff] %vm1580, %v1579
  %s1583 = scalar_lea.vmem %s0, 392
  %s1584 = smov 3
  %v1585 = vld [vmem:[%s1583] ss:$16 sm:%s1584]
  %s1586 = scalar_lea.vmem %s0, 392
  %s1587 = smov 12
  %v1588 = vld [vmem:[%s1586] ss:$16 sm:%s1587]
  %vm1589 = vcmask 1043458
  %v1590 = vsel %vm1589, %v1588, %v1585
  %s1591 = scalar_lea.vmem %s0, 392
  %s1592 = smov 48
  %v1593 = vld [vmem:[%s1591] ss:$16 sm:%s1592]
  %vm1594 = vcmask 1045508
  %v1595 = vsel %vm1594, %v1593, %v1590
  %s1596 = scalar_lea.vmem %s0, 392
  %s1597 = smov 192
  %v1598 = vld [vmem:[%s1596] ss:$16 sm:%s1597]
  %vm1599 = vcmask 1047558
  %v1600 = vsel %vm1599, %v1598, %v1595
  %1601 = vrot.lane.b32.xlu0 %v1600, 32
  %v1602 = vpop.permute.xlu0 %1601
  %vm1603 = vcmask 294144
  %s1604 = scalar_lea.vmem %s1, 24
  %1605 = vst.msk [vmem:[%s1604] sm:$0xff] %vm1603, %v1602
  %s1606 = scalar_lea.vmem %s0, 904
  %s1607 = smov 3
  %v1608 = vld [vmem:[%s1606] ss:$16 sm:%s1607]
  %s1609 = scalar_lea.vmem %s0, 904
  %s1610 = smov 12
  %v1611 = vld [vmem:[%s1609] ss:$16 sm:%s1610]
  %vm1612 = vcmask 1043458
  %v1613 = vsel %vm1612, %v1611, %v1608
  %s1614 = scalar_lea.vmem %s0, 904
  %s1615 = smov 48
  %v1616 = vld [vmem:[%s1614] ss:$16 sm:%s1615]
  %vm1617 = vcmask 1045508
  %v1618 = vsel %vm1617, %v1616, %v1613
  %s1619 = scalar_lea.vmem %s0, 904
  %s1620 = smov 192
  %v1621 = vld [vmem:[%s1619] ss:$16 sm:%s1620]
  %vm1622 = vcmask 1047558
  %v1623 = vsel %vm1622, %v1621, %v1618
  %1624 = vrot.lane.b32.xlu0 %v1623, 32
  %v1625 = vpop.permute.xlu0 %1624
  %vm1626 = vcmask 294144
  %s1627 = scalar_lea.vmem %s1, 56
  %1628 = vst.msk [vmem:[%s1627] sm:$0xff] %vm1626, %v1625
  %s1629 = scalar_lea.vmem %s0, 7
  %s1630 = smov 3
  %v1631 = vld [vmem:[%s1629] ss:$16 sm:%s1630]
  %s1632 = scalar_lea.vmem %s0, 7
  %s1633 = smov 12
  %v1634 = vld [vmem:[%s1632] ss:$16 sm:%s1633]
  %vm1635 = vcmask 1043458
  %v1636 = vsel %vm1635, %v1634, %v1631
  %s1637 = scalar_lea.vmem %s0, 7
  %s1638 = smov 48
  %v1639 = vld [vmem:[%s1637] ss:$16 sm:%s1638]
  %vm1640 = vcmask 1045508
  %v1641 = vsel %vm1640, %v1639, %v1636
  %s1642 = scalar_lea.vmem %s0, 7
  %s1643 = smov 192
  %v1644 = vld [vmem:[%s1642] ss:$16 sm:%s1643]
  %vm1645 = vcmask 1047558
  %v1646 = vsel %vm1645, %v1644, %v1641
  %1647 = vrot.lane.b32.xlu0 %v1646, 28
  %v1648 = vpop.permute.xlu0 %1647
  %vm1649 = vcmask 261344
  %1650 = vst.msk [vmem:[%s1] sm:$0xff] %vm1649, %v1648
  %s1651 = scalar_lea.vmem %s0, 519
  %s1652 = smov 3
  %v1653 = vld [vmem:[%s1651] ss:$16 sm:%s1652]
  %s1654 = scalar_lea.vmem %s0, 519
  %s1655 = smov 12
  %v1656 = vld [vmem:[%s1654] ss:$16 sm:%s1655]
  %vm1657 = vcmask 1043458
  %v1658 = vsel %vm1657, %v1656, %v1653
  %s1659 = scalar_lea.vmem %s0, 519
  %s1660 = smov 48
  %v1661 = vld [vmem:[%s1659] ss:$16 sm:%s1660]
  %vm1662 = vcmask 1045508
  %v1663 = vsel %vm1662, %v1661, %v1658
  %s1664 = scalar_lea.vmem %s0, 519
  %s1665 = smov 192
  %v1666 = vld [vmem:[%s1664] ss:$16 sm:%s1665]
  %vm1667 = vcmask 1047558
  %v1668 = vsel %vm1667, %v1666, %v1663
  %1669 = vrot.lane.b32.xlu0 %v1668, 28
  %v1670 = vpop.permute.xlu0 %1669
  %vm1671 = vcmask 261344
  %s1672 = scalar_lea.vmem %s1, 32
  %1673 = vst.msk [vmem:[%s1672] sm:$0xff] %vm1671, %v1670
  %s1674 = scalar_lea.vmem %s0, 135
  %s1675 = smov 3
  %v1676 = vld [vmem:[%s1674] ss:$16 sm:%s1675]
  %s1677 = scalar_lea.vmem %s0, 135
  %s1678 = smov 12
  %v1679 = vld [vmem:[%s1677] ss:$16 sm:%s1678]
  %vm1680 = vcmask 1043458
  %v1681 = vsel %vm1680, %v1679, %v1676
  %s1682 = scalar_lea.vmem %s0, 135
  %s1683 = smov 48
  %v1684 = vld [vmem:[%s1682] ss:$16 sm:%s1683]
  %vm1685 = vcmask 1045508
  %v1686 = vsel %vm1685, %v1684, %v1681
  %s1687 = scalar_lea.vmem %s0, 135
  %s1688 = smov 192
  %v1689 = vld [vmem:[%s1687] ss:$16 sm:%s1688]
  %vm1690 = vcmask 1047558
  %v1691 = vsel %vm1690, %v1689, %v1686
  %1692 = vrot.lane.b32.xlu0 %v1691, 28
  %v1693 = vpop.permute.xlu0 %1692
  %vm1694 = vcmask 261344
  %s1695 = scalar_lea.vmem %s1, 8
  %1696 = vst.msk [vmem:[%s1695] sm:$0xff] %vm1694, %v1693
  %s1697 = scalar_lea.vmem %s0, 647
  %s1698 = smov 3
  %v1699 = vld [vmem:[%s1697] ss:$16 sm:%s1698]
  %s1700 = scalar_lea.vmem %s0, 647
  %s1701 = smov 12
  %v1702 = vld [vmem:[%s1700] ss:$16 sm:%s1701]
  %vm1703 = vcmask 1043458
  %v1704 = vsel %vm1703, %v1702, %v1699
  %s1705 = scalar_lea.vmem %s0, 647
  %s1706 = smov 48
  %v1707 = vld [vmem:[%s1705] ss:$16 sm:%s1706]
  %vm1708 = vcmask 1045508
  %v1709 = vsel %vm1708, %v1707, %v1704
  %s1710 = scalar_lea.vmem %s0, 647
  %s1711 = smov 192
  %v1712 = vld [vmem:[%s1710] ss:$16 sm:%s1711]
  %vm1713 = vcmask 1047558
  %v1714 = vsel %vm1713, %v1712, %v1709
  %1715 = vrot.lane.b32.xlu0 %v1714, 28
  %v1716 = vpop.permute.xlu0 %1715
  %vm1717 = vcmask 261344
  %s1718 = scalar_lea.vmem %s1, 40
  %1719 = vst.msk [vmem:[%s1718] sm:$0xff] %vm1717, %v1716
  %s1720 = scalar_lea.vmem %s0, 263
  %s1721 = smov 3
  %v1722 = vld [vmem:[%s1720] ss:$16 sm:%s1721]
  %s1723 = scalar_lea.vmem %s0, 263
  %s1724 = smov 12
  %v1725 = vld [vmem:[%s1723] ss:$16 sm:%s1724]
  %vm1726 = vcmask 1043458
  %v1727 = vsel %vm1726, %v1725, %v1722
  %s1728 = scalar_lea.vmem %s0, 263
  %s1729 = smov 48
  %v1730 = vld [vmem:[%s1728] ss:$16 sm:%s1729]
  %vm1731 = vcmask 1045508
  %v1732 = vsel %vm1731, %v1730, %v1727
  %s1733 = scalar_lea.vmem %s0, 263
  %s1734 = smov 192
  %v1735 = vld [vmem:[%s1733] ss:$16 sm:%s1734]
  %vm1736 = vcmask 1047558
  %v1737 = vsel %vm1736, %v1735, %v1732
  %1738 = vrot.lane.b32.xlu0 %v1737, 28
  %v1739 = vpop.permute.xlu0 %1738
  %vm1740 = vcmask 261344
  %s1741 = scalar_lea.vmem %s1, 16
  %1742 = vst.msk [vmem:[%s1741] sm:$0xff] %vm1740, %v1739
  %s1743 = scalar_lea.vmem %s0, 775
  %s1744 = smov 3
  %v1745 = vld [vmem:[%s1743] ss:$16 sm:%s1744]
  %s1746 = scalar_lea.vmem %s0, 775
  %s1747 = smov 12
  %v1748 = vld [vmem:[%s1746] ss:$16 sm:%s1747]
  %vm1749 = vcmask 1043458
  %v1750 = vsel %vm1749, %v1748, %v1745
  %s1751 = scalar_lea.vmem %s0, 775
  %s1752 = smov 48
  %v1753 = vld [vmem:[%s1751] ss:$16 sm:%s1752]
  %vm1754 = vcmask 1045508
  %v1755 = vsel %vm1754, %v1753, %v1750
  %s1756 = scalar_lea.vmem %s0, 775
  %s1757 = smov 192
  %v1758 = vld [vmem:[%s1756] ss:$16 sm:%s1757]
  %vm1759 = vcmask 1047558
  %v1760 = vsel %vm1759, %v1758, %v1755
  %1761 = vrot.lane.b32.xlu0 %v1760, 28
  %v1762 = vpop.permute.xlu0 %1761
  %vm1763 = vcmask 261344
  %s1764 = scalar_lea.vmem %s1, 48
  %1765 = vst.msk [vmem:[%s1764] sm:$0xff] %vm1763, %v1762
  %s1766 = scalar_lea.vmem %s0, 391
  %s1767 = smov 3
  %v1768 = vld [vmem:[%s1766] ss:$16 sm:%s1767]
  %s1769 = scalar_lea.vmem %s0, 391
  %s1770 = smov 12
  %v1771 = vld [vmem:[%s1769] ss:$16 sm:%s1770]
  %vm1772 = vcmask 1043458
  %v1773 = vsel %vm1772, %v1771, %v1768
  %s1774 = scalar_lea.vmem %s0, 391
  %s1775 = smov 48
  %v1776 = vld [vmem:[%s1774] ss:$16 sm:%s1775]
  %vm1777 = vcmask 1045508
  %v1778 = vsel %vm1777, %v1776, %v1773
  %s1779 = scalar_lea.vmem %s0, 391
  %s1780 = smov 192
  %v1781 = vld [vmem:[%s1779] ss:$16 sm:%s1780]
  %vm1782 = vcmask 1047558
  %v1783 = vsel %vm1782, %v1781, %v1778
  %1784 = vrot.lane.b32.xlu0 %v1783, 28
  %v1785 = vpop.permute.xlu0 %1784
  %vm1786 = vcmask 261344
  %s1787 = scalar_lea.vmem %s1, 24
  %1788 = vst.msk [vmem:[%s1787] sm:$0xff] %vm1786, %v1785
  %s1789 = scalar_lea.vmem %s0, 903
  %s1790 = smov 3
  %v1791 = vld [vmem:[%s1789] ss:$16 sm:%s1790]
  %s1792 = scalar_lea.vmem %s0, 903
  %s1793 = smov 12
  %v1794 = vld [vmem:[%s1792] ss:$16 sm:%s1793]
  %vm1795 = vcmask 1043458
  %v1796 = vsel %vm1795, %v1794, %v1791
  %s1797 = scalar_lea.vmem %s0, 903
  %s1798 = smov 48
  %v1799 = vld [vmem:[%s1797] ss:$16 sm:%s1798]
  %vm1800 = vcmask 1045508
  %v1801 = vsel %vm1800, %v1799, %v1796
  %s1802 = scalar_lea.vmem %s0, 903
  %s1803 = smov 192
  %v1804 = vld [vmem:[%s1802] ss:$16 sm:%s1803]
  %vm1805 = vcmask 1047558
  %v1806 = vsel %vm1805, %v1804, %v1801
  %1807 = vrot.lane.b32.xlu0 %v1806, 28
  %v1808 = vpop.permute.xlu0 %1807
  %vm1809 = vcmask 261344
  %s1810 = scalar_lea.vmem %s1, 56
  %1811 = vst.msk [vmem:[%s1810] sm:$0xff] %vm1809, %v1808
  %s1812 = scalar_lea.vmem %s0, 6
  %s1813 = smov 3
  %v1814 = vld [vmem:[%s1812] ss:$16 sm:%s1813]
  %s1815 = scalar_lea.vmem %s0, 6
  %s1816 = smov 12
  %v1817 = vld [vmem:[%s1815] ss:$16 sm:%s1816]
  %vm1818 = vcmask 1043458
  %v1819 = vsel %vm1818, %v1817, %v1814
  %s1820 = scalar_lea.vmem %s0, 6
  %s1821 = smov 48
  %v1822 = vld [vmem:[%s1820] ss:$16 sm:%s1821]
  %vm1823 = vcmask 1045508
  %v1824 = vsel %vm1823, %v1822, %v1819
  %s1825 = scalar_lea.vmem %s0, 6
  %s1826 = smov 192
  %v1827 = vld [vmem:[%s1825] ss:$16 sm:%s1826]
  %vm1828 = vcmask 1047558
  %v1829 = vsel %vm1828, %v1827, %v1824
  %1830 = vrot.lane.b32.xlu0 %v1829, 24
  %v1831 = vpop.permute.xlu0 %1830
  %vm1832 = vcmask 228544
  %1833 = vst.msk [vmem:[%s1] sm:$0xff] %vm1832, %v1831
  %s1834 = scalar_lea.vmem %s0, 518
  %s1835 = smov 3
  %v1836 = vld [vmem:[%s1834] ss:$16 sm:%s1835]
  %s1837 = scalar_lea.vmem %s0, 518
  %s1838 = smov 12
  %v1839 = vld [vmem:[%s1837] ss:$16 sm:%s1838]
  %vm1840 = vcmask 1043458
  %v1841 = vsel %vm1840, %v1839, %v1836
  %s1842 = scalar_lea.vmem %s0, 518
  %s1843 = smov 48
  %v1844 = vld [vmem:[%s1842] ss:$16 sm:%s1843]
  %vm1845 = vcmask 1045508
  %v1846 = vsel %vm1845, %v1844, %v1841
  %s1847 = scalar_lea.vmem %s0, 518
  %s1848 = smov 192
  %v1849 = vld [vmem:[%s1847] ss:$16 sm:%s1848]
  %vm1850 = vcmask 1047558
  %v1851 = vsel %vm1850, %v1849, %v1846
  %1852 = vrot.lane.b32.xlu0 %v1851, 24
  %v1853 = vpop.permute.xlu0 %1852
  %vm1854 = vcmask 228544
  %s1855 = scalar_lea.vmem %s1, 32
  %1856 = vst.msk [vmem:[%s1855] sm:$0xff] %vm1854, %v1853
  %s1857 = scalar_lea.vmem %s0, 134
  %s1858 = smov 3
  %v1859 = vld [vmem:[%s1857] ss:$16 sm:%s1858]
  %s1860 = scalar_lea.vmem %s0, 134
  %s1861 = smov 12
  %v1862 = vld [vmem:[%s1860] ss:$16 sm:%s1861]
  %vm1863 = vcmask 1043458
  %v1864 = vsel %vm1863, %v1862, %v1859
  %s1865 = scalar_lea.vmem %s0, 134
  %s1866 = smov 48
  %v1867 = vld [vmem:[%s1865] ss:$16 sm:%s1866]
  %vm1868 = vcmask 1045508
  %v1869 = vsel %vm1868, %v1867, %v1864
  %s1870 = scalar_lea.vmem %s0, 134
  %s1871 = smov 192
  %v1872 = vld [vmem:[%s1870] ss:$16 sm:%s1871]
  %vm1873 = vcmask 1047558
  %v1874 = vsel %vm1873, %v1872, %v1869
  %1875 = vrot.lane.b32.xlu0 %v1874, 24
  %v1876 = vpop.permute.xlu0 %1875
  %vm1877 = vcmask 228544
  %s1878 = scalar_lea.vmem %s1, 8
  %1879 = vst.msk [vmem:[%s1878] sm:$0xff] %vm1877, %v1876
  %s1880 = scalar_lea.vmem %s0, 646
  %s1881 = smov 3
  %v1882 = vld [vmem:[%s1880] ss:$16 sm:%s1881]
  %s1883 = scalar_lea.vmem %s0, 646
  %s1884 = smov 12
  %v1885 = vld [vmem:[%s1883] ss:$16 sm:%s1884]
  %vm1886 = vcmask 1043458
  %v1887 = vsel %vm1886, %v1885, %v1882
  %s1888 = scalar_lea.vmem %s0, 646
  %s1889 = smov 48
  %v1890 = vld [vmem:[%s1888] ss:$16 sm:%s1889]
  %vm1891 = vcmask 1045508
  %v1892 = vsel %vm1891, %v1890, %v1887
  %s1893 = scalar_lea.vmem %s0, 646
  %s1894 = smov 192
  %v1895 = vld [vmem:[%s1893] ss:$16 sm:%s1894]
  %vm1896 = vcmask 1047558
  %v1897 = vsel %vm1896, %v1895, %v1892
  %1898 = vrot.lane.b32.xlu0 %v1897, 24
  %v1899 = vpop.permute.xlu0 %1898
  %vm1900 = vcmask 228544
  %s1901 = scalar_lea.vmem %s1, 40
  %1902 = vst.msk [vmem:[%s1901] sm:$0xff] %vm1900, %v1899
  %s1903 = scalar_lea.vmem %s0, 262
  %s1904 = smov 3
  %v1905 = vld [vmem:[%s1903] ss:$16 sm:%s1904]
  %s1906 = scalar_lea.vmem %s0, 262
  %s1907 = smov 12
  %v1908 = vld [vmem:[%s1906] ss:$16 sm:%s1907]
  %vm1909 = vcmask 1043458
  %v1910 = vsel %vm1909, %v1908, %v1905
  %s1911 = scalar_lea.vmem %s0, 262
  %s1912 = smov 48
  %v1913 = vld [vmem:[%s1911] ss:$16 sm:%s1912]
  %vm1914 = vcmask 1045508
  %v1915 = vsel %vm1914, %v1913, %v1910
  %s1916 = scalar_lea.vmem %s0, 262
  %s1917 = smov 192
  %v1918 = vld [vmem:[%s1916] ss:$16 sm:%s1917]
  %vm1919 = vcmask 1047558
  %v1920 = vsel %vm1919, %v1918, %v1915
  %1921 = vrot.lane.b32.xlu0 %v1920, 24
  %v1922 = vpop.permute.xlu0 %1921
  %vm1923 = vcmask 228544
  %s1924 = scalar_lea.vmem %s1, 16
  %1925 = vst.msk [vmem:[%s1924] sm:$0xff] %vm1923, %v1922
  %s1926 = scalar_lea.vmem %s0, 774
  %s1927 = smov 3
  %v1928 = vld [vmem:[%s1926] ss:$16 sm:%s1927]
  %s1929 = scalar_lea.vmem %s0, 774
  %s1930 = smov 12
  %v1931 = vld [vmem:[%s1929] ss:$16 sm:%s1930]
  %vm1932 = vcmask 1043458
  %v1933 = vsel %vm1932, %v1931, %v1928
  %s1934 = scalar_lea.vmem %s0, 774
  %s1935 = smov 48
  %v1936 = vld [vmem:[%s1934] ss:$16 sm:%s1935]
  %vm1937 = vcmask 1045508
  %v1938 = vsel %vm1937, %v1936, %v1933
  %s1939 = scalar_lea.vmem %s0, 774
  %s1940 = smov 192
  %v1941 = vld [vmem:[%s1939] ss:$16 sm:%s1940]
  %vm1942 = vcmask 1047558
  %v1943 = vsel %vm1942, %v1941, %v1938
  %1944 = vrot.lane.b32.xlu0 %v1943, 24
  %v1945 = vpop.permute.xlu0 %1944
  %vm1946 = vcmask 228544
  %s1947 = scalar_lea.vmem %s1, 48
  %1948 = vst.msk [vmem:[%s1947] sm:$0xff] %vm1946, %v1945
  %s1949 = scalar_lea.vmem %s0, 390
  %s1950 = smov 3
  %v1951 = vld [vmem:[%s1949] ss:$16 sm:%s1950]
  %s1952 = scalar_lea.vmem %s0, 390
  %s1953 = smov 12
  %v1954 = vld [vmem:[%s1952] ss:$16 sm:%s1953]
  %vm1955 = vcmask 1043458
  %v1956 = vsel %vm1955, %v1954, %v1951
  %s1957 = scalar_lea.vmem %s0, 390
  %s1958 = smov 48
  %v1959 = vld [vmem:[%s1957] ss:$16 sm:%s1958]
  %vm1960 = vcmask 1045508
  %v1961 = vsel %vm1960, %v1959, %v1956
  %s1962 = scalar_lea.vmem %s0, 390
  %s1963 = smov 192
  %v1964 = vld [vmem:[%s1962] ss:$16 sm:%s1963]
  %vm1965 = vcmask 1047558
  %v1966 = vsel %vm1965, %v1964, %v1961
  %1967 = vrot.lane.b32.xlu0 %v1966, 24
  %v1968 = vpop.permute.xlu0 %1967
  %vm1969 = vcmask 228544
  %s1970 = scalar_lea.vmem %s1, 24
  %1971 = vst.msk [vmem:[%s1970] sm:$0xff] %vm1969, %v1968
  %s1972 = scalar_lea.vmem %s0, 902
  %s1973 = smov 3
  %v1974 = vld [vmem:[%s1972] ss:$16 sm:%s1973]
  %s1975 = scalar_lea.vmem %s0, 902
  %s1976 = smov 12
  %v1977 = vld [vmem:[%s1975] ss:$16 sm:%s1976]
  %vm1978 = vcmask 1043458
  %v1979 = vsel %vm1978, %v1977, %v1974
  %s1980 = scalar_lea.vmem %s0, 902
  %s1981 = smov 48
  %v1982 = vld [vmem:[%s1980] ss:$16 sm:%s1981]
  %vm1983 = vcmask 1045508
  %v1984 = vsel %vm1983, %v1982, %v1979
  %s1985 = scalar_lea.vmem %s0, 902
  %s1986 = smov 192
  %v1987 = vld [vmem:[%s1985] ss:$16 sm:%s1986]
  %vm1988 = vcmask 1047558
  %v1989 = vsel %vm1988, %v1987, %v1984
  %1990 = vrot.lane.b32.xlu0 %v1989, 24
  %v1991 = vpop.permute.xlu0 %1990
  %vm1992 = vcmask 228544
  %s1993 = scalar_lea.vmem %s1, 56
  %1994 = vst.msk [vmem:[%s1993] sm:$0xff] %vm1992, %v1991
  %s1995 = scalar_lea.vmem %s0, 5
  %s1996 = smov 3
  %v1997 = vld [vmem:[%s1995] ss:$16 sm:%s1996]
  %s1998 = scalar_lea.vmem %s0, 5
  %s1999 = smov 12
  %v2000 = vld [vmem:[%s1998] ss:$16 sm:%s1999]
  %vm2001 = vcmask 1043458
  %v2002 = vsel %vm2001, %v2000, %v1997
  %s2003 = scalar_lea.vmem %s0, 5
  %s2004 = smov 48
  %v2005 = vld [vmem:[%s2003] ss:$16 sm:%s2004]
  %vm2006 = vcmask 1045508
  %v2007 = vsel %vm2006, %v2005, %v2002
  %s2008 = scalar_lea.vmem %s0, 5
  %s2009 = smov 192
  %v2010 = vld [vmem:[%s2008] ss:$16 sm:%s2009]
  %vm2011 = vcmask 1047558
  %v2012 = vsel %vm2011, %v2010, %v2007
  %2013 = vrot.lane.b32.xlu0 %v2012, 20
  %v2014 = vpop.permute.xlu0 %2013
  %vm2015 = vcmask 195744
  %2016 = vst.msk [vmem:[%s1] sm:$0xff] %vm2015, %v2014
  %s2017 = scalar_lea.vmem %s0, 517
  %s2018 = smov 3
  %v2019 = vld [vmem:[%s2017] ss:$16 sm:%s2018]
  %s2020 = scalar_lea.vmem %s0, 517
  %s2021 = smov 12
  %v2022 = vld [vmem:[%s2020] ss:$16 sm:%s2021]
  %vm2023 = vcmask 1043458
  %v2024 = vsel %vm2023, %v2022, %v2019
  %s2025 = scalar_lea.vmem %s0, 517
  %s2026 = smov 48
  %v2027 = vld [vmem:[%s2025] ss:$16 sm:%s2026]
  %vm2028 = vcmask 1045508
  %v2029 = vsel %vm2028, %v2027, %v2024
  %s2030 = scalar_lea.vmem %s0, 517
  %s2031 = smov 192
  %v2032 = vld [vmem:[%s2030] ss:$16 sm:%s2031]
  %vm2033 = vcmask 1047558
  %v2034 = vsel %vm2033, %v2032, %v2029
  %2035 = vrot.lane.b32.xlu0 %v2034, 20
  %v2036 = vpop.permute.xlu0 %2035
  %vm2037 = vcmask 195744
  %s2038 = scalar_lea.vmem %s1, 32
  %2039 = vst.msk [vmem:[%s2038] sm:$0xff] %vm2037, %v2036
  %s2040 = scalar_lea.vmem %s0, 133
  %s2041 = smov 3
  %v2042 = vld [vmem:[%s2040] ss:$16 sm:%s2041]
  %s2043 = scalar_lea.vmem %s0, 133
  %s2044 = smov 12
  %v2045 = vld [vmem:[%s2043] ss:$16 sm:%s2044]
  %vm2046 = vcmask 1043458
  %v2047 = vsel %vm2046, %v2045, %v2042
  %s2048 = scalar_lea.vmem %s0, 133
  %s2049 = smov 48
  %v2050 = vld [vmem:[%s2048] ss:$16 sm:%s2049]
  %vm2051 = vcmask 1045508
  %v2052 = vsel %vm2051, %v2050, %v2047
  %s2053 = scalar_lea.vmem %s0, 133
  %s2054 = smov 192
  %v2055 = vld [vmem:[%s2053] ss:$16 sm:%s2054]
  %vm2056 = vcmask 1047558
  %v2057 = vsel %vm2056, %v2055, %v2052
  %2058 = vrot.lane.b32.xlu0 %v2057, 20
  %v2059 = vpop.permute.xlu0 %2058
  %vm2060 = vcmask 195744
  %s2061 = scalar_lea.vmem %s1, 8
  %2062 = vst.msk [vmem:[%s2061] sm:$0xff] %vm2060, %v2059
  %s2063 = scalar_lea.vmem %s0, 645
  %s2064 = smov 3
  %v2065 = vld [vmem:[%s2063] ss:$16 sm:%s2064]
  %s2066 = scalar_lea.vmem %s0, 645
  %s2067 = smov 12
  %v2068 = vld [vmem:[%s2066] ss:$16 sm:%s2067]
  %vm2069 = vcmask 1043458
  %v2070 = vsel %vm2069, %v2068, %v2065
  %s2071 = scalar_lea.vmem %s0, 645
  %s2072 = smov 48
  %v2073 = vld [vmem:[%s2071] ss:$16 sm:%s2072]
  %vm2074 = vcmask 1045508
  %v2075 = vsel %vm2074, %v2073, %v2070
  %s2076 = scalar_lea.vmem %s0, 645
  %s2077 = smov 192
  %v2078 = vld [vmem:[%s2076] ss:$16 sm:%s2077]
  %vm2079 = vcmask 1047558
  %v2080 = vsel %vm2079, %v2078, %v2075
  %2081 = vrot.lane.b32.xlu0 %v2080, 20
  %v2082 = vpop.permute.xlu0 %2081
  %vm2083 = vcmask 195744
  %s2084 = scalar_lea.vmem %s1, 40
  %2085 = vst.msk [vmem:[%s2084] sm:$0xff] %vm2083, %v2082
  %s2086 = scalar_lea.vmem %s0, 261
  %s2087 = smov 3
  %v2088 = vld [vmem:[%s2086] ss:$16 sm:%s2087]
  %s2089 = scalar_lea.vmem %s0, 261
  %s2090 = smov 12
  %v2091 = vld [vmem:[%s2089] ss:$16 sm:%s2090]
  %vm2092 = vcmask 1043458
  %v2093 = vsel %vm2092, %v2091, %v2088
  %s2094 = scalar_lea.vmem %s0, 261
  %s2095 = smov 48
  %v2096 = vld [vmem:[%s2094] ss:$16 sm:%s2095]
  %vm2097 = vcmask 1045508
  %v2098 = vsel %vm2097, %v2096, %v2093
  %s2099 = scalar_lea.vmem %s0, 261
  %s2100 = smov 192
  %v2101 = vld [vmem:[%s2099] ss:$16 sm:%s2100]
  %vm2102 = vcmask 1047558
  %v2103 = vsel %vm2102, %v2101, %v2098
  %2104 = vrot.lane.b32.xlu0 %v2103, 20
  %v2105 = vpop.permute.xlu0 %2104
  %vm2106 = vcmask 195744
  %s2107 = scalar_lea.vmem %s1, 16
  %2108 = vst.msk [vmem:[%s2107] sm:$0xff] %vm2106, %v2105
  %s2109 = scalar_lea.vmem %s0, 773
  %s2110 = smov 3
  %v2111 = vld [vmem:[%s2109] ss:$16 sm:%s2110]
  %s2112 = scalar_lea.vmem %s0, 773
  %s2113 = smov 12
  %v2114 = vld [vmem:[%s2112] ss:$16 sm:%s2113]
  %vm2115 = vcmask 1043458
  %v2116 = vsel %vm2115, %v2114, %v2111
  %s2117 = scalar_lea.vmem %s0, 773
  %s2118 = smov 48
  %v2119 = vld [vmem:[%s2117] ss:$16 sm:%s2118]
  %vm2120 = vcmask 1045508
  %v2121 = vsel %vm2120, %v2119, %v2116
  %s2122 = scalar_lea.vmem %s0, 773
  %s2123 = smov 192
  %v2124 = vld [vmem:[%s2122] ss:$16 sm:%s2123]
  %vm2125 = vcmask 1047558
  %v2126 = vsel %vm2125, %v2124, %v2121
  %2127 = vrot.lane.b32.xlu0 %v2126, 20
  %v2128 = vpop.permute.xlu0 %2127
  %vm2129 = vcmask 195744
  %s2130 = scalar_lea.vmem %s1, 48
  %2131 = vst.msk [vmem:[%s2130] sm:$0xff] %vm2129, %v2128
  %s2132 = scalar_lea.vmem %s0, 389
  %s2133 = smov 3
  %v2134 = vld [vmem:[%s2132] ss:$16 sm:%s2133]
  %s2135 = scalar_lea.vmem %s0, 389
  %s2136 = smov 12
  %v2137 = vld [vmem:[%s2135] ss:$16 sm:%s2136]
  %vm2138 = vcmask 1043458
  %v2139 = vsel %vm2138, %v2137, %v2134
  %s2140 = scalar_lea.vmem %s0, 389
  %s2141 = smov 48
  %v2142 = vld [vmem:[%s2140] ss:$16 sm:%s2141]
  %vm2143 = vcmask 1045508
  %v2144 = vsel %vm2143, %v2142, %v2139
  %s2145 = scalar_lea.vmem %s0, 389
  %s2146 = smov 192
  %v2147 = vld [vmem:[%s2145] ss:$16 sm:%s2146]
  %vm2148 = vcmask 1047558
  %v2149 = vsel %vm2148, %v2147, %v2144
  %2150 = vrot.lane.b32.xlu0 %v2149, 20
  %v2151 = vpop.permute.xlu0 %2150
  %vm2152 = vcmask 195744
  %s2153 = scalar_lea.vmem %s1, 24
  %2154 = vst.msk [vmem:[%s2153] sm:$0xff] %vm2152, %v2151
  %s2155 = scalar_lea.vmem %s0, 901
  %s2156 = smov 3
  %v2157 = vld [vmem:[%s2155] ss:$16 sm:%s2156]
  %s2158 = scalar_lea.vmem %s0, 901
  %s2159 = smov 12
  %v2160 = vld [vmem:[%s2158] ss:$16 sm:%s2159]
  %vm2161 = vcmask 1043458
  %v2162 = vsel %vm2161, %v2160, %v2157
  %s2163 = scalar_lea.vmem %s0, 901
  %s2164 = smov 48
  %v2165 = vld [vmem:[%s2163] ss:$16 sm:%s2164]
  %vm2166 = vcmask 1045508
  %v2167 = vsel %vm2166, %v2165, %v2162
  %s2168 = scalar_lea.vmem %s0, 901
  %s2169 = smov 192
  %v2170 = vld [vmem:[%s2168] ss:$16 sm:%s2169]
  %vm2171 = vcmask 1047558
  %v2172 = vsel %vm2171, %v2170, %v2167
  %2173 = vrot.lane.b32.xlu0 %v2172, 20
  %v2174 = vpop.permute.xlu0 %2173
  %vm2175 = vcmask 195744
  %s2176 = scalar_lea.vmem %s1, 56
  %2177 = vst.msk [vmem:[%s2176] sm:$0xff] %vm2175, %v2174
  %s2178 = scalar_lea.vmem %s0, 4
  %s2179 = smov 3
  %v2180 = vld [vmem:[%s2178] ss:$16 sm:%s2179]
  %s2181 = scalar_lea.vmem %s0, 4
  %s2182 = smov 12
  %v2183 = vld [vmem:[%s2181] ss:$16 sm:%s2182]
  %vm2184 = vcmask 1043458
  %v2185 = vsel %vm2184, %v2183, %v2180
  %s2186 = scalar_lea.vmem %s0, 4
  %s2187 = smov 48
  %v2188 = vld [vmem:[%s2186] ss:$16 sm:%s2187]
  %vm2189 = vcmask 1045508
  %v2190 = vsel %vm2189, %v2188, %v2185
  %s2191 = scalar_lea.vmem %s0, 4
  %s2192 = smov 192
  %v2193 = vld [vmem:[%s2191] ss:$16 sm:%s2192]
  %vm2194 = vcmask 1047558
  %v2195 = vsel %vm2194, %v2193, %v2190
  %2196 = vrot.lane.b32.xlu0 %v2195, 16
  %v2197 = vpop.permute.xlu0 %2196
  %vm2198 = vcmask 162944
  %2199 = vst.msk [vmem:[%s1] sm:$0xff] %vm2198, %v2197
  %s2200 = scalar_lea.vmem %s0, 516
  %s2201 = smov 3
  %v2202 = vld [vmem:[%s2200] ss:$16 sm:%s2201]
  %s2203 = scalar_lea.vmem %s0, 516
  %s2204 = smov 12
  %v2205 = vld [vmem:[%s2203] ss:$16 sm:%s2204]
  %vm2206 = vcmask 1043458
  %v2207 = vsel %vm2206, %v2205, %v2202
  %s2208 = scalar_lea.vmem %s0, 516
  %s2209 = smov 48
  %v2210 = vld [vmem:[%s2208] ss:$16 sm:%s2209]
  %vm2211 = vcmask 1045508
  %v2212 = vsel %vm2211, %v2210, %v2207
  %s2213 = scalar_lea.vmem %s0, 516
  %s2214 = smov 192
  %v2215 = vld [vmem:[%s2213] ss:$16 sm:%s2214]
  %vm2216 = vcmask 1047558
  %v2217 = vsel %vm2216, %v2215, %v2212
  %2218 = vrot.lane.b32.xlu0 %v2217, 16
  %v2219 = vpop.permute.xlu0 %2218
  %vm2220 = vcmask 162944
  %s2221 = scalar_lea.vmem %s1, 32
  %2222 = vst.msk [vmem:[%s2221] sm:$0xff] %vm2220, %v2219
  %s2223 = scalar_lea.vmem %s0, 132
  %s2224 = smov 3
  %v2225 = vld [vmem:[%s2223] ss:$16 sm:%s2224]
  %s2226 = scalar_lea.vmem %s0, 132
  %s2227 = smov 12
  %v2228 = vld [vmem:[%s2226] ss:$16 sm:%s2227]
  %vm2229 = vcmask 1043458
  %v2230 = vsel %vm2229, %v2228, %v2225
  %s2231 = scalar_lea.vmem %s0, 132
  %s2232 = smov 48
  %v2233 = vld [vmem:[%s2231] ss:$16 sm:%s2232]
  %vm2234 = vcmask 1045508
  %v2235 = vsel %vm2234, %v2233, %v2230
  %s2236 = scalar_lea.vmem %s0, 132
  %s2237 = smov 192
  %v2238 = vld [vmem:[%s2236] ss:$16 sm:%s2237]
  %vm2239 = vcmask 1047558
  %v2240 = vsel %vm2239, %v2238, %v2235
  %2241 = vrot.lane.b32.xlu0 %v2240, 16
  %v2242 = vpop.permute.xlu0 %2241
  %vm2243 = vcmask 162944
  %s2244 = scalar_lea.vmem %s1, 8
  %2245 = vst.msk [vmem:[%s2244] sm:$0xff] %vm2243, %v2242
  %s2246 = scalar_lea.vmem %s0, 644
  %s2247 = smov 3
  %v2248 = vld [vmem:[%s2246] ss:$16 sm:%s2247]
  %s2249 = scalar_lea.vmem %s0, 644
  %s2250 = smov 12
  %v2251 = vld [vmem:[%s2249] ss:$16 sm:%s2250]
  %vm2252 = vcmask 1043458
  %v2253 = vsel %vm2252, %v2251, %v2248
  %s2254 = scalar_lea.vmem %s0, 644
  %s2255 = smov 48
  %v2256 = vld [vmem:[%s2254] ss:$16 sm:%s2255]
  %vm2257 = vcmask 1045508
  %v2258 = vsel %vm2257, %v2256, %v2253
  %s2259 = scalar_lea.vmem %s0, 644
  %s2260 = smov 192
  %v2261 = vld [vmem:[%s2259] ss:$16 sm:%s2260]
  %vm2262 = vcmask 1047558
  %v2263 = vsel %vm2262, %v2261, %v2258
  %2264 = vrot.lane.b32.xlu0 %v2263, 16
  %v2265 = vpop.permute.xlu0 %2264
  %vm2266 = vcmask 162944
  %s2267 = scalar_lea.vmem %s1, 40
  %2268 = vst.msk [vmem:[%s2267] sm:$0xff] %vm2266, %v2265
  %s2269 = scalar_lea.vmem %s0, 260
  %s2270 = smov 3
  %v2271 = vld [vmem:[%s2269] ss:$16 sm:%s2270]
  %s2272 = scalar_lea.vmem %s0, 260
  %s2273 = smov 12
  %v2274 = vld [vmem:[%s2272] ss:$16 sm:%s2273]
  %vm2275 = vcmask 1043458
  %v2276 = vsel %vm2275, %v2274, %v2271
  %s2277 = scalar_lea.vmem %s0, 260
  %s2278 = smov 48
  %v2279 = vld [vmem:[%s2277] ss:$16 sm:%s2278]
  %vm2280 = vcmask 1045508
  %v2281 = vsel %vm2280, %v2279, %v2276
  %s2282 = scalar_lea.vmem %s0, 260
  %s2283 = smov 192
  %v2284 = vld [vmem:[%s2282] ss:$16 sm:%s2283]
  %vm2285 = vcmask 1047558
  %v2286 = vsel %vm2285, %v2284, %v2281
  %2287 = vrot.lane.b32.xlu0 %v2286, 16
  %v2288 = vpop.permute.xlu0 %2287
  %vm2289 = vcmask 162944
  %s2290 = scalar_lea.vmem %s1, 16
  %2291 = vst.msk [vmem:[%s2290] sm:$0xff] %vm2289, %v2288
  %s2292 = scalar_lea.vmem %s0, 772
  %s2293 = smov 3
  %v2294 = vld [vmem:[%s2292] ss:$16 sm:%s2293]
  %s2295 = scalar_lea.vmem %s0, 772
  %s2296 = smov 12
  %v2297 = vld [vmem:[%s2295] ss:$16 sm:%s2296]
  %vm2298 = vcmask 1043458
  %v2299 = vsel %vm2298, %v2297, %v2294
  %s2300 = scalar_lea.vmem %s0, 772
  %s2301 = smov 48
  %v2302 = vld [vmem:[%s2300] ss:$16 sm:%s2301]
  %vm2303 = vcmask 1045508
  %v2304 = vsel %vm2303, %v2302, %v2299
  %s2305 = scalar_lea.vmem %s0, 772
  %s2306 = smov 192
  %v2307 = vld [vmem:[%s2305] ss:$16 sm:%s2306]
  %vm2308 = vcmask 1047558
  %v2309 = vsel %vm2308, %v2307, %v2304
  %2310 = vrot.lane.b32.xlu0 %v2309, 16
  %v2311 = vpop.permute.xlu0 %2310
  %vm2312 = vcmask 162944
  %s2313 = scalar_lea.vmem %s1, 48
  %2314 = vst.msk [vmem:[%s2313] sm:$0xff] %vm2312, %v2311
  %s2315 = scalar_lea.vmem %s0, 388
  %s2316 = smov 3
  %v2317 = vld [vmem:[%s2315] ss:$16 sm:%s2316]
  %s2318 = scalar_lea.vmem %s0, 388
  %s2319 = smov 12
  %v2320 = vld [vmem:[%s2318] ss:$16 sm:%s2319]
  %vm2321 = vcmask 1043458
  %v2322 = vsel %vm2321, %v2320, %v2317
  %s2323 = scalar_lea.vmem %s0, 388
  %s2324 = smov 48
  %v2325 = vld [vmem:[%s2323] ss:$16 sm:%s2324]
  %vm2326 = vcmask 1045508
  %v2327 = vsel %vm2326, %v2325, %v2322
  %s2328 = scalar_lea.vmem %s0, 388
  %s2329 = smov 192
  %v2330 = vld [vmem:[%s2328] ss:$16 sm:%s2329]
  %vm2331 = vcmask 1047558
  %v2332 = vsel %vm2331, %v2330, %v2327
  %2333 = vrot.lane.b32.xlu0 %v2332, 16
  %v2334 = vpop.permute.xlu0 %2333
  %vm2335 = vcmask 162944
  %s2336 = scalar_lea.vmem %s1, 24
  %2337 = vst.msk [vmem:[%s2336] sm:$0xff] %vm2335, %v2334
  %s2338 = scalar_lea.vmem %s0, 900
  %s2339 = smov 3
  %v2340 = vld [vmem:[%s2338] ss:$16 sm:%s2339]
  %s2341 = scalar_lea.vmem %s0, 900
  %s2342 = smov 12
  %v2343 = vld [vmem:[%s2341] ss:$16 sm:%s2342]
  %vm2344 = vcmask 1043458
  %v2345 = vsel %vm2344, %v2343, %v2340
  %s2346 = scalar_lea.vmem %s0, 900
  %s2347 = smov 48
  %v2348 = vld [vmem:[%s2346] ss:$16 sm:%s2347]
  %vm2349 = vcmask 1045508
  %v2350 = vsel %vm2349, %v2348, %v2345
  %s2351 = scalar_lea.vmem %s0, 900
  %s2352 = smov 192
  %v2353 = vld [vmem:[%s2351] ss:$16 sm:%s2352]
  %vm2354 = vcmask 1047558
  %v2355 = vsel %vm2354, %v2353, %v2350
  %2356 = vrot.lane.b32.xlu0 %v2355, 16
  %v2357 = vpop.permute.xlu0 %2356
  %vm2358 = vcmask 162944
  %s2359 = scalar_lea.vmem %s1, 56
  %2360 = vst.msk [vmem:[%s2359] sm:$0xff] %vm2358, %v2357
  %s2361 = scalar_lea.vmem %s0, 3
  %s2362 = smov 3
  %v2363 = vld [vmem:[%s2361] ss:$16 sm:%s2362]
  %s2364 = scalar_lea.vmem %s0, 3
  %s2365 = smov 12
  %v2366 = vld [vmem:[%s2364] ss:$16 sm:%s2365]
  %vm2367 = vcmask 1043458
  %v2368 = vsel %vm2367, %v2366, %v2363
  %s2369 = scalar_lea.vmem %s0, 3
  %s2370 = smov 48
  %v2371 = vld [vmem:[%s2369] ss:$16 sm:%s2370]
  %vm2372 = vcmask 1045508
  %v2373 = vsel %vm2372, %v2371, %v2368
  %s2374 = scalar_lea.vmem %s0, 3
  %s2375 = smov 192
  %v2376 = vld [vmem:[%s2374] ss:$16 sm:%s2375]
  %vm2377 = vcmask 1047558
  %v2378 = vsel %vm2377, %v2376, %v2373
  %2379 = vrot.lane.b32.xlu0 %v2378, 12
  %v2380 = vpop.permute.xlu0 %2379
  %vm2381 = vcmask 130144
  %2382 = vst.msk [vmem:[%s1] sm:$0xff] %vm2381, %v2380
  %s2383 = scalar_lea.vmem %s0, 515
  %s2384 = smov 3
  %v2385 = vld [vmem:[%s2383] ss:$16 sm:%s2384]
  %s2386 = scalar_lea.vmem %s0, 515
  %s2387 = smov 12
  %v2388 = vld [vmem:[%s2386] ss:$16 sm:%s2387]
  %vm2389 = vcmask 1043458
  %v2390 = vsel %vm2389, %v2388, %v2385
  %s2391 = scalar_lea.vmem %s0, 515
  %s2392 = smov 48
  %v2393 = vld [vmem:[%s2391] ss:$16 sm:%s2392]
  %vm2394 = vcmask 1045508
  %v2395 = vsel %vm2394, %v2393, %v2390
  %s2396 = scalar_lea.vmem %s0, 515
  %s2397 = smov 192
  %v2398 = vld [vmem:[%s2396] ss:$16 sm:%s2397]
  %vm2399 = vcmask 1047558
  %v2400 = vsel %vm2399, %v2398, %v2395
  %2401 = vrot.lane.b32.xlu0 %v2400, 12
  %v2402 = vpop.permute.xlu0 %2401
  %vm2403 = vcmask 130144
  %s2404 = scalar_lea.vmem %s1, 32
  %2405 = vst.msk [vmem:[%s2404] sm:$0xff] %vm2403, %v2402
  %s2406 = scalar_lea.vmem %s0, 131
  %s2407 = smov 3
  %v2408 = vld [vmem:[%s2406] ss:$16 sm:%s2407]
  %s2409 = scalar_lea.vmem %s0, 131
  %s2410 = smov 12
  %v2411 = vld [vmem:[%s2409] ss:$16 sm:%s2410]
  %vm2412 = vcmask 1043458
  %v2413 = vsel %vm2412, %v2411, %v2408
  %s2414 = scalar_lea.vmem %s0, 131
  %s2415 = smov 48
  %v2416 = vld [vmem:[%s2414] ss:$16 sm:%s2415]
  %vm2417 = vcmask 1045508
  %v2418 = vsel %vm2417, %v2416, %v2413
  %s2419 = scalar_lea.vmem %s0, 131
  %s2420 = smov 192
  %v2421 = vld [vmem:[%s2419] ss:$16 sm:%s2420]
  %vm2422 = vcmask 1047558
  %v2423 = vsel %vm2422, %v2421, %v2418
  %2424 = vrot.lane.b32.xlu0 %v2423, 12
  %v2425 = vpop.permute.xlu0 %2424
  %vm2426 = vcmask 130144
  %s2427 = scalar_lea.vmem %s1, 8
  %2428 = vst.msk [vmem:[%s2427] sm:$0xff] %vm2426, %v2425
  %s2429 = scalar_lea.vmem %s0, 643
  %s2430 = smov 3
  %v2431 = vld [vmem:[%s2429] ss:$16 sm:%s2430]
  %s2432 = scalar_lea.vmem %s0, 643
  %s2433 = smov 12
  %v2434 = vld [vmem:[%s2432] ss:$16 sm:%s2433]
  %vm2435 = vcmask 1043458
  %v2436 = vsel %vm2435, %v2434, %v2431
  %s2437 = scalar_lea.vmem %s0, 643
  %s2438 = smov 48
  %v2439 = vld [vmem:[%s2437] ss:$16 sm:%s2438]
  %vm2440 = vcmask 1045508
  %v2441 = vsel %vm2440, %v2439, %v2436
  %s2442 = scalar_lea.vmem %s0, 643
  %s2443 = smov 192
  %v2444 = vld [vmem:[%s2442] ss:$16 sm:%s2443]
  %vm2445 = vcmask 1047558
  %v2446 = vsel %vm2445, %v2444, %v2441
  %2447 = vrot.lane.b32.xlu0 %v2446, 12
  %v2448 = vpop.permute.xlu0 %2447
  %vm2449 = vcmask 130144
  %s2450 = scalar_lea.vmem %s1, 40
  %2451 = vst.msk [vmem:[%s2450] sm:$0xff] %vm2449, %v2448
  %s2452 = scalar_lea.vmem %s0, 259
  %s2453 = smov 3
  %v2454 = vld [vmem:[%s2452] ss:$16 sm:%s2453]
  %s2455 = scalar_lea.vmem %s0, 259
  %s2456 = smov 12
  %v2457 = vld [vmem:[%s2455] ss:$16 sm:%s2456]
  %vm2458 = vcmask 1043458
  %v2459 = vsel %vm2458, %v2457, %v2454
  %s2460 = scalar_lea.vmem %s0, 259
  %s2461 = smov 48
  %v2462 = vld [vmem:[%s2460] ss:$16 sm:%s2461]
  %vm2463 = vcmask 1045508
  %v2464 = vsel %vm2463, %v2462, %v2459
  %s2465 = scalar_lea.vmem %s0, 259
  %s2466 = smov 192
  %v2467 = vld [vmem:[%s2465] ss:$16 sm:%s2466]
  %vm2468 = vcmask 1047558
  %v2469 = vsel %vm2468, %v2467, %v2464
  %2470 = vrot.lane.b32.xlu0 %v2469, 12
  %v2471 = vpop.permute.xlu0 %2470
  %vm2472 = vcmask 130144
  %s2473 = scalar_lea.vmem %s1, 16
  %2474 = vst.msk [vmem:[%s2473] sm:$0xff] %vm2472, %v2471
  %s2475 = scalar_lea.vmem %s0, 771
  %s2476 = smov 3
  %v2477 = vld [vmem:[%s2475] ss:$16 sm:%s2476]
  %s2478 = scalar_lea.vmem %s0, 771
  %s2479 = smov 12
  %v2480 = vld [vmem:[%s2478] ss:$16 sm:%s2479]
  %vm2481 = vcmask 1043458
  %v2482 = vsel %vm2481, %v2480, %v2477
  %s2483 = scalar_lea.vmem %s0, 771
  %s2484 = smov 48
  %v2485 = vld [vmem:[%s2483] ss:$16 sm:%s2484]
  %vm2486 = vcmask 1045508
  %v2487 = vsel %vm2486, %v2485, %v2482
  %s2488 = scalar_lea.vmem %s0, 771
  %s2489 = smov 192
  %v2490 = vld [vmem:[%s2488] ss:$16 sm:%s2489]
  %vm2491 = vcmask 1047558
  %v2492 = vsel %vm2491, %v2490, %v2487
  %2493 = vrot.lane.b32.xlu0 %v2492, 12
  %v2494 = vpop.permute.xlu0 %2493
  %vm2495 = vcmask 130144
  %s2496 = scalar_lea.vmem %s1, 48
  %2497 = vst.msk [vmem:[%s2496] sm:$0xff] %vm2495, %v2494
  %s2498 = scalar_lea.vmem %s0, 387
  %s2499 = smov 3
  %v2500 = vld [vmem:[%s2498] ss:$16 sm:%s2499]
  %s2501 = scalar_lea.vmem %s0, 387
  %s2502 = smov 12
  %v2503 = vld [vmem:[%s2501] ss:$16 sm:%s2502]
  %vm2504 = vcmask 1043458
  %v2505 = vsel %vm2504, %v2503, %v2500
  %s2506 = scalar_lea.vmem %s0, 387
  %s2507 = smov 48
  %v2508 = vld [vmem:[%s2506] ss:$16 sm:%s2507]
  %vm2509 = vcmask 1045508
  %v2510 = vsel %vm2509, %v2508, %v2505
  %s2511 = scalar_lea.vmem %s0, 387
  %s2512 = smov 192
  %v2513 = vld [vmem:[%s2511] ss:$16 sm:%s2512]
  %vm2514 = vcmask 1047558
  %v2515 = vsel %vm2514, %v2513, %v2510
  %2516 = vrot.lane.b32.xlu0 %v2515, 12
  %v2517 = vpop.permute.xlu0 %2516
  %vm2518 = vcmask 130144
  %s2519 = scalar_lea.vmem %s1, 24
  %2520 = vst.msk [vmem:[%s2519] sm:$0xff] %vm2518, %v2517
  %s2521 = scalar_lea.vmem %s0, 899
  %s2522 = smov 3
  %v2523 = vld [vmem:[%s2521] ss:$16 sm:%s2522]
  %s2524 = scalar_lea.vmem %s0, 899
  %s2525 = smov 12
  %v2526 = vld [vmem:[%s2524] ss:$16 sm:%s2525]
  %vm2527 = vcmask 1043458
  %v2528 = vsel %vm2527, %v2526, %v2523
  %s2529 = scalar_lea.vmem %s0, 899
  %s2530 = smov 48
  %v2531 = vld [vmem:[%s2529] ss:$16 sm:%s2530]
  %vm2532 = vcmask 1045508
  %v2533 = vsel %vm2532, %v2531, %v2528
  %s2534 = scalar_lea.vmem %s0, 899
  %s2535 = smov 192
  %v2536 = vld [vmem:[%s2534] ss:$16 sm:%s2535]
  %vm2537 = vcmask 1047558
  %v2538 = vsel %vm2537, %v2536, %v2533
  %2539 = vrot.lane.b32.xlu0 %v2538, 12
  %v2540 = vpop.permute.xlu0 %2539
  %vm2541 = vcmask 130144
  %s2542 = scalar_lea.vmem %s1, 56
  %2543 = vst.msk [vmem:[%s2542] sm:$0xff] %vm2541, %v2540
  %s2544 = scalar_lea.vmem %s0, 2
  %s2545 = smov 3
  %v2546 = vld [vmem:[%s2544] ss:$16 sm:%s2545]
  %s2547 = scalar_lea.vmem %s0, 2
  %s2548 = smov 12
  %v2549 = vld [vmem:[%s2547] ss:$16 sm:%s2548]
  %vm2550 = vcmask 1043458
  %v2551 = vsel %vm2550, %v2549, %v2546
  %s2552 = scalar_lea.vmem %s0, 2
  %s2553 = smov 48
  %v2554 = vld [vmem:[%s2552] ss:$16 sm:%s2553]
  %vm2555 = vcmask 1045508
  %v2556 = vsel %vm2555, %v2554, %v2551
  %s2557 = scalar_lea.vmem %s0, 2
  %s2558 = smov 192
  %v2559 = vld [vmem:[%s2557] ss:$16 sm:%s2558]
  %vm2560 = vcmask 1047558
  %v2561 = vsel %vm2560, %v2559, %v2556
  %2562 = vrot.lane.b32.xlu0 %v2561, 8
  %v2563 = vpop.permute.xlu0 %2562
  %vm2564 = vcmask 97344
  %2565 = vst.msk [vmem:[%s1] sm:$0xff] %vm2564, %v2563
  %s2566 = scalar_lea.vmem %s0, 514
  %s2567 = smov 3
  %v2568 = vld [vmem:[%s2566] ss:$16 sm:%s2567]
  %s2569 = scalar_lea.vmem %s0, 514
  %s2570 = smov 12
  %v2571 = vld [vmem:[%s2569] ss:$16 sm:%s2570]
  %vm2572 = vcmask 1043458
  %v2573 = vsel %vm2572, %v2571, %v2568
  %s2574 = scalar_lea.vmem %s0, 514
  %s2575 = smov 48
  %v2576 = vld [vmem:[%s2574] ss:$16 sm:%s2575]
  %vm2577 = vcmask 1045508
  %v2578 = vsel %vm2577, %v2576, %v2573
  %s2579 = scalar_lea.vmem %s0, 514
  %s2580 = smov 192
  %v2581 = vld [vmem:[%s2579] ss:$16 sm:%s2580]
  %vm2582 = vcmask 1047558
  %v2583 = vsel %vm2582, %v2581, %v2578
  %2584 = vrot.lane.b32.xlu0 %v2583, 8
  %v2585 = vpop.permute.xlu0 %2584
  %vm2586 = vcmask 97344
  %s2587 = scalar_lea.vmem %s1, 32
  %2588 = vst.msk [vmem:[%s2587] sm:$0xff] %vm2586, %v2585
  %s2589 = scalar_lea.vmem %s0, 130
  %s2590 = smov 3
  %v2591 = vld [vmem:[%s2589] ss:$16 sm:%s2590]
  %s2592 = scalar_lea.vmem %s0, 130
  %s2593 = smov 12
  %v2594 = vld [vmem:[%s2592] ss:$16 sm:%s2593]
  %vm2595 = vcmask 1043458
  %v2596 = vsel %vm2595, %v2594, %v2591
  %s2597 = scalar_lea.vmem %s0, 130
  %s2598 = smov 48
  %v2599 = vld [vmem:[%s2597] ss:$16 sm:%s2598]
  %vm2600 = vcmask 1045508
  %v2601 = vsel %vm2600, %v2599, %v2596
  %s2602 = scalar_lea.vmem %s0, 130
  %s2603 = smov 192
  %v2604 = vld [vmem:[%s2602] ss:$16 sm:%s2603]
  %vm2605 = vcmask 1047558
  %v2606 = vsel %vm2605, %v2604, %v2601
  %2607 = vrot.lane.b32.xlu0 %v2606, 8
  %v2608 = vpop.permute.xlu0 %2607
  %vm2609 = vcmask 97344
  %s2610 = scalar_lea.vmem %s1, 8
  %2611 = vst.msk [vmem:[%s2610] sm:$0xff] %vm2609, %v2608
  %s2612 = scalar_lea.vmem %s0, 642
  %s2613 = smov 3
  %v2614 = vld [vmem:[%s2612] ss:$16 sm:%s2613]
  %s2615 = scalar_lea.vmem %s0, 642
  %s2616 = smov 12
  %v2617 = vld [vmem:[%s2615] ss:$16 sm:%s2616]
  %vm2618 = vcmask 1043458
  %v2619 = vsel %vm2618, %v2617, %v2614
  %s2620 = scalar_lea.vmem %s0, 642
  %s2621 = smov 48
  %v2622 = vld [vmem:[%s2620] ss:$16 sm:%s2621]
  %vm2623 = vcmask 1045508
  %v2624 = vsel %vm2623, %v2622, %v2619
  %s2625 = scalar_lea.vmem %s0, 642
  %s2626 = smov 192
  %v2627 = vld [vmem:[%s2625] ss:$16 sm:%s2626]
  %vm2628 = vcmask 1047558
  %v2629 = vsel %vm2628, %v2627, %v2624
  %2630 = vrot.lane.b32.xlu0 %v2629, 8
  %v2631 = vpop.permute.xlu0 %2630
  %vm2632 = vcmask 97344
  %s2633 = scalar_lea.vmem %s1, 40
  %2634 = vst.msk [vmem:[%s2633] sm:$0xff] %vm2632, %v2631
  %s2635 = scalar_lea.vmem %s0, 258
  %s2636 = smov 3
  %v2637 = vld [vmem:[%s2635] ss:$16 sm:%s2636]
  %s2638 = scalar_lea.vmem %s0, 258
  %s2639 = smov 12
  %v2640 = vld [vmem:[%s2638] ss:$16 sm:%s2639]
  %vm2641 = vcmask 1043458
  %v2642 = vsel %vm2641, %v2640, %v2637
  %s2643 = scalar_lea.vmem %s0, 258
  %s2644 = smov 48
  %v2645 = vld [vmem:[%s2643] ss:$16 sm:%s2644]
  %vm2646 = vcmask 1045508
  %v2647 = vsel %vm2646, %v2645, %v2642
  %s2648 = scalar_lea.vmem %s0, 258
  %s2649 = smov 192
  %v2650 = vld [vmem:[%s2648] ss:$16 sm:%s2649]
  %vm2651 = vcmask 1047558
  %v2652 = vsel %vm2651, %v2650, %v2647
  %2653 = vrot.lane.b32.xlu0 %v2652, 8
  %v2654 = vpop.permute.xlu0 %2653
  %vm2655 = vcmask 97344
  %s2656 = scalar_lea.vmem %s1, 16
  %2657 = vst.msk [vmem:[%s2656] sm:$0xff] %vm2655, %v2654
  %s2658 = scalar_lea.vmem %s0, 770
  %s2659 = smov 3
  %v2660 = vld [vmem:[%s2658] ss:$16 sm:%s2659]
  %s2661 = scalar_lea.vmem %s0, 770
  %s2662 = smov 12
  %v2663 = vld [vmem:[%s2661] ss:$16 sm:%s2662]
  %vm2664 = vcmask 1043458
  %v2665 = vsel %vm2664, %v2663, %v2660
  %s2666 = scalar_lea.vmem %s0, 770
  %s2667 = smov 48
  %v2668 = vld [vmem:[%s2666] ss:$16 sm:%s2667]
  %vm2669 = vcmask 1045508
  %v2670 = vsel %vm2669, %v2668, %v2665
  %s2671 = scalar_lea.vmem %s0, 770
  %s2672 = smov 192
  %v2673 = vld [vmem:[%s2671] ss:$16 sm:%s2672]
  %vm2674 = vcmask 1047558
  %v2675 = vsel %vm2674, %v2673, %v2670
  %2676 = vrot.lane.b32.xlu0 %v2675, 8
  %v2677 = vpop.permute.xlu0 %2676
  %vm2678 = vcmask 97344
  %s2679 = scalar_lea.vmem %s1, 48
  %2680 = vst.msk [vmem:[%s2679] sm:$0xff] %vm2678, %v2677
  %s2681 = scalar_lea.vmem %s0, 386
  %s2682 = smov 3
  %v2683 = vld [vmem:[%s2681] ss:$16 sm:%s2682]
  %s2684 = scalar_lea.vmem %s0, 386
  %s2685 = smov 12
  %v2686 = vld [vmem:[%s2684] ss:$16 sm:%s2685]
  %vm2687 = vcmask 1043458
  %v2688 = vsel %vm2687, %v2686, %v2683
  %s2689 = scalar_lea.vmem %s0, 386
  %s2690 = smov 48
  %v2691 = vld [vmem:[%s2689] ss:$16 sm:%s2690]
  %vm2692 = vcmask 1045508
  %v2693 = vsel %vm2692, %v2691, %v2688
  %s2694 = scalar_lea.vmem %s0, 386
  %s2695 = smov 192
  %v2696 = vld [vmem:[%s2694] ss:$16 sm:%s2695]
  %vm2697 = vcmask 1047558
  %v2698 = vsel %vm2697, %v2696, %v2693
  %2699 = vrot.lane.b32.xlu0 %v2698, 8
  %v2700 = vpop.permute.xlu0 %2699
  %vm2701 = vcmask 97344
  %s2702 = scalar_lea.vmem %s1, 24
  %2703 = vst.msk [vmem:[%s2702] sm:$0xff] %vm2701, %v2700
  %s2704 = scalar_lea.vmem %s0, 898
  %s2705 = smov 3
  %v2706 = vld [vmem:[%s2704] ss:$16 sm:%s2705]
  %s2707 = scalar_lea.vmem %s0, 898
  %s2708 = smov 12
  %v2709 = vld [vmem:[%s2707] ss:$16 sm:%s2708]
  %vm2710 = vcmask 1043458
  %v2711 = vsel %vm2710, %v2709, %v2706
  %s2712 = scalar_lea.vmem %s0, 898
  %s2713 = smov 48
  %v2714 = vld [vmem:[%s2712] ss:$16 sm:%s2713]
  %vm2715 = vcmask 1045508
  %v2716 = vsel %vm2715, %v2714, %v2711
  %s2717 = scalar_lea.vmem %s0, 898
  %s2718 = smov 192
  %v2719 = vld [vmem:[%s2717] ss:$16 sm:%s2718]
  %vm2720 = vcmask 1047558
  %v2721 = vsel %vm2720, %v2719, %v2716
  %2722 = vrot.lane.b32.xlu0 %v2721, 8
  %v2723 = vpop.permute.xlu0 %2722
  %vm2724 = vcmask 97344
  %s2725 = scalar_lea.vmem %s1, 56
  %2726 = vst.msk [vmem:[%s2725] sm:$0xff] %vm2724, %v2723
  %s2727 = scalar_lea.vmem %s0, 1
  %s2728 = smov 3
  %v2729 = vld [vmem:[%s2727] ss:$16 sm:%s2728]
  %s2730 = scalar_lea.vmem %s0, 1
  %s2731 = smov 12
  %v2732 = vld [vmem:[%s2730] ss:$16 sm:%s2731]
  %vm2733 = vcmask 1043458
  %v2734 = vsel %vm2733, %v2732, %v2729
  %s2735 = scalar_lea.vmem %s0, 1
  %s2736 = smov 48
  %v2737 = vld [vmem:[%s2735] ss:$16 sm:%s2736]
  %vm2738 = vcmask 1045508
  %v2739 = vsel %vm2738, %v2737, %v2734
  %s2740 = scalar_lea.vmem %s0, 1
  %s2741 = smov 192
  %v2742 = vld [vmem:[%s2740] ss:$16 sm:%s2741]
  %vm2743 = vcmask 1047558
  %v2744 = vsel %vm2743, %v2742, %v2739
  %2745 = vrot.lane.b32.xlu0 %v2744, 4
  %v2746 = vpop.permute.xlu0 %2745
  %vm2747 = vcmask 64544
  %2748 = vst.msk [vmem:[%s1] sm:$0xff] %vm2747, %v2746
  %s2749 = scalar_lea.vmem %s0, 513
  %s2750 = smov 3
  %v2751 = vld [vmem:[%s2749] ss:$16 sm:%s2750]
  %s2752 = scalar_lea.vmem %s0, 513
  %s2753 = smov 12
  %v2754 = vld [vmem:[%s2752] ss:$16 sm:%s2753]
  %vm2755 = vcmask 1043458
  %v2756 = vsel %vm2755, %v2754, %v2751
  %s2757 = scalar_lea.vmem %s0, 513
  %s2758 = smov 48
  %v2759 = vld [vmem:[%s2757] ss:$16 sm:%s2758]
  %vm2760 = vcmask 1045508
  %v2761 = vsel %vm2760, %v2759, %v2756
  %s2762 = scalar_lea.vmem %s0, 513
  %s2763 = smov 192
  %v2764 = vld [vmem:[%s2762] ss:$16 sm:%s2763]
  %vm2765 = vcmask 1047558
  %v2766 = vsel %vm2765, %v2764, %v2761
  %2767 = vrot.lane.b32.xlu0 %v2766, 4
  %v2768 = vpop.permute.xlu0 %2767
  %vm2769 = vcmask 64544
  %s2770 = scalar_lea.vmem %s1, 32
  %2771 = vst.msk [vmem:[%s2770] sm:$0xff] %vm2769, %v2768
  %s2772 = scalar_lea.vmem %s0, 129
  %s2773 = smov 3
  %v2774 = vld [vmem:[%s2772] ss:$16 sm:%s2773]
  %s2775 = scalar_lea.vmem %s0, 129
  %s2776 = smov 12
  %v2777 = vld [vmem:[%s2775] ss:$16 sm:%s2776]
  %vm2778 = vcmask 1043458
  %v2779 = vsel %vm2778, %v2777, %v2774
  %s2780 = scalar_lea.vmem %s0, 129
  %s2781 = smov 48
  %v2782 = vld [vmem:[%s2780] ss:$16 sm:%s2781]
  %vm2783 = vcmask 1045508
  %v2784 = vsel %vm2783, %v2782, %v2779
  %s2785 = scalar_lea.vmem %s0, 129
  %s2786 = smov 192
  %v2787 = vld [vmem:[%s2785] ss:$16 sm:%s2786]
  %vm2788 = vcmask 1047558
  %v2789 = vsel %vm2788, %v2787, %v2784
  %2790 = vrot.lane.b32.xlu0 %v2789, 4
  %v2791 = vpop.permute.xlu0 %2790
  %vm2792 = vcmask 64544
  %s2793 = scalar_lea.vmem %s1, 8
  %2794 = vst.msk [vmem:[%s2793] sm:$0xff] %vm2792, %v2791
  %s2795 = scalar_lea.vmem %s0, 641
  %s2796 = smov 3
  %v2797 = vld [vmem:[%s2795] ss:$16 sm:%s2796]
  %s2798 = scalar_lea.vmem %s0, 641
  %s2799 = smov 12
  %v2800 = vld [vmem:[%s2798] ss:$16 sm:%s2799]
  %vm2801 = vcmask 1043458
  %v2802 = vsel %vm2801, %v2800, %v2797
  %s2803 = scalar_lea.vmem %s0, 641
  %s2804 = smov 48
  %v2805 = vld [vmem:[%s2803] ss:$16 sm:%s2804]
  %vm2806 = vcmask 1045508
  %v2807 = vsel %vm2806, %v2805, %v2802
  %s2808 = scalar_lea.vmem %s0, 641
  %s2809 = smov 192
  %v2810 = vld [vmem:[%s2808] ss:$16 sm:%s2809]
  %vm2811 = vcmask 1047558
  %v2812 = vsel %vm2811, %v2810, %v2807
  %2813 = vrot.lane.b32.xlu0 %v2812, 4
  %v2814 = vpop.permute.xlu0 %2813
  %vm2815 = vcmask 64544
  %s2816 = scalar_lea.vmem %s1, 40
  %2817 = vst.msk [vmem:[%s2816] sm:$0xff] %vm2815, %v2814
  %s2818 = scalar_lea.vmem %s0, 257
  %s2819 = smov 3
  %v2820 = vld [vmem:[%s2818] ss:$16 sm:%s2819]
  %s2821 = scalar_lea.vmem %s0, 257
  %s2822 = smov 12
  %v2823 = vld [vmem:[%s2821] ss:$16 sm:%s2822]
  %vm2824 = vcmask 1043458
  %v2825 = vsel %vm2824, %v2823, %v2820
  %s2826 = scalar_lea.vmem %s0, 257
  %s2827 = smov 48
  %v2828 = vld [vmem:[%s2826] ss:$16 sm:%s2827]
  %vm2829 = vcmask 1045508
  %v2830 = vsel %vm2829, %v2828, %v2825
  %s2831 = scalar_lea.vmem %s0, 257
  %s2832 = smov 192
  %v2833 = vld [vmem:[%s2831] ss:$16 sm:%s2832]
  %vm2834 = vcmask 1047558
  %v2835 = vsel %vm2834, %v2833, %v2830
  %2836 = vrot.lane.b32.xlu0 %v2835, 4
  %v2837 = vpop.permute.xlu0 %2836
  %vm2838 = vcmask 64544
  %s2839 = scalar_lea.vmem %s1, 16
  %2840 = vst.msk [vmem:[%s2839] sm:$0xff] %vm2838, %v2837
  %s2841 = scalar_lea.vmem %s0, 769
  %s2842 = smov 3
  %v2843 = vld [vmem:[%s2841] ss:$16 sm:%s2842]
  %s2844 = scalar_lea.vmem %s0, 769
  %s2845 = smov 12
  %v2846 = vld [vmem:[%s2844] ss:$16 sm:%s2845]
  %vm2847 = vcmask 1043458
  %v2848 = vsel %vm2847, %v2846, %v2843
  %s2849 = scalar_lea.vmem %s0, 769
  %s2850 = smov 48
  %v2851 = vld [vmem:[%s2849] ss:$16 sm:%s2850]
  %vm2852 = vcmask 1045508
  %v2853 = vsel %vm2852, %v2851, %v2848
  %s2854 = scalar_lea.vmem %s0, 769
  %s2855 = smov 192
  %v2856 = vld [vmem:[%s2854] ss:$16 sm:%s2855]
  %vm2857 = vcmask 1047558
  %v2858 = vsel %vm2857, %v2856, %v2853
  %2859 = vrot.lane.b32.xlu0 %v2858, 4
  %v2860 = vpop.permute.xlu0 %2859
  %vm2861 = vcmask 64544
  %s2862 = scalar_lea.vmem %s1, 48
  %2863 = vst.msk [vmem:[%s2862] sm:$0xff] %vm2861, %v2860
  %s2864 = scalar_lea.vmem %s0, 385
  %s2865 = smov 3
  %v2866 = vld [vmem:[%s2864] ss:$16 sm:%s2865]
  %s2867 = scalar_lea.vmem %s0, 385
  %s2868 = smov 12
  %v2869 = vld [vmem:[%s2867] ss:$16 sm:%s2868]
  %vm2870 = vcmask 1043458
  %v2871 = vsel %vm2870, %v2869, %v2866
  %s2872 = scalar_lea.vmem %s0, 385
  %s2873 = smov 48
  %v2874 = vld [vmem:[%s2872] ss:$16 sm:%s2873]
  %vm2875 = vcmask 1045508
  %v2876 = vsel %vm2875, %v2874, %v2871
  %s2877 = scalar_lea.vmem %s0, 385
  %s2878 = smov 192
  %v2879 = vld [vmem:[%s2877] ss:$16 sm:%s2878]
  %vm2880 = vcmask 1047558
  %v2881 = vsel %vm2880, %v2879, %v2876
  %2882 = vrot.lane.b32.xlu0 %v2881, 4
  %v2883 = vpop.permute.xlu0 %2882
  %vm2884 = vcmask 64544
  %s2885 = scalar_lea.vmem %s1, 24
  %2886 = vst.msk [vmem:[%s2885] sm:$0xff] %vm2884, %v2883
  %s2887 = scalar_lea.vmem %s0, 897
  %s2888 = smov 3
  %v2889 = vld [vmem:[%s2887] ss:$16 sm:%s2888]
  %s2890 = scalar_lea.vmem %s0, 897
  %s2891 = smov 12
  %v2892 = vld [vmem:[%s2890] ss:$16 sm:%s2891]
  %vm2893 = vcmask 1043458
  %v2894 = vsel %vm2893, %v2892, %v2889
  %s2895 = scalar_lea.vmem %s0, 897
  %s2896 = smov 48
  %v2897 = vld [vmem:[%s2895] ss:$16 sm:%s2896]
  %vm2898 = vcmask 1045508
  %v2899 = vsel %vm2898, %v2897, %v2894
  %s2900 = scalar_lea.vmem %s0, 897
  %s2901 = smov 192
  %v2902 = vld [vmem:[%s2900] ss:$16 sm:%s2901]
  %vm2903 = vcmask 1047558
  %v2904 = vsel %vm2903, %v2902, %v2899
  %2905 = vrot.lane.b32.xlu0 %v2904, 4
  %v2906 = vpop.permute.xlu0 %2905
  %vm2907 = vcmask 64544
  %s2908 = scalar_lea.vmem %s1, 56
  %2909 = vst.msk [vmem:[%s2908] sm:$0xff] %vm2907, %v2906

// kernel: multi_global_part.1
$region0: #{multi_global_part.1}
  #allocation0 [shape = 'u32[]', space=smem, size = 0x4, offset = 0x4, fixed_abs, tag = 'smem constant byte address 0x4 - core index']
  #allocation1 [shape = 'u32[144,128]{1,0:T(1,128)}', space=vmem, size = 0x12000, scoped, tag = 'internal scratch']
  %s0 = inlined_call_operand.vmem [shape: f32[96,32], index: 0, kind: input, shape index: {}]
  %s1 = inlined_call_operand.vmem [shape: f32[32,160], index: 1, kind: input, shape index: {}]
  %s2 = inlined_call_operand.vmem [shape: f32[1,160], index: 2, kind: input, shape index: {}]
  %s3 = inlined_call_operand.vmem [shape: f32[16,64], index: 3, kind: input, shape index: {}]
  %s4 = inlined_call_operand.vmem [shape: f32[4,64], index: 4, kind: input, shape index: {}]
  %s5 = inlined_call_operand.vmem [shape: f32[64,64], index: 5, kind: input, shape index: {}]
  %s6 = inlined_call_operand.vmem [shape: f32[64,32], index: 6, kind: input, shape index: {}]
  %s7 = inlined_call_operand.vmem [shape: f32[16,64], index: 7, kind: input, shape index: {}]
  %s8 = inlined_call_operand.vmem [shape: f32[32,32], index: 8, kind: input, shape index: {}]
  %s9 = inlined_call_operand.vmem [shape: f32[1,32], index: 9, kind: input, shape index: {}]
  %s10 = inlined_call_operand.vmem [shape: f32[1,32], index: 10, kind: input, shape index: {}]
  %s11 = inlined_call_operand.hbm [shape: f32[96,32], index: 11, kind: output, shape index: {}]
  %s12 = sld [smem:[#allocation0]]
  $region54: #{multi_global_part.1} parent=0
    _
  %s14 = ssub.s32 1, %s12
  %s15 = scalar_select 0, %s14, %s12
  $region1: #{multi_global_part.1} parent=0
    #allocation2 [shape = 'u8[49152]{0}', space=vmem, size = 0xc000, scoped, tag = 'output window, operand 0, single buffered']
    #allocation3 [shape = 's32[1]{0}', space=sflag, size = 0x4, scoped, tag = 'scoped memory for multi_global_part.1']
    %16 = vsyncpa [#allocation3], 0
    // Predicated region
    $region2: #{multi_global_part.1} parent=1 // pred_check
      _
    $region3: #{multi_global_part.1} parent=1 // pred_check_branch
      %18 = sbr.rel (0) target = $region5
    $region4: #{multi_global_part.1} parent=1 // pred_region
      _
    $region5: #{multi_global_part.1} parent=1 // pred_fallthru
      _
    // Predicated region
    $region6: #{multi_global_part.1} parent=1 // pred_check
      _
    $region7: #{multi_global_part.1} parent=1 // pred_check_branch
      %20 = sbr.rel (0) target = $region9
    $region8: #{multi_global_part.1} parent=1 // pred_region
      _
    $region9: #{multi_global_part.1} parent=1 // pred_fallthru
      _
    // Predicated region
    $region10: #{multi_global_part.1} parent=1 // pred_check
      _
    $region11: #{multi_global_part.1} parent=1 // pred_check_branch
      %22 = sbr.rel (0) target = $region13
    $region12: #{multi_global_part.1} parent=1 // pred_region
      _
    $region13: #{multi_global_part.1} parent=1 // pred_fallthru
      _
    // Predicated region
    $region14: #{multi_global_part.1} parent=1 // pred_check
      _
    $region15: #{multi_global_part.1} parent=1 // pred_check_branch
      %24 = sbr.rel (0) target = $region17
    $region16: #{multi_global_part.1} parent=1 // pred_region
      _
    $region17: #{multi_global_part.1} parent=1 // pred_fallthru
      _
    // Predicated region
    $region18: #{multi_global_part.1} parent=1 // pred_check
      _
    $region19: #{multi_global_part.1} parent=1 // pred_check_branch
      %26 = sbr.rel (0) target = $region21
    $region20: #{multi_global_part.1} parent=1 // pred_region
      _
    $region21: #{multi_global_part.1} parent=1 // pred_fallthru
      _
    // Predicated region
    $region22: #{multi_global_part.1} parent=1 // pred_check
      _
    $region23: #{multi_global_part.1} parent=1 // pred_check_branch
      %28 = sbr.rel (0) target = $region25
    $region24: #{multi_global_part.1} parent=1 // pred_region
      _
    $region25: #{multi_global_part.1} parent=1 // pred_fallthru
      _
    // Predicated region
    $region26: #{multi_global_part.1} parent=1 // pred_check
      _
    $region27: #{multi_global_part.1} parent=1 // pred_check_branch
      %30 = sbr.rel (0) target = $region29
    $region28: #{multi_global_part.1} parent=1 // pred_region
      _
    $region29: #{multi_global_part.1} parent=1 // pred_fallthru
      _
    // Predicated region
    $region30: #{multi_global_part.1} parent=1 // pred_check
      _
    $region31: #{multi_global_part.1} parent=1 // pred_check_branch
      %32 = sbr.rel (0) target = $region33
    $region32: #{multi_global_part.1} parent=1 // pred_region
      _
    $region33: #{multi_global_part.1} parent=1 // pred_fallthru
      _
    // Predicated region
    $region34: #{multi_global_part.1} parent=1 // pred_check
      _
    $region35: #{multi_global_part.1} parent=1 // pred_check_branch
      %34 = sbr.rel (0) target = $region37
    $region36: #{multi_global_part.1} parent=1 // pred_region
      _
    $region37: #{multi_global_part.1} parent=1 // pred_fallthru
      _
    // Predicated region
    $region38: #{multi_global_part.1} parent=1 // pred_check
      _
    $region39: #{multi_global_part.1} parent=1 // pred_check_branch
      %36 = sbr.rel (0) target = $region41
    $region40: #{multi_global_part.1} parent=1 // pred_region
      _
    $region41: #{multi_global_part.1} parent=1 // pred_fallthru
      _
    // Predicated region
    $region42: #{multi_global_part.1} parent=1 // pred_check
      _
    $region43: #{multi_global_part.1} parent=1 // pred_check_branch
      %38 = sbr.rel (0) target = $region45
    $region44: #{multi_global_part.1} parent=1 // pred_region
      _
    $region45: #{multi_global_part.1} parent=1 // pred_fallthru
      _
    %v39 = vld [vmem:[%s0] sm:$0xff]
    %v40 = vld [vmem:[%s0 + $0x8] sm:$0xff]
    %v41 = vld [vmem:[%s0 + $0x10] sm:$0xff]
    %v42 = vld [vmem:[%s0 + $0x18] sm:$0xff]
    %v43 = vld [vmem:[%s0 + $0x20] sm:$0xff]
    %v44 = vld [vmem:[%s0 + $0x28] sm:$0xff]
    %v45 = vld [vmem:[%s0 + $0x30] sm:$0xff]
    %v46 = vld [vmem:[%s0 + $0x38] sm:$0xff]
    %v47 = vld [vmem:[%s0 + $0x40] sm:$0xff]
    %v48 = vld [vmem:[%s0 + $0x48] sm:$0xff]
    %v49 = vld [vmem:[%s0 + $0x50] sm:$0xff]
    %v50 = vld [vmem:[%s0 + $0x58] sm:$0xff]
    %v51 = vld [vmem:[%s1] sm:$0xff]
    %v52 = vld [vmem:[%s1 + $0x8] sm:$0xff]
    %v53 = vld [vmem:[%s1 + $0x10] sm:$0xff]
    %v54 = vld [vmem:[%s1 + $0x18] sm:$0xff]
    %v55 = vld [vmem:[%s1 + $0x20] sm:$0xff]
    %v56 = vld [vmem:[%s1 + $0x28] sm:$0xff]
    %v57 = vld [vmem:[%s1 + $0x30] sm:$0xff]
    %v58 = vld [vmem:[%s1 + $0x38] sm:$0xff]
    %v59 = vld [vmem:[%s2] sm:$0x3]
    %v61 = vlaneseq
    %v62 = vshrl.u32 %v61, 7
    %v63 = vsub.s32 0, %v62
    %v64 = vrot.slane %v59, %v63
    %v65 = vlaneseq
    %v66 = vshrl.u32 %v65, 7
    %v67 = vsub.s32 1, %v66
    %v68 = vrot.slane %v59, %v67
    %vm71 = vcmask 261120
    %v73 = vsel %vm71, %v39, 0
    %v76 = vsel %vm71, %v40, 0
    %v79 = vsel %vm71, %v41, 0
    %v82 = vsel %vm71, %v42, 0
    %v85 = vsel %vm71, %v43, 0
    %v88 = vsel %vm71, %v44, 0
    %v91 = vsel %vm71, %v45, 0
    %v94 = vsel %vm71, %v46, 0
    %v97 = vsel %vm71, %v47, 0
    %v100 = vsel %vm71, %v48, 0
    %v103 = vsel %vm71, %v49, 0
    %v106 = vsel %vm71, %v50, 0
    %108 = vmatprep.subr.mxu0 0.0
    %109 = vmatpush1.msra.mxu0 0.0
    %110 = vmatprep.subr.mxu0 0.0
    %111 = vmatpush1.msra.mxu0 0.0
    %112 = vmatprep.subr.mxu0 0.0
    %113 = vmatpush1.msra.mxu0 0.0
    %114 = vmatprep.subr.mxu0 0.0
    %115 = vmatpush1.msra.mxu0 0.0
    %116 = vmatprep.subr.mxu0 0.0
    %117 = vmatpush1.msra.mxu0 0.0
    %118 = vmatprep.subr.mxu0 0.0
    %119 = vmatpush1.msra.mxu0 0.0
    %120 = vmatprep.subr.mxu0 0.0
    %121 = vmatpush1.msra.mxu0 0.0
    %122 = vmatprep.subr.mxu0 0.0
    %123 = vmatpush1.msra.mxu0 0.0
    %124 = vmatprep.subr.mxu0 0.0
    %125 = vmatpush1.msra.mxu0 0.0
    %126 = vmatprep.subr.mxu0 0.0
    %127 = vmatpush1.msra.mxu0 0.0
    %128 = vmatprep.subr.mxu0 0.0
    %129 = vmatpush1.msra.mxu0 0.0
    %130 = vmatprep.subr.mxu0 0.0
    %131 = vmatpush1.msra.mxu0 0.0
    %132 = vmatprep.subr.mxu0 %v58
    %133 = vmatpush1.msra.mxu0 %v57
    %134 = vmatprep.subr.mxu0 %v56
    %135 = vmatpush1.msra.mxu0 %v55
    %136 = vmatprep.subr.mxu0 %v54
    %137 = vmatpush1.msra.mxu0 %v53
    %138 = vmatprep.subr.mxu0 %v52
    %139 = vmatpush1.msra.mxu0 %v51
    %140 = vmatprep.subr.mxu0 0.0
    %141 = vmatpush2.msra.mxu0 0.0
    %142 = vmatprep.subr.mxu0 0.0
    %143 = vmatpush2.msra.mxu0 0.0
    %144 = vmatprep.subr.mxu0 0.0
    %145 = vmatpush2.msra.mxu0 0.0
    %146 = vmatprep.subr.mxu0 0.0
    %147 = vmatpush2.msra.mxu0 0.0
    %148 = vmatprep.subr.mxu0 0.0
    %149 = vmatpush2.msra.mxu0 0.0
    %150 = vmatprep.subr.mxu0 0.0
    %151 = vmatpush2.msra.mxu0 0.0
    %152 = vmatprep.subr.mxu0 0.0
    %153 = vmatpush2.msra.mxu0 0.0
    %154 = vmatprep.subr.mxu0 0.0
    %155 = vmatpush2.msra.mxu0 0.0
    %156 = vmatprep.subr.mxu0 0.0
    %157 = vmatpush2.msra.mxu0 0.0
    %158 = vmatprep.subr.mxu0 0.0
    %159 = vmatpush2.msra.mxu0 0.0
    %160 = vmatprep.subr.mxu0 0.0
    %161 = vmatpush2.msra.mxu0 0.0
    %162 = vmatprep.subr.mxu0 0.0
    %163 = vmatpush2.msra.mxu0 0.0
    %164 = vmatprep.subr.mxu0 0.0
    %165 = vmatpush2.msra.mxu0 0.0
    %166 = vmatprep.subr.mxu0 0.0
    %167 = vmatpush2.msra.mxu0 0.0
    %168 = vmatprep.subr.mxu0 0.0
    %169 = vmatpush2.msra.mxu0 0.0
    %170 = vmatprep.subr.mxu0 0.0
    %171 = vmatpush2.msra.mxu0 0.0
    %172 = vmatprep.mubr.f32.mxu0 0.0
    %173 = vmatmul.mubr.f32.gmra.mxu0 %v73
    %v174 = vpop.f32.mrf.mxu0
    %v175 = vadd.f32 %v64, %v174
    %v176 = vpop.f32.mrf.mxu0
    %v177 = vadd.f32 %v68, %v176
    %178 = vmatprep.mubr.f32.mxu0 0.0
    %179 = vmatmul.mubr.f32.gmra.mxu0 %v76
    %v180 = vpop.f32.mrf.mxu0
    %v181 = vadd.f32 %v64, %v180
    %v182 = vpop.f32.mrf.mxu0
    %v183 = vadd.f32 %v68, %v182
    %184 = vmatprep.mubr.f32.mxu0 0.0
    %185 = vmatmul.mubr.f32.gmra.mxu0 %v79
    %v186 = vpop.f32.mrf.mxu0
    %v187 = vadd.f32 %v64, %v186
    %v188 = vpop.f32.mrf.mxu0
    %v189 = vadd.f32 %v68, %v188
    %190 = vmatprep.mubr.f32.mxu0 0.0
    %191 = vmatmul.mubr.f32.gmra.mxu0 %v82
    %v192 = vpop.f32.mrf.mxu0
    %v193 = vadd.f32 %v64, %v192
    %v194 = vpop.f32.mrf.mxu0
    %v195 = vadd.f32 %v68, %v194
    %196 = vmatprep.mubr.f32.mxu0 0.0
    %197 = vmatmul.mubr.f32.gmra.mxu0 %v85
    %v198 = vpop.f32.mrf.mxu0
    %v199 = vadd.f32 %v64, %v198
    %v200 = vpop.f32.mrf.mxu0
    %v201 = vadd.f32 %v68, %v200
    %202 = vmatprep.mubr.f32.mxu0 0.0
    %203 = vmatmul.mubr.f32.gmra.mxu0 %v88
    %v204 = vpop.f32.mrf.mxu0
    %v205 = vadd.f32 %v64, %v204
    %v206 = vpop.f32.mrf.mxu0
    %v207 = vadd.f32 %v68, %v206
    %208 = vmatprep.mubr.f32.mxu0 0.0
    %209 = vmatmul.mubr.f32.gmra.mxu0 %v91
    %v210 = vpop.f32.mrf.mxu0
    %v211 = vadd.f32 %v64, %v210
    %v212 = vpop.f32.mrf.mxu0
    %v213 = vadd.f32 %v68, %v212
    %214 = vmatprep.mubr.f32.mxu0 0.0
    %215 = vmatmul.mubr.f32.gmra.mxu0 %v94
    %v216 = vpop.f32.mrf.mxu0
    %v217 = vadd.f32 %v64, %v216
    %v218 = vpop.f32.mrf.mxu0
    %v219 = vadd.f32 %v68, %v218
    %220 = vmatprep.mubr.f32.mxu0 0.0
    %221 = vmatmul.mubr.f32.gmra.mxu0 %v97
    %v222 = vpop.f32.mrf.mxu0
    %v223 = vadd.f32 %v64, %v222
    %v224 = vpop.f32.mrf.mxu0
    %v225 = vadd.f32 %v68, %v224
    %226 = vmatprep.mubr.f32.mxu0 0.0
    %227 = vmatmul.mubr.f32.gmra.mxu0 %v100
    %v228 = vpop.f32.mrf.mxu0
    %v229 = vadd.f32 %v64, %v228
    %v230 = vpop.f32.mrf.mxu0
    %v231 = vadd.f32 %v68, %v230
    %232 = vmatprep.mubr.f32.mxu0 0.0
    %233 = vmatmul.mubr.f32.gmra.mxu0 %v103
    %v234 = vpop.f32.mrf.mxu0
    %v235 = vadd.f32 %v64, %v234
    %v236 = vpop.f32.mrf.mxu0
    %v237 = vadd.f32 %v68, %v236
    %238 = vmatprep.mubr.f32.mxu0 0.0
    %239 = vmatmul.mubr.f32.gmra.mxu0 %v106
    %v240 = vpop.f32.mrf.mxu0
    %v241 = vadd.f32 %v64, %v240
    %v242 = vpop.f32.mrf.mxu0
    %v243 = vadd.f32 %v68, %v242
    %244 = vdwg.mxu0
    %v245 = vld [vmem:[%s3] sm:$0xff]
    %v246 = vld [vmem:[%s3 + $0x8] sm:$0xff]
    %249 = vrot.lane.b32.xlu0 %v245, 96
    %v250 = vpop.permute.xlu0 %249
    %251 = vrot.lane.b32.xlu0 %v246, 96
    %v252 = vpop.permute.xlu0 %251
    %v255 = vmul.f32 %v175, %v250
    %v256 = vmul.f32 %v177, %v250
    %v257 = vmul.f32 %v181, %v252
    %v258 = vmul.f32 %v183, %v252
    %v259 = vmul.f32 %v187, %v250
    %v260 = vmul.f32 %v189, %v250
    %v261 = vmul.f32 %v193, %v252
    %v262 = vmul.f32 %v195, %v252
    %v263 = vmul.f32 %v199, %v250
    %v264 = vmul.f32 %v201, %v250
    %v265 = vmul.f32 %v205, %v252
    %v266 = vmul.f32 %v207, %v252
    %v267 = vmul.f32 %v211, %v250
    %v268 = vmul.f32 %v213, %v250
    %v269 = vmul.f32 %v217, %v252
    %v270 = vmul.f32 %v219, %v252
    %v271 = vmul.f32 %v223, %v250
    %v272 = vmul.f32 %v225, %v250
    %v273 = vmul.f32 %v229, %v252
    %v274 = vmul.f32 %v231, %v252
    %v275 = vmul.f32 %v235, %v250
    %v276 = vmul.f32 %v237, %v250
    %v277 = vmul.f32 %v241, %v252
    %v278 = vmul.f32 %v243, %v252
    %vm279 = vcmask 1048320
    %v280 = vsel %vm279, %v255, 0.0
    %v281 = vsel %vm279, %v257, 0.0
    %v282 = vadd.f32 %v280, %v281
    %v283 = vrot.slane %v282, 4
    %v284 = vadd.f32 %v282, %v283
    %v285 = vrot.slane %v284, 2
    %v286 = vadd.f32 %v284, %v285
    %v287 = vrot.slane %v286, 1
    %v288 = vadd.f32 %v286, %v287
    %v289 = vsel %vm71, %v256, 0.0
    %v290 = vsel %vm71, %v258, 0.0
    %v291 = vadd.f32 %v289, %v290
    %v292 = vrot.slane %v291, 4
    %v293 = vadd.f32 %v291, %v292
    %v294 = vrot.slane %v293, 2
    %v295 = vadd.f32 %v293, %v294
    %v296 = vrot.slane %v295, 1
    %v297 = vadd.f32 %v295, %v296
    %v298 = vsel %vm279, %v259, 0.0
    %v299 = vsel %vm279, %v261, 0.0
    %v300 = vadd.f32 %v298, %v299
    %v301 = vrot.slane %v300, 4
    %v302 = vadd.f32 %v300, %v301
    %v303 = vrot.slane %v302, 2
    %v304 = vadd.f32 %v302, %v303
    %v305 = vrot.slane %v304, 1
    %v306 = vadd.f32 %v304, %v305
    %v307 = vsel %vm71, %v260, 0.0
    %v308 = vsel %vm71, %v262, 0.0
    %v309 = vadd.f32 %v307, %v308
    %v310 = vrot.slane %v309, 4
    %v311 = vadd.f32 %v309, %v310
    %v312 = vrot.slane %v311, 2
    %v313 = vadd.f32 %v311, %v312
    %v314 = vrot.slane %v313, 1
    %v315 = vadd.f32 %v313, %v314
    %v316 = vsel %vm279, %v263, 0.0
    %v317 = vsel %vm279, %v265, 0.0
    %v318 = vadd.f32 %v316, %v317
    %v319 = vrot.slane %v318, 4
    %v320 = vadd.f32 %v318, %v319
    %v321 = vrot.slane %v320, 2
    %v322 = vadd.f32 %v320, %v321
    %v323 = vrot.slane %v322, 1
    %v324 = vadd.f32 %v322, %v323
    %v325 = vsel %vm71, %v264, 0.0
    %v326 = vsel %vm71, %v266, 0.0
    %v327 = vadd.f32 %v325, %v326
    %v328 = vrot.slane %v327, 4
    %v329 = vadd.f32 %v327, %v328
    %v330 = vrot.slane %v329, 2
    %v331 = vadd.f32 %v329, %v330
    %v332 = vrot.slane %v331, 1
    %v333 = vadd.f32 %v331, %v332
    %v334 = vsel %vm279, %v267, 0.0
    %v335 = vsel %vm279, %v269, 0.0
    %v336 = vadd.f32 %v334, %v335
    %v337 = vrot.slane %v336, 4
    %v338 = vadd.f32 %v336, %v337
    %v339 = vrot.slane %v338, 2
    %v340 = vadd.f32 %v338, %v339
    %v341 = vrot.slane %v340, 1
    %v342 = vadd.f32 %v340, %v341
    %v343 = vsel %vm71, %v268, 0.0
    %v344 = vsel %vm71, %v270, 0.0
    %v345 = vadd.f32 %v343, %v344
    %v346 = vrot.slane %v345, 4
    %v347 = vadd.f32 %v345, %v346
    %v348 = vrot.slane %v347, 2
    %v349 = vadd.f32 %v347, %v348
    %v350 = vrot.slane %v349, 1
    %v351 = vadd.f32 %v349, %v350
    %v352 = vsel %vm279, %v271, 0.0
    %v353 = vsel %vm279, %v273, 0.0
    %v354 = vadd.f32 %v352, %v353
    %v355 = vrot.slane %v354, 4
    %v356 = vadd.f32 %v354, %v355
    %v357 = vrot.slane %v356, 2
    %v358 = vadd.f32 %v356, %v357
    %v359 = vrot.slane %v358, 1
    %v360 = vadd.f32 %v358, %v359
    %v361 = vsel %vm71, %v272, 0.0
    %v362 = vsel %vm71, %v274, 0.0
    %v363 = vadd.f32 %v361, %v362
    %v364 = vrot.slane %v363, 4
    %v365 = vadd.f32 %v363, %v364
    %v366 = vrot.slane %v365, 2
    %v367 = vadd.f32 %v365, %v366
    %v368 = vrot.slane %v367, 1
    %v369 = vadd.f32 %v367, %v368
    %v370 = vsel %vm279, %v275, 0.0
    %v371 = vsel %vm279, %v277, 0.0
    %v372 = vadd.f32 %v370, %v371
    %v373 = vrot.slane %v372, 4
    %v374 = vadd.f32 %v372, %v373
    %v375 = vrot.slane %v374, 2
    %v376 = vadd.f32 %v374, %v375
    %v377 = vrot.slane %v376, 1
    %v378 = vadd.f32 %v376, %v377
    %v379 = vsel %vm71, %v276, 0.0
    %v380 = vsel %vm71, %v278, 0.0
    %v381 = vadd.f32 %v379, %v380
    %v382 = vrot.slane %v381, 4
    %v383 = vadd.f32 %v381, %v382
    %v384 = vrot.slane %v383, 2
    %v385 = vadd.f32 %v383, %v384
    %v386 = vrot.slane %v385, 1
    %v387 = vadd.f32 %v385, %v386
    %400 = vrot.lane.b32.xlu0 %v288, 64
    %v401 = vpop.permute.xlu0 %400
    %402 = vrot.lane.b32.xlu0 %v297, 64
    %v403 = vpop.permute.xlu0 %402
    %404 = vrot.lane.b32.xlu0 %v306, 64
    %v405 = vpop.permute.xlu0 %404
    %406 = vrot.lane.b32.xlu0 %v315, 64
    %v407 = vpop.permute.xlu0 %406
    %408 = vrot.lane.b32.xlu0 %v324, 64
    %v409 = vpop.permute.xlu0 %408
    %410 = vrot.lane.b32.xlu0 %v333, 64
    %v411 = vpop.permute.xlu0 %410
    %412 = vrot.lane.b32.xlu0 %v342, 64
    %v413 = vpop.permute.xlu0 %412
    %414 = vrot.lane.b32.xlu0 %v351, 64
    %v415 = vpop.permute.xlu0 %414
    %416 = vrot.lane.b32.xlu0 %v360, 64
    %v417 = vpop.permute.xlu0 %416
    %418 = vrot.lane.b32.xlu0 %v369, 64
    %v419 = vpop.permute.xlu0 %418
    %420 = vrot.lane.b32.xlu0 %v378, 64
    %v421 = vpop.permute.xlu0 %420
    %422 = vrot.lane.b32.xlu0 %v387, 64
    %v423 = vpop.permute.xlu0 %422
    %vm424 = vcmask 523264
    %v425 = vsel %vm424, %v401, %v403
    %v426 = vsel %vm424, %v405, %v407
    %v427 = vsel %vm424, %v409, %v411
    %v428 = vsel %vm424, %v413, %v415
    %v429 = vsel %vm424, %v417, %v419
    %v430 = vsel %vm424, %v421, %v423
    %v437 = vadd.f32 %v175, %v425
    %v438 = vadd.f32 %v181, %v425
    %v439 = vadd.f32 %v187, %v426
    %v440 = vadd.f32 %v193, %v426
    %v441 = vadd.f32 %v199, %v427
    %v442 = vadd.f32 %v205, %v427
    %v443 = vadd.f32 %v211, %v428
    %v444 = vadd.f32 %v217, %v428
    %v445 = vadd.f32 %v223, %v429
    %v446 = vadd.f32 %v229, %v429
    %v447 = vadd.f32 %v235, %v430
    %v448 = vadd.f32 %v241, %v430
    %vm449 = vcmp.gt.f32.partialorder %v437, 0.0
    %vm450 = vcmp.gt.f32.partialorder %v438, 0.0
    %vm451 = vcmp.gt.f32.partialorder %v439, 0.0
    %vm452 = vcmp.gt.f32.partialorder %v440, 0.0
    %vm453 = vcmp.gt.f32.partialorder %v441, 0.0
    %vm454 = vcmp.gt.f32.partialorder %v442, 0.0
    %vm455 = vcmp.gt.f32.partialorder %v443, 0.0
    %vm456 = vcmp.gt.f32.partialorder %v444, 0.0
    %vm457 = vcmp.gt.f32.partialorder %v445, 0.0
    %vm458 = vcmp.gt.f32.partialorder %v446, 0.0
    %vm459 = vcmp.gt.f32.partialorder %v447, 0.0
    %vm460 = vcmp.gt.f32.partialorder %v448, 0.0
    %v461 = vmul.f32 %v437, 0.2
    %v462 = vmul.f32 %v438, 0.2
    %v463 = vmul.f32 %v439, 0.2
    %v464 = vmul.f32 %v440, 0.2
    %v465 = vmul.f32 %v441, 0.2
    %v466 = vmul.f32 %v442, 0.2
    %v467 = vmul.f32 %v443, 0.2
    %v468 = vmul.f32 %v444, 0.2
    %v469 = vmul.f32 %v445, 0.2
    %v470 = vmul.f32 %v446, 0.2
    %v471 = vmul.f32 %v447, 0.2
    %v472 = vmul.f32 %v448, 0.2
    %v473 = vsel %vm449, %v437, %v461
    %v474 = vsel %vm450, %v438, %v462
    %v475 = vsel %vm451, %v439, %v463
    %v476 = vsel %vm452, %v440, %v464
    %v477 = vsel %vm453, %v441, %v465
    %v478 = vsel %vm454, %v442, %v466
    %v479 = vsel %vm455, %v443, %v467
    %v480 = vsel %vm456, %v444, %v468
    %v481 = vsel %vm457, %v445, %v469
    %v482 = vsel %vm458, %v446, %v470
    %v483 = vsel %vm459, %v447, %v471
    %v484 = vsel %vm460, %v448, %v472
    %vm485 = vcmask 818944
    %v486 = vsel %vm485, %v175, -inf
    %v487 = vsel %vm485, %v181, -inf
    %v488 = vmax.f32 %v486, %v487
    %v489 = vrot.slane %v488, 4
    %v490 = vmax.f32 %v488, %v489
    %v491 = vrot.slane %v490, 2
    %v492 = vmax.f32 %v490, %v491
    %v493 = vrot.slane %v492, 1
    %v494 = vmax.f32 %v492, %v493
    %v495 = vsel %vm485, %v187, -inf
    %v496 = vsel %vm485, %v193, -inf
    %v497 = vmax.f32 %v495, %v496
    %v498 = vrot.slane %v497, 4
    %v499 = vmax.f32 %v497, %v498
    %v500 = vrot.slane %v499, 2
    %v501 = vmax.f32 %v499, %v500
    %v502 = vrot.slane %v501, 1
    %v503 = vmax.f32 %v501, %v502
    %v504 = vsel %vm485, %v199, -inf
    %v505 = vsel %vm485, %v205, -inf
    %v506 = vmax.f32 %v504, %v505
    %v507 = vrot.slane %v506, 4
    %v508 = vmax.f32 %v506, %v507
    %v509 = vrot.slane %v508, 2
    %v510 = vmax.f32 %v508, %v509
    %v511 = vrot.slane %v510, 1
    %v512 = vmax.f32 %v510, %v511
    %v513 = vsel %vm485, %v211, -inf
    %v514 = vsel %vm485, %v217, -inf
    %v515 = vmax.f32 %v513, %v514
    %v516 = vrot.slane %v515, 4
    %v517 = vmax.f32 %v515, %v516
    %v518 = vrot.slane %v517, 2
    %v519 = vmax.f32 %v517, %v518
    %v520 = vrot.slane %v519, 1
    %v521 = vmax.f32 %v519, %v520
    %v522 = vsel %vm485, %v223, -inf
    %v523 = vsel %vm485, %v229, -inf
    %v524 = vmax.f32 %v522, %v523
    %v525 = vrot.slane %v524, 4
    %v526 = vmax.f32 %v524, %v525
    %v527 = vrot.slane %v526, 2
    %v528 = vmax.f32 %v526, %v527
    %v529 = vrot.slane %v528, 1
    %v530 = vmax.f32 %v528, %v529
    %v531 = vsel %vm485, %v235, -inf
    %v532 = vsel %vm485, %v241, -inf
    %v533 = vmax.f32 %v531, %v532
    %v534 = vrot.slane %v533, 4
    %v535 = vmax.f32 %v533, %v534
    %v536 = vrot.slane %v535, 2
    %v537 = vmax.f32 %v535, %v536
    %v538 = vrot.slane %v537, 1
    %v539 = vmax.f32 %v537, %v538
    %546 = vrot.lane.b32.xlu0 %v494, 64
    %v547 = vpop.permute.xlu0 %546
    %548 = vrot.lane.b32.xlu0 %v503, 64
    %v549 = vpop.permute.xlu0 %548
    %550 = vrot.lane.b32.xlu0 %v512, 64
    %v551 = vpop.permute.xlu0 %550
    %552 = vrot.lane.b32.xlu0 %v521, 64
    %v553 = vpop.permute.xlu0 %552
    %554 = vrot.lane.b32.xlu0 %v530, 64
    %v555 = vpop.permute.xlu0 %554
    %556 = vrot.lane.b32.xlu0 %v539, 64
    %v557 = vpop.permute.xlu0 %556
    %v564 = vadd.f32 %v175, %v547
    %v565 = vadd.f32 %v181, %v547
    %v566 = vadd.f32 %v187, %v549
    %v567 = vadd.f32 %v193, %v549
    %v568 = vadd.f32 %v199, %v551
    %v569 = vadd.f32 %v205, %v551
    %v570 = vadd.f32 %v211, %v553
    %v571 = vadd.f32 %v217, %v553
    %v572 = vadd.f32 %v223, %v555
    %v573 = vadd.f32 %v229, %v555
    %v574 = vadd.f32 %v235, %v557
    %v575 = vadd.f32 %v241, %v557
    %vm576 = vcmp.gt.f32.partialorder %v564, 0.0
    %vm577 = vcmp.gt.f32.partialorder %v565, 0.0
    %vm578 = vcmp.gt.f32.partialorder %v566, 0.0
    %vm579 = vcmp.gt.f32.partialorder %v567, 0.0
    %vm580 = vcmp.gt.f32.partialorder %v568, 0.0
    %vm581 = vcmp.gt.f32.partialorder %v569, 0.0
    %vm582 = vcmp.gt.f32.partialorder %v570, 0.0
    %vm583 = vcmp.gt.f32.partialorder %v571, 0.0
    %vm584 = vcmp.gt.f32.partialorder %v572, 0.0
    %vm585 = vcmp.gt.f32.partialorder %v573, 0.0
    %vm586 = vcmp.gt.f32.partialorder %v574, 0.0
    %vm587 = vcmp.gt.f32.partialorder %v575, 0.0
    %v588 = vmul.f32 %v564, 0.2
    %v589 = vmul.f32 %v565, 0.2
    %v590 = vmul.f32 %v566, 0.2
    %v591 = vmul.f32 %v567, 0.2
    %v592 = vmul.f32 %v568, 0.2
    %v593 = vmul.f32 %v569, 0.2
    %v594 = vmul.f32 %v570, 0.2
    %v595 = vmul.f32 %v571, 0.2
    %v596 = vmul.f32 %v572, 0.2
    %v597 = vmul.f32 %v573, 0.2
    %v598 = vmul.f32 %v574, 0.2
    %v599 = vmul.f32 %v575, 0.2
    %v600 = vsel %vm576, %v564, %v588
    %v601 = vsel %vm577, %v565, %v589
    %v602 = vsel %vm578, %v566, %v590
    %v603 = vsel %vm579, %v567, %v591
    %v604 = vsel %vm580, %v568, %v592
    %v605 = vsel %vm581, %v569, %v593
    %v606 = vsel %vm582, %v570, %v594
    %v607 = vsel %vm583, %v571, %v595
    %v608 = vsel %vm584, %v572, %v596
    %v609 = vsel %vm585, %v573, %v597
    %v610 = vsel %vm586, %v574, %v598
    %v611 = vsel %vm587, %v575, %v599
    %v612 = vld [vmem:[%s4] sm:$0xf]
    %625 = vrot.lane.b32.xlu0 %v600, 96
    %v626 = vpop.permute.xlu0 %625
    %627 = vrot.lane.b32.xlu0 %v601, 96
    %v628 = vpop.permute.xlu0 %627
    %629 = vrot.lane.b32.xlu0 %v602, 96
    %v630 = vpop.permute.xlu0 %629
    %631 = vrot.lane.b32.xlu0 %v603, 96
    %v632 = vpop.permute.xlu0 %631
    %633 = vrot.lane.b32.xlu0 %v604, 96
    %v634 = vpop.permute.xlu0 %633
    %635 = vrot.lane.b32.xlu0 %v605, 96
    %v636 = vpop.permute.xlu0 %635
    %637 = vrot.lane.b32.xlu0 %v606, 96
    %v638 = vpop.permute.xlu0 %637
    %639 = vrot.lane.b32.xlu0 %v607, 96
    %v640 = vpop.permute.xlu0 %639
    %641 = vrot.lane.b32.xlu0 %v608, 96
    %v642 = vpop.permute.xlu0 %641
    %643 = vrot.lane.b32.xlu0 %v609, 96
    %v644 = vpop.permute.xlu0 %643
    %645 = vrot.lane.b32.xlu0 %v610, 96
    %v646 = vpop.permute.xlu0 %645
    %647 = vrot.lane.b32.xlu0 %v611, 96
    %v648 = vpop.permute.xlu0 %647
    %vm649 = vcmask 31744
    %v650 = vsel %vm649, %v626, 0
    %v652 = vsel %vm649, %v628, 0
    %v654 = vsel %vm649, %v630, 0
    %v656 = vsel %vm649, %v632, 0
    %v658 = vsel %vm649, %v634, 0
    %v660 = vsel %vm649, %v636, 0
    %v662 = vsel %vm649, %v638, 0
    %v664 = vsel %vm649, %v640, 0
    %v666 = vsel %vm649, %v642, 0
    %v668 = vsel %vm649, %v644, 0
    %v670 = vsel %vm649, %v646, 0
    %v672 = vsel %vm649, %v648, 0
    %vm674 = vcmask 1043456
    %v676 = vsel %vm674, %v612, 0
    %678 = vmatprep.subr.mxu0 0.0
    %679 = vmatpush1.msra.mxu0 0.0
    %680 = vmatprep.subr.mxu0 0.0
    %681 = vmatpush1.msra.mxu0 0.0
    %682 = vmatprep.subr.mxu0 0.0
    %683 = vmatpush1.msra.mxu0 0.0
    %684 = vmatprep.subr.mxu0 0.0
    %685 = vmatpush1.msra.mxu0 0.0
    %686 = vmatprep.subr.mxu0 0.0
    %687 = vmatpush1.msra.mxu0 0.0
    %688 = vmatprep.subr.mxu0 0.0
    %689 = vmatpush1.msra.mxu0 0.0
    %690 = vmatprep.subr.mxu0 0.0
    %691 = vmatpush1.msra.mxu0 0.0
    %692 = vmatprep.subr.mxu0 0.0
    %693 = vmatpush1.msra.mxu0 0.0
    %694 = vmatprep.subr.mxu0 0.0
    %695 = vmatpush1.msra.mxu0 0.0
    %696 = vmatprep.subr.mxu0 0.0
    %697 = vmatpush1.msra.mxu0 0.0
    %698 = vmatprep.subr.mxu0 0.0
    %699 = vmatpush1.msra.mxu0 0.0
    %700 = vmatprep.subr.mxu0 0.0
    %701 = vmatpush1.msra.mxu0 0.0
    %702 = vmatprep.subr.mxu0 0.0
    %703 = vmatpush1.msra.mxu0 0.0
    %704 = vmatprep.subr.mxu0 0.0
    %705 = vmatpush1.msra.mxu0 0.0
    %706 = vmatprep.subr.mxu0 0.0
    %707 = vmatpush1.msra.mxu0 0.0
    %708 = vmatprep.subr.mxu0 0.0
    %709 = vmatpush1.msra.mxu0 %v676
    %710 = vmatprep.subr.mxu0 0.0
    %711 = vmatpush2.msra.mxu0 0.0
    %712 = vmatprep.subr.mxu0 0.0
    %713 = vmatpush2.msra.mxu0 0.0
    %714 = vmatprep.subr.mxu0 0.0
    %715 = vmatpush2.msra.mxu0 0.0
    %716 = vmatprep.subr.mxu0 0.0
    %717 = vmatpush2.msra.mxu0 0.0
    %718 = vmatprep.subr.mxu0 0.0
    %719 = vmatpush2.msra.mxu0 0.0
    %720 = vmatprep.subr.mxu0 0.0
    %721 = vmatpush2.msra.mxu0 0.0
    %722 = vmatprep.subr.mxu0 0.0
    %723 = vmatpush2.msra.mxu0 0.0
    %724 = vmatprep.subr.mxu0 0.0
    %725 = vmatpush2.msra.mxu0 0.0
    %726 = vmatprep.subr.mxu0 0.0
    %727 = vmatpush2.msra.mxu0 0.0
    %728 = vmatprep.subr.mxu0 0.0
    %729 = vmatpush2.msra.mxu0 0.0
    %730 = vmatprep.subr.mxu0 0.0
    %731 = vmatpush2.msra.mxu0 0.0
    %732 = vmatprep.subr.mxu0 0.0
    %733 = vmatpush2.msra.mxu0 0.0
    %734 = vmatprep.subr.mxu0 0.0
    %735 = vmatpush2.msra.mxu0 0.0
    %736 = vmatprep.subr.mxu0 0.0
    %737 = vmatpush2.msra.mxu0 0.0
    %738 = vmatprep.subr.mxu0 0.0
    %739 = vmatpush2.msra.mxu0 0.0
    %740 = vmatprep.subr.mxu0 0.0
    %741 = vmatpush2.msra.mxu0 0.0
    %742 = vmatprep.mubr.f32.mxu0 0.0
    %743 = vmatmul.mubr.f32.gmra.mxu0 %v650
    %v744 = vpop.f32.mrf.mxu0
    %v745 = vadd.f32 0.0, %v744
    %v746 = vpop.f32.mrf.mxu0
    %747 = vmatprep.mubr.f32.mxu0 0.0
    %748 = vmatmul.mubr.f32.gmra.mxu0 %v652
    %v749 = vpop.f32.mrf.mxu0
    %v750 = vadd.f32 0.0, %v749
    %v751 = vpop.f32.mrf.mxu0
    %752 = vmatprep.mubr.f32.mxu0 0.0
    %753 = vmatmul.mubr.f32.gmra.mxu0 %v654
    %v754 = vpop.f32.mrf.mxu0
    %v755 = vadd.f32 0.0, %v754
    %v756 = vpop.f32.mrf.mxu0
    %757 = vmatprep.mubr.f32.mxu0 0.0
    %758 = vmatmul.mubr.f32.gmra.mxu0 %v656
    %v759 = vpop.f32.mrf.mxu0
    %v760 = vadd.f32 0.0, %v759
    %v761 = vpop.f32.mrf.mxu0
    %762 = vmatprep.mubr.f32.mxu0 0.0
    %763 = vmatmul.mubr.f32.gmra.mxu0 %v658
    %v764 = vpop.f32.mrf.mxu0
    %v765 = vadd.f32 0.0, %v764
    %v766 = vpop.f32.mrf.mxu0
    %767 = vmatprep.mubr.f32.mxu0 0.0
    %768 = vmatmul.mubr.f32.gmra.mxu0 %v660
    %v769 = vpop.f32.mrf.mxu0
    %v770 = vadd.f32 0.0, %v769
    %v771 = vpop.f32.mrf.mxu0
    %772 = vmatprep.mubr.f32.mxu0 0.0
    %773 = vmatmul.mubr.f32.gmra.mxu0 %v662
    %v774 = vpop.f32.mrf.mxu0
    %v775 = vadd.f32 0.0, %v774
    %v776 = vpop.f32.mrf.mxu0
    %777 = vmatprep.mubr.f32.mxu0 0.0
    %778 = vmatmul.mubr.f32.gmra.mxu0 %v664
    %v779 = vpop.f32.mrf.mxu0
    %v780 = vadd.f32 0.0, %v779
    %v781 = vpop.f32.mrf.mxu0
    %782 = vmatprep.mubr.f32.mxu0 0.0
    %783 = vmatmul.mubr.f32.gmra.mxu0 %v666
    %v784 = vpop.f32.mrf.mxu0
    %v785 = vadd.f32 0.0, %v784
    %v786 = vpop.f32.mrf.mxu0
    %787 = vmatprep.mubr.f32.mxu0 0.0
    %788 = vmatmul.mubr.f32.gmra.mxu0 %v668
    %v789 = vpop.f32.mrf.mxu0
    %v790 = vadd.f32 0.0, %v789
    %v791 = vpop.f32.mrf.mxu0
    %792 = vmatprep.mubr.f32.mxu0 0.0
    %793 = vmatmul.mubr.f32.gmra.mxu0 %v670
    %v794 = vpop.f32.mrf.mxu0
    %v795 = vadd.f32 0.0, %v794
    %v796 = vpop.f32.mrf.mxu0
    %797 = vmatprep.mubr.f32.mxu0 0.0
    %798 = vmatmul.mubr.f32.gmra.mxu0 %v672
    %v799 = vpop.f32.mrf.mxu0
    %v800 = vadd.f32 0.0, %v799
    %v801 = vpop.f32.mrf.mxu0
    %802 = vdwg.mxu0
    %815 = vrot.lane.b32.xlu0 %v745, 32
    %v816 = vpop.permute.xlu0 %815
    %817 = vrot.lane.b32.xlu0 %v750, 32
    %v818 = vpop.permute.xlu0 %817
    %819 = vrot.lane.b32.xlu0 %v755, 32
    %v820 = vpop.permute.xlu0 %819
    %821 = vrot.lane.b32.xlu0 %v760, 32
    %v822 = vpop.permute.xlu0 %821
    %823 = vrot.lane.b32.xlu0 %v765, 32
    %v824 = vpop.permute.xlu0 %823
    %825 = vrot.lane.b32.xlu0 %v770, 32
    %v826 = vpop.permute.xlu0 %825
    %827 = vrot.lane.b32.xlu0 %v775, 32
    %v828 = vpop.permute.xlu0 %827
    %829 = vrot.lane.b32.xlu0 %v780, 32
    %v830 = vpop.permute.xlu0 %829
    %831 = vrot.lane.b32.xlu0 %v785, 32
    %v832 = vpop.permute.xlu0 %831
    %833 = vrot.lane.b32.xlu0 %v790, 32
    %v834 = vpop.permute.xlu0 %833
    %835 = vrot.lane.b32.xlu0 %v795, 32
    %v836 = vpop.permute.xlu0 %835
    %837 = vrot.lane.b32.xlu0 %v800, 32
    %v838 = vpop.permute.xlu0 %837
    %v851 = vsub.f32 %v473, %v816
    %v852 = vsub.f32 %v474, %v818
    %v853 = vsub.f32 %v475, %v820
    %v854 = vsub.f32 %v476, %v822
    %v855 = vsub.f32 %v477, %v824
    %v856 = vsub.f32 %v478, %v826
    %v857 = vsub.f32 %v479, %v828
    %v858 = vsub.f32 %v480, %v830
    %v859 = vsub.f32 %v481, %v832
    %v860 = vsub.f32 %v482, %v834
    %v861 = vsub.f32 %v483, %v836
    %v862 = vsub.f32 %v484, %v838
    %v863 = vmul.f32 %v851, 1.442695
    %v864 = vpow.pop %v863
    %v865 = vmul.f32 %v852, 1.442695
    %v866 = vpow.pop %v865
    %v867 = vmul.f32 %v853, 1.442695
    %v868 = vpow.pop %v867
    %v869 = vmul.f32 %v854, 1.442695
    %v870 = vpow.pop %v869
    %v871 = vmul.f32 %v855, 1.442695
    %v872 = vpow.pop %v871
    %v873 = vmul.f32 %v856, 1.442695
    %v874 = vpow.pop %v873
    %v875 = vmul.f32 %v857, 1.442695
    %v876 = vpow.pop %v875
    %v877 = vmul.f32 %v858, 1.442695
    %v878 = vpow.pop %v877
    %v879 = vmul.f32 %v859, 1.442695
    %v880 = vpow.pop %v879
    %v881 = vmul.f32 %v860, 1.442695
    %v882 = vpow.pop %v881
    %v883 = vmul.f32 %v861, 1.442695
    %v884 = vpow.pop %v883
    %v885 = vmul.f32 %v862, 1.442695
    %v886 = vpow.pop %v885
    %v887 = vld [vmem:[%s5] sm:$0xff]
    %v888 = vld [vmem:[%s5 + $0x8] sm:$0xff]
    %v889 = vld [vmem:[%s5 + $0x10] sm:$0xff]
    %v890 = vld [vmem:[%s5 + $0x18] sm:$0xff]
    %v891 = vld [vmem:[%s5 + $0x20] sm:$0xff]
    %v892 = vld [vmem:[%s5 + $0x28] sm:$0xff]
    %v893 = vld [vmem:[%s5 + $0x30] sm:$0xff]
    %v894 = vld [vmem:[%s5 + $0x38] sm:$0xff]
    %907 = vrot.lane.b32.xlu0 %v864, 96
    %v908 = vpop.permute.xlu0 %907
    %909 = vrot.lane.b32.xlu0 %v866, 96
    %v910 = vpop.permute.xlu0 %909
    %911 = vrot.lane.b32.xlu0 %v868, 96
    %v912 = vpop.permute.xlu0 %911
    %913 = vrot.lane.b32.xlu0 %v870, 96
    %v914 = vpop.permute.xlu0 %913
    %915 = vrot.lane.b32.xlu0 %v872, 96
    %v916 = vpop.permute.xlu0 %915
    %917 = vrot.lane.b32.xlu0 %v874, 96
    %v918 = vpop.permute.xlu0 %917
    %919 = vrot.lane.b32.xlu0 %v876, 96
    %v920 = vpop.permute.xlu0 %919
    %921 = vrot.lane.b32.xlu0 %v878, 96
    %v922 = vpop.permute.xlu0 %921
    %923 = vrot.lane.b32.xlu0 %v880, 96
    %v924 = vpop.permute.xlu0 %923
    %925 = vrot.lane.b32.xlu0 %v882, 96
    %v926 = vpop.permute.xlu0 %925
    %927 = vrot.lane.b32.xlu0 %v884, 96
    %v928 = vpop.permute.xlu0 %927
    %929 = vrot.lane.b32.xlu0 %v886, 96
    %v930 = vpop.permute.xlu0 %929
    %v931 = vsel %vm424, %v908, 0
    %v933 = vsel %vm424, %v910, 0
    %v935 = vsel %vm424, %v912, 0
    %v937 = vsel %vm424, %v914, 0
    %v939 = vsel %vm424, %v916, 0
    %v941 = vsel %vm424, %v918, 0
    %v943 = vsel %vm424, %v920, 0
    %v945 = vsel %vm424, %v922, 0
    %v947 = vsel %vm424, %v924, 0
    %v949 = vsel %vm424, %v926, 0
    %v951 = vsel %vm424, %v928, 0
    %v953 = vsel %vm424, %v930, 0
    %955 = vmatprep.subr.mxu0 0.0
    %956 = vmatpush1.msra.mxu0 0.0
    %957 = vmatprep.subr.mxu0 0.0
    %958 = vmatpush1.msra.mxu0 0.0
    %959 = vmatprep.subr.mxu0 0.0
    %960 = vmatpush1.msra.mxu0 0.0
    %961 = vmatprep.subr.mxu0 0.0
    %962 = vmatpush1.msra.mxu0 0.0
    %963 = vmatprep.subr.mxu0 0.0
    %964 = vmatpush1.msra.mxu0 0.0
    %965 = vmatprep.subr.mxu0 0.0
    %966 = vmatpush1.msra.mxu0 0.0
    %967 = vmatprep.subr.mxu0 0.0
    %968 = vmatpush1.msra.mxu0 0.0
    %969 = vmatprep.subr.mxu0 0.0
    %970 = vmatpush1.msra.mxu0 0.0
    %971 = vmatprep.subr.mxu0 0.0
    %972 = vmatpush1.msra.mxu0 %v894
    %973 = vmatprep.subr.mxu0 0.0
    %974 = vmatpush1.msra.mxu0 %v893
    %975 = vmatprep.subr.mxu0 0.0
    %976 = vmatpush1.msra.mxu0 %v892
    %977 = vmatprep.subr.mxu0 0.0
    %978 = vmatpush1.msra.mxu0 %v891
    %979 = vmatprep.subr.mxu0 0.0
    %980 = vmatpush1.msra.mxu0 %v890
    %981 = vmatprep.subr.mxu0 0.0
    %982 = vmatpush1.msra.mxu0 %v889
    %983 = vmatprep.subr.mxu0 0.0
    %984 = vmatpush1.msra.mxu0 %v888
    %985 = vmatprep.subr.mxu0 0.0
    %986 = vmatpush1.msra.mxu0 %v887
    %987 = vmatprep.subr.mxu0 0.0
    %988 = vmatpush2.msra.mxu0 0.0
    %989 = vmatprep.subr.mxu0 0.0
    %990 = vmatpush2.msra.mxu0 0.0
    %991 = vmatprep.subr.mxu0 0.0
    %992 = vmatpush2.msra.mxu0 0.0
    %993 = vmatprep.subr.mxu0 0.0
    %994 = vmatpush2.msra.mxu0 0.0
    %995 = vmatprep.subr.mxu0 0.0
    %996 = vmatpush2.msra.mxu0 0.0
    %997 = vmatprep.subr.mxu0 0.0
    %998 = vmatpush2.msra.mxu0 0.0
    %999 = vmatprep.subr.mxu0 0.0
    %1000 = vmatpush2.msra.mxu0 0.0
    %1001 = vmatprep.subr.mxu0 0.0
    %1002 = vmatpush2.msra.mxu0 0.0
    %1003 = vmatprep.subr.mxu0 0.0
    %1004 = vmatpush2.msra.mxu0 0.0
    %1005 = vmatprep.subr.mxu0 0.0
    %1006 = vmatpush2.msra.mxu0 0.0
    %1007 = vmatprep.subr.mxu0 0.0
    %1008 = vmatpush2.msra.mxu0 0.0
    %1009 = vmatprep.subr.mxu0 0.0
    %1010 = vmatpush2.msra.mxu0 0.0
    %1011 = vmatprep.subr.mxu0 0.0
    %1012 = vmatpush2.msra.mxu0 0.0
    %1013 = vmatprep.subr.mxu0 0.0
    %1014 = vmatpush2.msra.mxu0 0.0
    %1015 = vmatprep.subr.mxu0 0.0
    %1016 = vmatpush2.msra.mxu0 0.0
    %1017 = vmatprep.subr.mxu0 0.0
    %1018 = vmatpush2.msra.mxu0 0.0
    %1019 = vmatprep.mubr.f32.mxu0 0.0
    %1020 = vmatmul.mubr.f32.gmra.mxu0 %v931
    %v1021 = vpop.f32.mrf.mxu0
    %v1022 = vadd.f32 0.0, %v1021
    %v1023 = vpop.f32.mrf.mxu0
    %1024 = vmatprep.mubr.f32.mxu0 0.0
    %1025 = vmatmul.mubr.f32.gmra.mxu0 %v933
    %v1026 = vpop.f32.mrf.mxu0
    %v1027 = vadd.f32 0.0, %v1026
    %v1028 = vpop.f32.mrf.mxu0
    %1029 = vmatprep.mubr.f32.mxu0 0.0
    %1030 = vmatmul.mubr.f32.gmra.mxu0 %v935
    %v1031 = vpop.f32.mrf.mxu0
    %v1032 = vadd.f32 0.0, %v1031
    %v1033 = vpop.f32.mrf.mxu0
    %1034 = vmatprep.mubr.f32.mxu0 0.0
    %1035 = vmatmul.mubr.f32.gmra.mxu0 %v937
    %v1036 = vpop.f32.mrf.mxu0
    %v1037 = vadd.f32 0.0, %v1036
    %v1038 = vpop.f32.mrf.mxu0
    %1039 = vmatprep.mubr.f32.mxu0 0.0
    %1040 = vmatmul.mubr.f32.gmra.mxu0 %v939
    %v1041 = vpop.f32.mrf.mxu0
    %v1042 = vadd.f32 0.0, %v1041
    %v1043 = vpop.f32.mrf.mxu0
    %1044 = vmatprep.mubr.f32.mxu0 0.0
    %1045 = vmatmul.mubr.f32.gmra.mxu0 %v941
    %v1046 = vpop.f32.mrf.mxu0
    %v1047 = vadd.f32 0.0, %v1046
    %v1048 = vpop.f32.mrf.mxu0
    %1049 = vmatprep.mubr.f32.mxu0 0.0
    %1050 = vmatmul.mubr.f32.gmra.mxu0 %v943
    %v1051 = vpop.f32.mrf.mxu0
    %v1052 = vadd.f32 0.0, %v1051
    %v1053 = vpop.f32.mrf.mxu0
    %1054 = vmatprep.mubr.f32.mxu0 0.0
    %1055 = vmatmul.mubr.f32.gmra.mxu0 %v945
    %v1056 = vpop.f32.mrf.mxu0
    %v1057 = vadd.f32 0.0, %v1056
    %v1058 = vpop.f32.mrf.mxu0
    %1059 = vmatprep.mubr.f32.mxu0 0.0
    %1060 = vmatmul.mubr.f32.gmra.mxu0 %v947
    %v1061 = vpop.f32.mrf.mxu0
    %v1062 = vadd.f32 0.0, %v1061
    %v1063 = vpop.f32.mrf.mxu0
    %1064 = vmatprep.mubr.f32.mxu0 0.0
    %1065 = vmatmul.mubr.f32.gmra.mxu0 %v949
    %v1066 = vpop.f32.mrf.mxu0
    %v1067 = vadd.f32 0.0, %v1066
    %v1068 = vpop.f32.mrf.mxu0
    %1069 = vmatprep.mubr.f32.mxu0 0.0
    %1070 = vmatmul.mubr.f32.gmra.mxu0 %v951
    %v1071 = vpop.f32.mrf.mxu0
    %v1072 = vadd.f32 0.0, %v1071
    %v1073 = vpop.f32.mrf.mxu0
    %1074 = vmatprep.mubr.f32.mxu0 0.0
    %1075 = vmatmul.mubr.f32.gmra.mxu0 %v953
    %v1076 = vpop.f32.mrf.mxu0
    %v1077 = vadd.f32 0.0, %v1076
    %v1078 = vpop.f32.mrf.mxu0
    %1079 = vdwg.mxu0
    %1092 = vrot.lane.b32.xlu0 %v1022, 32
    %v1093 = vpop.permute.xlu0 %1092
    %1094 = vrot.lane.b32.xlu0 %v1027, 32
    %v1095 = vpop.permute.xlu0 %1094
    %1096 = vrot.lane.b32.xlu0 %v1032, 32
    %v1097 = vpop.permute.xlu0 %1096
    %1098 = vrot.lane.b32.xlu0 %v1037, 32
    %v1099 = vpop.permute.xlu0 %1098
    %1100 = vrot.lane.b32.xlu0 %v1042, 32
    %v1101 = vpop.permute.xlu0 %1100
    %1102 = vrot.lane.b32.xlu0 %v1047, 32
    %v1103 = vpop.permute.xlu0 %1102
    %1104 = vrot.lane.b32.xlu0 %v1052, 32
    %v1105 = vpop.permute.xlu0 %1104
    %1106 = vrot.lane.b32.xlu0 %v1057, 32
    %v1107 = vpop.permute.xlu0 %1106
    %1108 = vrot.lane.b32.xlu0 %v1062, 32
    %v1109 = vpop.permute.xlu0 %1108
    %1110 = vrot.lane.b32.xlu0 %v1067, 32
    %v1111 = vpop.permute.xlu0 %1110
    %1112 = vrot.lane.b32.xlu0 %v1072, 32
    %v1113 = vpop.permute.xlu0 %1112
    %1114 = vrot.lane.b32.xlu0 %v1077, 32
    %v1115 = vpop.permute.xlu0 %1114
    %v1128 = vrcp.pop %v1093
    %v1129 = vmul.f32 %v864, %v1128
    %v1130 = vrcp.pop %v1095
    %v1131 = vmul.f32 %v866, %v1130
    %v1132 = vrcp.pop %v1097
    %v1133 = vmul.f32 %v868, %v1132
    %v1134 = vrcp.pop %v1099
    %v1135 = vmul.f32 %v870, %v1134
    %v1136 = vrcp.pop %v1101
    %v1137 = vmul.f32 %v872, %v1136
    %v1138 = vrcp.pop %v1103
    %v1139 = vmul.f32 %v874, %v1138
    %v1140 = vrcp.pop %v1105
    %v1141 = vmul.f32 %v876, %v1140
    %v1142 = vrcp.pop %v1107
    %v1143 = vmul.f32 %v878, %v1142
    %v1144 = vrcp.pop %v1109
    %v1145 = vmul.f32 %v880, %v1144
    %v1146 = vrcp.pop %v1111
    %v1147 = vmul.f32 %v882, %v1146
    %v1148 = vrcp.pop %v1113
    %v1149 = vmul.f32 %v884, %v1148
    %v1150 = vrcp.pop %v1115
    %v1151 = vmul.f32 %v886, %v1150
    %v1152 = vld [vmem:[%s7] sm:$0xff]
    %v1153 = vld [vmem:[%s7 + $0x8] sm:$0xff]
    %1156 = vrot.lane.b32.xlu0 %v1152, 32
    %v1157 = vpop.permute.xlu0 %1156
    %1158 = vrot.lane.b32.xlu0 %v1153, 32
    %v1159 = vpop.permute.xlu0 %1158
    %v1162 = vadd.f32 %v1129, %v1157
    %v1163 = vadd.f32 %v1131, %v1159
    %v1164 = vadd.f32 %v1133, %v1157
    %v1165 = vadd.f32 %v1135, %v1159
    %v1166 = vadd.f32 %v1137, %v1157
    %v1167 = vadd.f32 %v1139, %v1159
    %v1168 = vadd.f32 %v1141, %v1157
    %v1169 = vadd.f32 %v1143, %v1159
    %v1170 = vadd.f32 %v1145, %v1157
    %v1171 = vadd.f32 %v1147, %v1159
    %v1172 = vadd.f32 %v1149, %v1157
    %v1173 = vadd.f32 %v1151, %v1159
    %v1186 = vcombine.high %v175, %v175
    %v1188 = vunpack.c.l.s4 1966171168
    %v1189 = vunpack.c.0.s8 %v1188
    %v1190 = vlaneseq
    %v1191 = vshrl.u32 %v1190, 7
    %v1192 = vsub.s32 %v1189, %v1191
    %v1193 = vrot.slane %v175, %v1192
    %v1195 = vunpack.c.l.s4 1966171168
    %v1196 = vunpack.c.0.s8 %v1195
    %v1197 = vlaneseq
    %v1198 = vshrl.u32 %v1197, 7
    %v1199 = vsub.s32 %v1196, %v1198
    %v1200 = vrot.slane %v1186, %v1199
    %v1201 = vcombine.high %v1193, %v1193
    %v1202 = vcombine.high %v1200, %v1200
    %v1204 = vunpack.c.l.s4 1966171168
    %v1205 = vunpack.c.0.s8 %v1204
    %v1206 = vlaneseq
    %v1207 = vshrl.u32 %v1206, 7
    %v1208 = vsub.s32 %v1205, %v1207
    %v1209 = vrot.slane %v1193, %v1208
    %v1211 = vunpack.c.l.s4 1966171168
    %v1212 = vunpack.c.0.s8 %v1211
    %v1213 = vlaneseq
    %v1214 = vshrl.u32 %v1213, 7
    %v1215 = vsub.s32 %v1212, %v1214
    %v1216 = vrot.slane %v1200, %v1215
    %v1218 = vunpack.c.l.s4 1966171168
    %v1219 = vunpack.c.0.s8 %v1218
    %v1220 = vlaneseq
    %v1221 = vshrl.u32 %v1220, 7
    %v1222 = vsub.s32 %v1219, %v1221
    %v1223 = vrot.slane %v1201, %v1222
    %v1225 = vunpack.c.l.s4 1966171168
    %v1226 = vunpack.c.0.s8 %v1225
    %v1227 = vlaneseq
    %v1228 = vshrl.u32 %v1227, 7
    %v1229 = vsub.s32 %v1226, %v1228
    %v1230 = vrot.slane %v1202, %v1229
    %v1231 = vcombine.high %v1209, %v1209
    %v1232 = vcombine.high %v1216, %v1216
    %v1233 = vcombine.high %v1223, %v1223
    %v1234 = vcombine.high %v1230, %v1230
    %v1235 = vcombine.high %v181, %v181
    %v1237 = vunpack.c.l.s4 1966171168
    %v1238 = vunpack.c.0.s8 %v1237
    %v1239 = vlaneseq
    %v1240 = vshrl.u32 %v1239, 7
    %v1241 = vsub.s32 %v1238, %v1240
    %v1242 = vrot.slane %v181, %v1241
    %v1244 = vunpack.c.l.s4 1966171168
    %v1245 = vunpack.c.0.s8 %v1244
    %v1246 = vlaneseq
    %v1247 = vshrl.u32 %v1246, 7
    %v1248 = vsub.s32 %v1245, %v1247
    %v1249 = vrot.slane %v1235, %v1248
    %v1250 = vcombine.high %v1242, %v1242
    %v1251 = vcombine.high %v1249, %v1249
    %v1253 = vunpack.c.l.s4 1966171168
    %v1254 = vunpack.c.0.s8 %v1253
    %v1255 = vlaneseq
    %v1256 = vshrl.u32 %v1255, 7
    %v1257 = vsub.s32 %v1254, %v1256
    %v1258 = vrot.slane %v1242, %v1257
    %v1260 = vunpack.c.l.s4 1966171168
    %v1261 = vunpack.c.0.s8 %v1260
    %v1262 = vlaneseq
    %v1263 = vshrl.u32 %v1262, 7
    %v1264 = vsub.s32 %v1261, %v1263
    %v1265 = vrot.slane %v1249, %v1264
    %v1267 = vunpack.c.l.s4 1966171168
    %v1268 = vunpack.c.0.s8 %v1267
    %v1269 = vlaneseq
    %v1270 = vshrl.u32 %v1269, 7
    %v1271 = vsub.s32 %v1268, %v1270
    %v1272 = vrot.slane %v1250, %v1271
    %v1274 = vunpack.c.l.s4 1966171168
    %v1275 = vunpack.c.0.s8 %v1274
    %v1276 = vlaneseq
    %v1277 = vshrl.u32 %v1276, 7
    %v1278 = vsub.s32 %v1275, %v1277
    %v1279 = vrot.slane %v1251, %v1278
    %v1280 = vcombine.high %v1258, %v1258
    %v1281 = vcombine.high %v1265, %v1265
    %v1282 = vcombine.high %v1272, %v1272
    %v1283 = vcombine.high %v1279, %v1279
    %v1284 = vcombine.high %v187, %v187
    %v1286 = vunpack.c.l.s4 1966171168
    %v1287 = vunpack.c.0.s8 %v1286
    %v1288 = vlaneseq
    %v1289 = vshrl.u32 %v1288, 7
    %v1290 = vsub.s32 %v1287, %v1289
    %v1291 = vrot.slane %v187, %v1290
    %v1293 = vunpack.c.l.s4 1966171168
    %v1294 = vunpack.c.0.s8 %v1293
    %v1295 = vlaneseq
    %v1296 = vshrl.u32 %v1295, 7
    %v1297 = vsub.s32 %v1294, %v1296
    %v1298 = vrot.slane %v1284, %v1297
    %v1299 = vcombine.high %v1291, %v1291
    %v1300 = vcombine.high %v1298, %v1298
    %v1302 = vunpack.c.l.s4 1966171168
    %v1303 = vunpack.c.0.s8 %v1302
    %v1304 = vlaneseq
    %v1305 = vshrl.u32 %v1304, 7
    %v1306 = vsub.s32 %v1303, %v1305
    %v1307 = vrot.slane %v1291, %v1306
    %v1309 = vunpack.c.l.s4 1966171168
    %v1310 = vunpack.c.0.s8 %v1309
    %v1311 = vlaneseq
    %v1312 = vshrl.u32 %v1311, 7
    %v1313 = vsub.s32 %v1310, %v1312
    %v1314 = vrot.slane %v1298, %v1313
    %v1316 = vunpack.c.l.s4 1966171168
    %v1317 = vunpack.c.0.s8 %v1316
    %v1318 = vlaneseq
    %v1319 = vshrl.u32 %v1318, 7
    %v1320 = vsub.s32 %v1317, %v1319
    %v1321 = vrot.slane %v1299, %v1320
    %v1323 = vunpack.c.l.s4 1966171168
    %v1324 = vunpack.c.0.s8 %v1323
    %v1325 = vlaneseq
    %v1326 = vshrl.u32 %v1325, 7
    %v1327 = vsub.s32 %v1324, %v1326
    %v1328 = vrot.slane %v1300, %v1327
    %v1329 = vcombine.high %v1307, %v1307
    %v1330 = vcombine.high %v1314, %v1314
    %v1331 = vcombine.high %v1321, %v1321
    %v1332 = vcombine.high %v1328, %v1328
    %v1333 = vcombine.high %v193, %v193
    %v1335 = vunpack.c.l.s4 1966171168
    %v1336 = vunpack.c.0.s8 %v1335
    %v1337 = vlaneseq
    %v1338 = vshrl.u32 %v1337, 7
    %v1339 = vsub.s32 %v1336, %v1338
    %v1340 = vrot.slane %v193, %v1339
    %v1342 = vunpack.c.l.s4 1966171168
    %v1343 = vunpack.c.0.s8 %v1342
    %v1344 = vlaneseq
    %v1345 = vshrl.u32 %v1344, 7
    %v1346 = vsub.s32 %v1343, %v1345
    %v1347 = vrot.slane %v1333, %v1346
    %v1348 = vcombine.high %v1340, %v1340
    %v1349 = vcombine.high %v1347, %v1347
    %v1351 = vunpack.c.l.s4 1966171168
    %v1352 = vunpack.c.0.s8 %v1351
    %v1353 = vlaneseq
    %v1354 = vshrl.u32 %v1353, 7
    %v1355 = vsub.s32 %v1352, %v1354
    %v1356 = vrot.slane %v1340, %v1355
    %v1358 = vunpack.c.l.s4 1966171168
    %v1359 = vunpack.c.0.s8 %v1358
    %v1360 = vlaneseq
    %v1361 = vshrl.u32 %v1360, 7
    %v1362 = vsub.s32 %v1359, %v1361
    %v1363 = vrot.slane %v1347, %v1362
    %v1365 = vunpack.c.l.s4 1966171168
    %v1366 = vunpack.c.0.s8 %v1365
    %v1367 = vlaneseq
    %v1368 = vshrl.u32 %v1367, 7
    %v1369 = vsub.s32 %v1366, %v1368
    %v1370 = vrot.slane %v1348, %v1369
    %v1372 = vunpack.c.l.s4 1966171168
    %v1373 = vunpack.c.0.s8 %v1372
    %v1374 = vlaneseq
    %v1375 = vshrl.u32 %v1374, 7
    %v1376 = vsub.s32 %v1373, %v1375
    %v1377 = vrot.slane %v1349, %v1376
    %v1378 = vcombine.high %v1356, %v1356
    %v1379 = vcombine.high %v1363, %v1363
    %v1380 = vcombine.high %v1370, %v1370
    %v1381 = vcombine.high %v1377, %v1377
    %v1382 = vcombine.high %v199, %v199
    %v1384 = vunpack.c.l.s4 1966171168
    %v1385 = vunpack.c.0.s8 %v1384
    %v1386 = vlaneseq
    %v1387 = vshrl.u32 %v1386, 7
    %v1388 = vsub.s32 %v1385, %v1387
    %v1389 = vrot.slane %v199, %v1388
    %v1391 = vunpack.c.l.s4 1966171168
    %v1392 = vunpack.c.0.s8 %v1391
    %v1393 = vlaneseq
    %v1394 = vshrl.u32 %v1393, 7
    %v1395 = vsub.s32 %v1392, %v1394
    %v1396 = vrot.slane %v1382, %v1395
    %v1397 = vcombine.high %v1389, %v1389
    %v1398 = vcombine.high %v1396, %v1396
    %v1400 = vunpack.c.l.s4 1966171168
    %v1401 = vunpack.c.0.s8 %v1400
    %v1402 = vlaneseq
    %v1403 = vshrl.u32 %v1402, 7
    %v1404 = vsub.s32 %v1401, %v1403
    %v1405 = vrot.slane %v1389, %v1404
    %v1407 = vunpack.c.l.s4 1966171168
    %v1408 = vunpack.c.0.s8 %v1407
    %v1409 = vlaneseq
    %v1410 = vshrl.u32 %v1409, 7
    %v1411 = vsub.s32 %v1408, %v1410
    %v1412 = vrot.slane %v1396, %v1411
    %v1414 = vunpack.c.l.s4 1966171168
    %v1415 = vunpack.c.0.s8 %v1414
    %v1416 = vlaneseq
    %v1417 = vshrl.u32 %v1416, 7
    %v1418 = vsub.s32 %v1415, %v1417
    %v1419 = vrot.slane %v1397, %v1418
    %v1421 = vunpack.c.l.s4 1966171168
    %v1422 = vunpack.c.0.s8 %v1421
    %v1423 = vlaneseq
    %v1424 = vshrl.u32 %v1423, 7
    %v1425 = vsub.s32 %v1422, %v1424
    %v1426 = vrot.slane %v1398, %v1425
    %v1427 = vcombine.high %v1405, %v1405
    %v1428 = vcombine.high %v1412, %v1412
    %v1429 = vcombine.high %v1419, %v1419
    %v1430 = vcombine.high %v1426, %v1426
    %v1431 = vcombine.high %v205, %v205
    %v1433 = vunpack.c.l.s4 1966171168
    %v1434 = vunpack.c.0.s8 %v1433
    %v1435 = vlaneseq
    %v1436 = vshrl.u32 %v1435, 7
    %v1437 = vsub.s32 %v1434, %v1436
    %v1438 = vrot.slane %v205, %v1437
    %v1440 = vunpack.c.l.s4 1966171168
    %v1441 = vunpack.c.0.s8 %v1440
    %v1442 = vlaneseq
    %v1443 = vshrl.u32 %v1442, 7
    %v1444 = vsub.s32 %v1441, %v1443
    %v1445 = vrot.slane %v1431, %v1444
    %v1446 = vcombine.high %v1438, %v1438
    %v1447 = vcombine.high %v1445, %v1445
    %v1449 = vunpack.c.l.s4 1966171168
    %v1450 = vunpack.c.0.s8 %v1449
    %v1451 = vlaneseq
    %v1452 = vshrl.u32 %v1451, 7
    %v1453 = vsub.s32 %v1450, %v1452
    %v1454 = vrot.slane %v1438, %v1453
    %v1456 = vunpack.c.l.s4 1966171168
    %v1457 = vunpack.c.0.s8 %v1456
    %v1458 = vlaneseq
    %v1459 = vshrl.u32 %v1458, 7
    %v1460 = vsub.s32 %v1457, %v1459
    %v1461 = vrot.slane %v1445, %v1460
    %v1463 = vunpack.c.l.s4 1966171168
    %v1464 = vunpack.c.0.s8 %v1463
    %v1465 = vlaneseq
    %v1466 = vshrl.u32 %v1465, 7
    %v1467 = vsub.s32 %v1464, %v1466
    %v1468 = vrot.slane %v1446, %v1467
    %v1470 = vunpack.c.l.s4 1966171168
    %v1471 = vunpack.c.0.s8 %v1470
    %v1472 = vlaneseq
    %v1473 = vshrl.u32 %v1472, 7
    %v1474 = vsub.s32 %v1471, %v1473
    %v1475 = vrot.slane %v1447, %v1474
    %v1476 = vcombine.high %v1454, %v1454
    %v1477 = vcombine.high %v1461, %v1461
    %v1478 = vcombine.high %v1468, %v1468
    %v1479 = vcombine.high %v1475, %v1475
    %v1480 = vcombine.high %v211, %v211
    %v1482 = vunpack.c.l.s4 1966171168
    %v1483 = vunpack.c.0.s8 %v1482
    %v1484 = vlaneseq
    %v1485 = vshrl.u32 %v1484, 7
    %v1486 = vsub.s32 %v1483, %v1485
    %v1487 = vrot.slane %v211, %v1486
    %v1489 = vunpack.c.l.s4 1966171168
    %v1490 = vunpack.c.0.s8 %v1489
    %v1491 = vlaneseq
    %v1492 = vshrl.u32 %v1491, 7
    %v1493 = vsub.s32 %v1490, %v1492
    %v1494 = vrot.slane %v1480, %v1493
    %v1495 = vcombine.high %v1487, %v1487
    %v1496 = vcombine.high %v1494, %v1494
    %v1498 = vunpack.c.l.s4 1966171168
    %v1499 = vunpack.c.0.s8 %v1498
    %v1500 = vlaneseq
    %v1501 = vshrl.u32 %v1500, 7
    %v1502 = vsub.s32 %v1499, %v1501
    %v1503 = vrot.slane %v1487, %v1502
    %v1505 = vunpack.c.l.s4 1966171168
    %v1506 = vunpack.c.0.s8 %v1505
    %v1507 = vlaneseq
    %v1508 = vshrl.u32 %v1507, 7
    %v1509 = vsub.s32 %v1506, %v1508
    %v1510 = vrot.slane %v1494, %v1509
    %v1512 = vunpack.c.l.s4 1966171168
    %v1513 = vunpack.c.0.s8 %v1512
    %v1514 = vlaneseq
    %v1515 = vshrl.u32 %v1514, 7
    %v1516 = vsub.s32 %v1513, %v1515
    %v1517 = vrot.slane %v1495, %v1516
    %v1519 = vunpack.c.l.s4 1966171168
    %v1520 = vunpack.c.0.s8 %v1519
    %v1521 = vlaneseq
    %v1522 = vshrl.u32 %v1521, 7
    %v1523 = vsub.s32 %v1520, %v1522
    %v1524 = vrot.slane %v1496, %v1523
    %v1525 = vcombine.high %v1503, %v1503
    %v1526 = vcombine.high %v1510, %v1510
    %v1527 = vcombine.high %v1517, %v1517
    %v1528 = vcombine.high %v1524, %v1524
    %v1529 = vcombine.high %v217, %v217
    %v1531 = vunpack.c.l.s4 1966171168
    %v1532 = vunpack.c.0.s8 %v1531
    %v1533 = vlaneseq
    %v1534 = vshrl.u32 %v1533, 7
    %v1535 = vsub.s32 %v1532, %v1534
    %v1536 = vrot.slane %v217, %v1535
    %v1538 = vunpack.c.l.s4 1966171168
    %v1539 = vunpack.c.0.s8 %v1538
    %v1540 = vlaneseq
    %v1541 = vshrl.u32 %v1540, 7
    %v1542 = vsub.s32 %v1539, %v1541
    %v1543 = vrot.slane %v1529, %v1542
    %v1544 = vcombine.high %v1536, %v1536
    %v1545 = vcombine.high %v1543, %v1543
    %v1547 = vunpack.c.l.s4 1966171168
    %v1548 = vunpack.c.0.s8 %v1547
    %v1549 = vlaneseq
    %v1550 = vshrl.u32 %v1549, 7
    %v1551 = vsub.s32 %v1548, %v1550
    %v1552 = vrot.slane %v1536, %v1551
    %v1554 = vunpack.c.l.s4 1966171168
    %v1555 = vunpack.c.0.s8 %v1554
    %v1556 = vlaneseq
    %v1557 = vshrl.u32 %v1556, 7
    %v1558 = vsub.s32 %v1555, %v1557
    %v1559 = vrot.slane %v1543, %v1558
    %v1561 = vunpack.c.l.s4 1966171168
    %v1562 = vunpack.c.0.s8 %v1561
    %v1563 = vlaneseq
    %v1564 = vshrl.u32 %v1563, 7
    %v1565 = vsub.s32 %v1562, %v1564
    %v1566 = vrot.slane %v1544, %v1565
    %v1568 = vunpack.c.l.s4 1966171168
    %v1569 = vunpack.c.0.s8 %v1568
    %v1570 = vlaneseq
    %v1571 = vshrl.u32 %v1570, 7
    %v1572 = vsub.s32 %v1569, %v1571
    %v1573 = vrot.slane %v1545, %v1572
    %v1574 = vcombine.high %v1552, %v1552
    %v1575 = vcombine.high %v1559, %v1559
    %v1576 = vcombine.high %v1566, %v1566
    %v1577 = vcombine.high %v1573, %v1573
    %v1578 = vcombine.high %v223, %v223
    %v1580 = vunpack.c.l.s4 1966171168
    %v1581 = vunpack.c.0.s8 %v1580
    %v1582 = vlaneseq
    %v1583 = vshrl.u32 %v1582, 7
    %v1584 = vsub.s32 %v1581, %v1583
    %v1585 = vrot.slane %v223, %v1584
    %v1587 = vunpack.c.l.s4 1966171168
    %v1588 = vunpack.c.0.s8 %v1587
    %v1589 = vlaneseq
    %v1590 = vshrl.u32 %v1589, 7
    %v1591 = vsub.s32 %v1588, %v1590
    %v1592 = vrot.slane %v1578, %v1591
    %v1593 = vcombine.high %v1585, %v1585
    %v1594 = vcombine.high %v1592, %v1592
    %v1596 = vunpack.c.l.s4 1966171168
    %v1597 = vunpack.c.0.s8 %v1596
    %v1598 = vlaneseq
    %v1599 = vshrl.u32 %v1598, 7
    %v1600 = vsub.s32 %v1597, %v1599
    %v1601 = vrot.slane %v1585, %v1600
    %v1603 = vunpack.c.l.s4 1966171168
    %v1604 = vunpack.c.0.s8 %v1603
    %v1605 = vlaneseq
    %v1606 = vshrl.u32 %v1605, 7
    %v1607 = vsub.s32 %v1604, %v1606
    %v1608 = vrot.slane %v1592, %v1607
    %v1610 = vunpack.c.l.s4 1966171168
    %v1611 = vunpack.c.0.s8 %v1610
    %v1612 = vlaneseq
    %v1613 = vshrl.u32 %v1612, 7
    %v1614 = vsub.s32 %v1611, %v1613
    %v1615 = vrot.slane %v1593, %v1614
    %v1617 = vunpack.c.l.s4 1966171168
    %v1618 = vunpack.c.0.s8 %v1617
    %v1619 = vlaneseq
    %v1620 = vshrl.u32 %v1619, 7
    %v1621 = vsub.s32 %v1618, %v1620
    %v1622 = vrot.slane %v1594, %v1621
    %v1623 = vcombine.high %v1601, %v1601
    %v1624 = vcombine.high %v1608, %v1608
    %v1625 = vcombine.high %v1615, %v1615
    %v1626 = vcombine.high %v1622, %v1622
    %v1627 = vcombine.high %v229, %v229
    %v1629 = vunpack.c.l.s4 1966171168
    %v1630 = vunpack.c.0.s8 %v1629
    %v1631 = vlaneseq
    %v1632 = vshrl.u32 %v1631, 7
    %v1633 = vsub.s32 %v1630, %v1632
    %v1634 = vrot.slane %v229, %v1633
    %v1636 = vunpack.c.l.s4 1966171168
    %v1637 = vunpack.c.0.s8 %v1636
    %v1638 = vlaneseq
    %v1639 = vshrl.u32 %v1638, 7
    %v1640 = vsub.s32 %v1637, %v1639
    %v1641 = vrot.slane %v1627, %v1640
    %v1642 = vcombine.high %v1634, %v1634
    %v1643 = vcombine.high %v1641, %v1641
    %v1645 = vunpack.c.l.s4 1966171168
    %v1646 = vunpack.c.0.s8 %v1645
    %v1647 = vlaneseq
    %v1648 = vshrl.u32 %v1647, 7
    %v1649 = vsub.s32 %v1646, %v1648
    %v1650 = vrot.slane %v1634, %v1649
    %v1652 = vunpack.c.l.s4 1966171168
    %v1653 = vunpack.c.0.s8 %v1652
    %v1654 = vlaneseq
    %v1655 = vshrl.u32 %v1654, 7
    %v1656 = vsub.s32 %v1653, %v1655
    %v1657 = vrot.slane %v1641, %v1656
    %v1659 = vunpack.c.l.s4 1966171168
    %v1660 = vunpack.c.0.s8 %v1659
    %v1661 = vlaneseq
    %v1662 = vshrl.u32 %v1661, 7
    %v1663 = vsub.s32 %v1660, %v1662
    %v1664 = vrot.slane %v1642, %v1663
    %v1666 = vunpack.c.l.s4 1966171168
    %v1667 = vunpack.c.0.s8 %v1666
    %v1668 = vlaneseq
    %v1669 = vshrl.u32 %v1668, 7
    %v1670 = vsub.s32 %v1667, %v1669
    %v1671 = vrot.slane %v1643, %v1670
    %v1672 = vcombine.high %v1650, %v1650
    %v1673 = vcombine.high %v1657, %v1657
    %v1674 = vcombine.high %v1664, %v1664
    %v1675 = vcombine.high %v1671, %v1671
    %v1676 = vcombine.high %v235, %v235
    %v1678 = vunpack.c.l.s4 1966171168
    %v1679 = vunpack.c.0.s8 %v1678
    %v1680 = vlaneseq
    %v1681 = vshrl.u32 %v1680, 7
    %v1682 = vsub.s32 %v1679, %v1681
    %v1683 = vrot.slane %v235, %v1682
    %v1685 = vunpack.c.l.s4 1966171168
    %v1686 = vunpack.c.0.s8 %v1685
    %v1687 = vlaneseq
    %v1688 = vshrl.u32 %v1687, 7
    %v1689 = vsub.s32 %v1686, %v1688
    %v1690 = vrot.slane %v1676, %v1689
    %v1691 = vcombine.high %v1683, %v1683
    %v1692 = vcombine.high %v1690, %v1690
    %v1694 = vunpack.c.l.s4 1966171168
    %v1695 = vunpack.c.0.s8 %v1694
    %v1696 = vlaneseq
    %v1697 = vshrl.u32 %v1696, 7
    %v1698 = vsub.s32 %v1695, %v1697
    %v1699 = vrot.slane %v1683, %v1698
    %v1701 = vunpack.c.l.s4 1966171168
    %v1702 = vunpack.c.0.s8 %v1701
    %v1703 = vlaneseq
    %v1704 = vshrl.u32 %v1703, 7
    %v1705 = vsub.s32 %v1702, %v1704
    %v1706 = vrot.slane %v1690, %v1705
    %v1708 = vunpack.c.l.s4 1966171168
    %v1709 = vunpack.c.0.s8 %v1708
    %v1710 = vlaneseq
    %v1711 = vshrl.u32 %v1710, 7
    %v1712 = vsub.s32 %v1709, %v1711
    %v1713 = vrot.slane %v1691, %v1712
    %v1715 = vunpack.c.l.s4 1966171168
    %v1716 = vunpack.c.0.s8 %v1715
    %v1717 = vlaneseq
    %v1718 = vshrl.u32 %v1717, 7
    %v1719 = vsub.s32 %v1716, %v1718
    %v1720 = vrot.slane %v1692, %v1719
    %v1721 = vcombine.high %v1699, %v1699
    %v1722 = vcombine.high %v1706, %v1706
    %v1723 = vcombine.high %v1713, %v1713
    %v1724 = vcombine.high %v1720, %v1720
    %v1725 = vcombine.high %v241, %v241
    %v1727 = vunpack.c.l.s4 1966171168
    %v1728 = vunpack.c.0.s8 %v1727
    %v1729 = vlaneseq
    %v1730 = vshrl.u32 %v1729, 7
    %v1731 = vsub.s32 %v1728, %v1730
    %v1732 = vrot.slane %v241, %v1731
    %v1734 = vunpack.c.l.s4 1966171168
    %v1735 = vunpack.c.0.s8 %v1734
    %v1736 = vlaneseq
    %v1737 = vshrl.u32 %v1736, 7
    %v1738 = vsub.s32 %v1735, %v1737
    %v1739 = vrot.slane %v1725, %v1738
    %v1740 = vcombine.high %v1732, %v1732
    %v1741 = vcombine.high %v1739, %v1739
    %v1743 = vunpack.c.l.s4 1966171168
    %v1744 = vunpack.c.0.s8 %v1743
    %v1745 = vlaneseq
    %v1746 = vshrl.u32 %v1745, 7
    %v1747 = vsub.s32 %v1744, %v1746
    %v1748 = vrot.slane %v1732, %v1747
    %v1750 = vunpack.c.l.s4 1966171168
    %v1751 = vunpack.c.0.s8 %v1750
    %v1752 = vlaneseq
    %v1753 = vshrl.u32 %v1752, 7
    %v1754 = vsub.s32 %v1751, %v1753
    %v1755 = vrot.slane %v1739, %v1754
    %v1757 = vunpack.c.l.s4 1966171168
    %v1758 = vunpack.c.0.s8 %v1757
    %v1759 = vlaneseq
    %v1760 = vshrl.u32 %v1759, 7
    %v1761 = vsub.s32 %v1758, %v1760
    %v1762 = vrot.slane %v1740, %v1761
    %v1764 = vunpack.c.l.s4 1966171168
    %v1765 = vunpack.c.0.s8 %v1764
    %v1766 = vlaneseq
    %v1767 = vshrl.u32 %v1766, 7
    %v1768 = vsub.s32 %v1765, %v1767
    %v1769 = vrot.slane %v1741, %v1768
    %v1770 = vcombine.high %v1748, %v1748
    %v1771 = vcombine.high %v1755, %v1755
    %v1772 = vcombine.high %v1762, %v1762
    %v1773 = vcombine.high %v1769, %v1769
    %v1774 = vlaneseq
    %v1775 = vshrl.u32 %v1774, 7
    %v1776 = vsub.s32 0, %v1775
    %v1777 = vrot.slane %v1209, %v1776
    %v1778 = vlaneseq
    %v1779 = vshrl.u32 %v1778, 7
    %v1780 = vsub.s32 0, %v1779
    %v1781 = vrot.slane %v1223, %v1780
    %v1782 = vlaneseq
    %v1783 = vshrl.u32 %v1782, 7
    %v1784 = vsub.s32 0, %v1783
    %v1785 = vrot.slane %v1231, %v1784
    %v1786 = vlaneseq
    %v1787 = vshrl.u32 %v1786, 7
    %v1788 = vsub.s32 0, %v1787
    %v1789 = vrot.slane %v1233, %v1788
    %v1790 = vlaneseq
    %v1791 = vshrl.u32 %v1790, 7
    %v1792 = vsub.s32 0, %v1791
    %v1793 = vrot.slane %v1216, %v1792
    %v1794 = vlaneseq
    %v1795 = vshrl.u32 %v1794, 7
    %v1796 = vsub.s32 0, %v1795
    %v1797 = vrot.slane %v1230, %v1796
    %v1798 = vlaneseq
    %v1799 = vshrl.u32 %v1798, 7
    %v1800 = vsub.s32 0, %v1799
    %v1801 = vrot.slane %v1232, %v1800
    %v1802 = vlaneseq
    %v1803 = vshrl.u32 %v1802, 7
    %v1804 = vsub.s32 0, %v1803
    %v1805 = vrot.slane %v1234, %v1804
    %v1806 = vlaneseq
    %v1807 = vshrl.u32 %v1806, 7
    %v1808 = vsub.s32 0, %v1807
    %v1809 = vrot.slane %v1258, %v1808
    %v1810 = vlaneseq
    %v1811 = vshrl.u32 %v1810, 7
    %v1812 = vsub.s32 0, %v1811
    %v1813 = vrot.slane %v1272, %v1812
    %v1814 = vlaneseq
    %v1815 = vshrl.u32 %v1814, 7
    %v1816 = vsub.s32 0, %v1815
    %v1817 = vrot.slane %v1280, %v1816
    %v1818 = vlaneseq
    %v1819 = vshrl.u32 %v1818, 7
    %v1820 = vsub.s32 0, %v1819
    %v1821 = vrot.slane %v1282, %v1820
    %v1822 = vlaneseq
    %v1823 = vshrl.u32 %v1822, 7
    %v1824 = vsub.s32 0, %v1823
    %v1825 = vrot.slane %v1265, %v1824
    %v1826 = vlaneseq
    %v1827 = vshrl.u32 %v1826, 7
    %v1828 = vsub.s32 0, %v1827
    %v1829 = vrot.slane %v1279, %v1828
    %v1830 = vlaneseq
    %v1831 = vshrl.u32 %v1830, 7
    %v1832 = vsub.s32 0, %v1831
    %v1833 = vrot.slane %v1281, %v1832
    %v1834 = vlaneseq
    %v1835 = vshrl.u32 %v1834, 7
    %v1836 = vsub.s32 0, %v1835
    %v1837 = vrot.slane %v1283, %v1836
    %v1838 = vlaneseq
    %v1839 = vshrl.u32 %v1838, 7
    %v1840 = vsub.s32 0, %v1839
    %v1841 = vrot.slane %v1307, %v1840
    %v1842 = vlaneseq
    %v1843 = vshrl.u32 %v1842, 7
    %v1844 = vsub.s32 0, %v1843
    %v1845 = vrot.slane %v1321, %v1844
    %v1846 = vlaneseq
    %v1847 = vshrl.u32 %v1846, 7
    %v1848 = vsub.s32 0, %v1847
    %v1849 = vrot.slane %v1329, %v1848
    %v1850 = vlaneseq
    %v1851 = vshrl.u32 %v1850, 7
    %v1852 = vsub.s32 0, %v1851
    %v1853 = vrot.slane %v1331, %v1852
    %v1854 = vlaneseq
    %v1855 = vshrl.u32 %v1854, 7
    %v1856 = vsub.s32 0, %v1855
    %v1857 = vrot.slane %v1314, %v1856
    %v1858 = vlaneseq
    %v1859 = vshrl.u32 %v1858, 7
    %v1860 = vsub.s32 0, %v1859
    %v1861 = vrot.slane %v1328, %v1860
    %v1862 = vlaneseq
    %v1863 = vshrl.u32 %v1862, 7
    %v1864 = vsub.s32 0, %v1863
    %v1865 = vrot.slane %v1330, %v1864
    %v1866 = vlaneseq
    %v1867 = vshrl.u32 %v1866, 7
    %v1868 = vsub.s32 0, %v1867
    %v1869 = vrot.slane %v1332, %v1868
    %v1870 = vlaneseq
    %v1871 = vshrl.u32 %v1870, 7
    %v1872 = vsub.s32 0, %v1871
    %v1873 = vrot.slane %v1356, %v1872
    %v1874 = vlaneseq
    %v1875 = vshrl.u32 %v1874, 7
    %v1876 = vsub.s32 0, %v1875
    %v1877 = vrot.slane %v1370, %v1876
    %v1878 = vlaneseq
    %v1879 = vshrl.u32 %v1878, 7
    %v1880 = vsub.s32 0, %v1879
    %v1881 = vrot.slane %v1378, %v1880
    %v1882 = vlaneseq
    %v1883 = vshrl.u32 %v1882, 7
    %v1884 = vsub.s32 0, %v1883
    %v1885 = vrot.slane %v1380, %v1884
    %v1886 = vlaneseq
    %v1887 = vshrl.u32 %v1886, 7
    %v1888 = vsub.s32 0, %v1887
    %v1889 = vrot.slane %v1363, %v1888
    %v1890 = vlaneseq
    %v1891 = vshrl.u32 %v1890, 7
    %v1892 = vsub.s32 0, %v1891
    %v1893 = vrot.slane %v1377, %v1892
    %v1894 = vlaneseq
    %v1895 = vshrl.u32 %v1894, 7
    %v1896 = vsub.s32 0, %v1895
    %v1897 = vrot.slane %v1379, %v1896
    %v1898 = vlaneseq
    %v1899 = vshrl.u32 %v1898, 7
    %v1900 = vsub.s32 0, %v1899
    %v1901 = vrot.slane %v1381, %v1900
    %v1902 = vlaneseq
    %v1903 = vshrl.u32 %v1902, 7
    %v1904 = vsub.s32 0, %v1903
    %v1905 = vrot.slane %v1405, %v1904
    %v1906 = vlaneseq
    %v1907 = vshrl.u32 %v1906, 7
    %v1908 = vsub.s32 0, %v1907
    %v1909 = vrot.slane %v1419, %v1908
    %v1910 = vlaneseq
    %v1911 = vshrl.u32 %v1910, 7
    %v1912 = vsub.s32 0, %v1911
    %v1913 = vrot.slane %v1427, %v1912
    %v1914 = vlaneseq
    %v1915 = vshrl.u32 %v1914, 7
    %v1916 = vsub.s32 0, %v1915
    %v1917 = vrot.slane %v1429, %v1916
    %v1918 = vlaneseq
    %v1919 = vshrl.u32 %v1918, 7
    %v1920 = vsub.s32 0, %v1919
    %v1921 = vrot.slane %v1412, %v1920
    %v1922 = vlaneseq
    %v1923 = vshrl.u32 %v1922, 7
    %v1924 = vsub.s32 0, %v1923
    %v1925 = vrot.slane %v1426, %v1924
    %v1926 = vlaneseq
    %v1927 = vshrl.u32 %v1926, 7
    %v1928 = vsub.s32 0, %v1927
    %v1929 = vrot.slane %v1428, %v1928
    %v1930 = vlaneseq
    %v1931 = vshrl.u32 %v1930, 7
    %v1932 = vsub.s32 0, %v1931
    %v1933 = vrot.slane %v1430, %v1932
    %v1934 = vlaneseq
    %v1935 = vshrl.u32 %v1934, 7
    %v1936 = vsub.s32 0, %v1935
    %v1937 = vrot.slane %v1454, %v1936
    %v1938 = vlaneseq
    %v1939 = vshrl.u32 %v1938, 7
    %v1940 = vsub.s32 0, %v1939
    %v1941 = vrot.slane %v1468, %v1940
    %v1942 = vlaneseq
    %v1943 = vshrl.u32 %v1942, 7
    %v1944 = vsub.s32 0, %v1943
    %v1945 = vrot.slane %v1476, %v1944
    %v1946 = vlaneseq
    %v1947 = vshrl.u32 %v1946, 7
    %v1948 = vsub.s32 0, %v1947
    %v1949 = vrot.slane %v1478, %v1948
    %v1950 = vlaneseq
    %v1951 = vshrl.u32 %v1950, 7
    %v1952 = vsub.s32 0, %v1951
    %v1953 = vrot.slane %v1461, %v1952
    %v1954 = vlaneseq
    %v1955 = vshrl.u32 %v1954, 7
    %v1956 = vsub.s32 0, %v1955
    %v1957 = vrot.slane %v1475, %v1956
    %v1958 = vlaneseq
    %v1959 = vshrl.u32 %v1958, 7
    %v1960 = vsub.s32 0, %v1959
    %v1961 = vrot.slane %v1477, %v1960
    %v1962 = vlaneseq
    %v1963 = vshrl.u32 %v1962, 7
    %v1964 = vsub.s32 0, %v1963
    %v1965 = vrot.slane %v1479, %v1964
    %v1966 = vlaneseq
    %v1967 = vshrl.u32 %v1966, 7
    %v1968 = vsub.s32 0, %v1967
    %v1969 = vrot.slane %v1503, %v1968
    %v1970 = vlaneseq
    %v1971 = vshrl.u32 %v1970, 7
    %v1972 = vsub.s32 0, %v1971
    %v1973 = vrot.slane %v1517, %v1972
    %v1974 = vlaneseq
    %v1975 = vshrl.u32 %v1974, 7
    %v1976 = vsub.s32 0, %v1975
    %v1977 = vrot.slane %v1525, %v1976
    %v1978 = vlaneseq
    %v1979 = vshrl.u32 %v1978, 7
    %v1980 = vsub.s32 0, %v1979
    %v1981 = vrot.slane %v1527, %v1980
    %v1982 = vlaneseq
    %v1983 = vshrl.u32 %v1982, 7
    %v1984 = vsub.s32 0, %v1983
    %v1985 = vrot.slane %v1510, %v1984
    %v1986 = vlaneseq
    %v1987 = vshrl.u32 %v1986, 7
    %v1988 = vsub.s32 0, %v1987
    %v1989 = vrot.slane %v1524, %v1988
    %v1990 = vlaneseq
    %v1991 = vshrl.u32 %v1990, 7
    %v1992 = vsub.s32 0, %v1991
    %v1993 = vrot.slane %v1526, %v1992
    %v1994 = vlaneseq
    %v1995 = vshrl.u32 %v1994, 7
    %v1996 = vsub.s32 0, %v1995
    %v1997 = vrot.slane %v1528, %v1996
    %v1998 = vlaneseq
    %v1999 = vshrl.u32 %v1998, 7
    %v2000 = vsub.s32 0, %v1999
    %v2001 = vrot.slane %v1552, %v2000
    %v2002 = vlaneseq
    %v2003 = vshrl.u32 %v2002, 7
    %v2004 = vsub.s32 0, %v2003
    %v2005 = vrot.slane %v1566, %v2004
    %v2006 = vlaneseq
    %v2007 = vshrl.u32 %v2006, 7
    %v2008 = vsub.s32 0, %v2007
    %v2009 = vrot.slane %v1574, %v2008
    %v2010 = vlaneseq
    %v2011 = vshrl.u32 %v2010, 7
    %v2012 = vsub.s32 0, %v2011
    %v2013 = vrot.slane %v1576, %v2012
    %v2014 = vlaneseq
    %v2015 = vshrl.u32 %v2014, 7
    %v2016 = vsub.s32 0, %v2015
    %v2017 = vrot.slane %v1559, %v2016
    %v2018 = vlaneseq
    %v2019 = vshrl.u32 %v2018, 7
    %v2020 = vsub.s32 0, %v2019
    %v2021 = vrot.slane %v1573, %v2020
    %v2022 = vlaneseq
    %v2023 = vshrl.u32 %v2022, 7
    %v2024 = vsub.s32 0, %v2023
    %v2025 = vrot.slane %v1575, %v2024
    %v2026 = vlaneseq
    %v2027 = vshrl.u32 %v2026, 7
    %v2028 = vsub.s32 0, %v2027
    %v2029 = vrot.slane %v1577, %v2028
    %v2030 = vlaneseq
    %v2031 = vshrl.u32 %v2030, 7
    %v2032 = vsub.s32 0, %v2031
    %v2033 = vrot.slane %v1601, %v2032
    %v2034 = vlaneseq
    %v2035 = vshrl.u32 %v2034, 7
    %v2036 = vsub.s32 0, %v2035
    %v2037 = vrot.slane %v1615, %v2036
    %v2038 = vlaneseq
    %v2039 = vshrl.u32 %v2038, 7
    %v2040 = vsub.s32 0, %v2039
    %v2041 = vrot.slane %v1623, %v2040
    %v2042 = vlaneseq
    %v2043 = vshrl.u32 %v2042, 7
    %v2044 = vsub.s32 0, %v2043
    %v2045 = vrot.slane %v1625, %v2044
    %v2046 = vlaneseq
    %v2047 = vshrl.u32 %v2046, 7
    %v2048 = vsub.s32 0, %v2047
    %v2049 = vrot.slane %v1608, %v2048
    %v2050 = vlaneseq
    %v2051 = vshrl.u32 %v2050, 7
    %v2052 = vsub.s32 0, %v2051
    %v2053 = vrot.slane %v1622, %v2052
    %v2054 = vlaneseq
    %v2055 = vshrl.u32 %v2054, 7
    %v2056 = vsub.s32 0, %v2055
    %v2057 = vrot.slane %v1624, %v2056
    %v2058 = vlaneseq
    %v2059 = vshrl.u32 %v2058, 7
    %v2060 = vsub.s32 0, %v2059
    %v2061 = vrot.slane %v1626, %v2060
    %v2062 = vlaneseq
    %v2063 = vshrl.u32 %v2062, 7
    %v2064 = vsub.s32 0, %v2063
    %v2065 = vrot.slane %v1650, %v2064
    %v2066 = vlaneseq
    %v2067 = vshrl.u32 %v2066, 7
    %v2068 = vsub.s32 0, %v2067
    %v2069 = vrot.slane %v1664, %v2068
    %v2070 = vlaneseq
    %v2071 = vshrl.u32 %v2070, 7
    %v2072 = vsub.s32 0, %v2071
    %v2073 = vrot.slane %v1672, %v2072
    %v2074 = vlaneseq
    %v2075 = vshrl.u32 %v2074, 7
    %v2076 = vsub.s32 0, %v2075
    %v2077 = vrot.slane %v1674, %v2076
    %v2078 = vlaneseq
    %v2079 = vshrl.u32 %v2078, 7
    %v2080 = vsub.s32 0, %v2079
    %v2081 = vrot.slane %v1657, %v2080
    %v2082 = vlaneseq
    %v2083 = vshrl.u32 %v2082, 7
    %v2084 = vsub.s32 0, %v2083
    %v2085 = vrot.slane %v1671, %v2084
    %v2086 = vlaneseq
    %v2087 = vshrl.u32 %v2086, 7
    %v2088 = vsub.s32 0, %v2087
    %v2089 = vrot.slane %v1673, %v2088
    %v2090 = vlaneseq
    %v2091 = vshrl.u32 %v2090, 7
    %v2092 = vsub.s32 0, %v2091
    %v2093 = vrot.slane %v1675, %v2092
    %v2094 = vlaneseq
    %v2095 = vshrl.u32 %v2094, 7
    %v2096 = vsub.s32 0, %v2095
    %v2097 = vrot.slane %v1699, %v2096
    %v2098 = vlaneseq
    %v2099 = vshrl.u32 %v2098, 7
    %v2100 = vsub.s32 0, %v2099
    %v2101 = vrot.slane %v1713, %v2100
    %v2102 = vlaneseq
    %v2103 = vshrl.u32 %v2102, 7
    %v2104 = vsub.s32 0, %v2103
    %v2105 = vrot.slane %v1721, %v2104
    %v2106 = vlaneseq
    %v2107 = vshrl.u32 %v2106, 7
    %v2108 = vsub.s32 0, %v2107
    %v2109 = vrot.slane %v1723, %v2108
    %v2110 = vlaneseq
    %v2111 = vshrl.u32 %v2110, 7
    %v2112 = vsub.s32 0, %v2111
    %v2113 = vrot.slane %v1706, %v2112
    %v2114 = vlaneseq
    %v2115 = vshrl.u32 %v2114, 7
    %v2116 = vsub.s32 0, %v2115
    %v2117 = vrot.slane %v1720, %v2116
    %v2118 = vlaneseq
    %v2119 = vshrl.u32 %v2118, 7
    %v2120 = vsub.s32 0, %v2119
    %v2121 = vrot.slane %v1722, %v2120
    %v2122 = vlaneseq
    %v2123 = vshrl.u32 %v2122, 7
    %v2124 = vsub.s32 0, %v2123
    %v2125 = vrot.slane %v1724, %v2124
    %v2126 = vlaneseq
    %v2127 = vshrl.u32 %v2126, 7
    %v2128 = vsub.s32 0, %v2127
    %v2129 = vrot.slane %v1748, %v2128
    %v2130 = vlaneseq
    %v2131 = vshrl.u32 %v2130, 7
    %v2132 = vsub.s32 0, %v2131
    %v2133 = vrot.slane %v1762, %v2132
    %v2134 = vlaneseq
    %v2135 = vshrl.u32 %v2134, 7
    %v2136 = vsub.s32 0, %v2135
    %v2137 = vrot.slane %v1770, %v2136
    %v2138 = vlaneseq
    %v2139 = vshrl.u32 %v2138, 7
    %v2140 = vsub.s32 0, %v2139
    %v2141 = vrot.slane %v1772, %v2140
    %v2142 = vlaneseq
    %v2143 = vshrl.u32 %v2142, 7
    %v2144 = vsub.s32 0, %v2143
    %v2145 = vrot.slane %v1755, %v2144
    %v2146 = vlaneseq
    %v2147 = vshrl.u32 %v2146, 7
    %v2148 = vsub.s32 0, %v2147
    %v2149 = vrot.slane %v1769, %v2148
    %v2150 = vlaneseq
    %v2151 = vshrl.u32 %v2150, 7
    %v2152 = vsub.s32 0, %v2151
    %v2153 = vrot.slane %v1771, %v2152
    %v2154 = vlaneseq
    %v2155 = vshrl.u32 %v2154, 7
    %v2156 = vsub.s32 0, %v2155
    %v2157 = vrot.slane %v1773, %v2156
    %v2254 = vld [vmem:[%s6] sm:$0xff]
    %v2255 = vld [vmem:[%s6 + $0x8] sm:$0xff]
    %v2256 = vld [vmem:[%s6 + $0x10] sm:$0xff]
    %v2257 = vld [vmem:[%s6 + $0x18] sm:$0xff]
    %v2258 = vld [vmem:[%s6 + $0x20] sm:$0xff]
    %v2259 = vld [vmem:[%s6 + $0x28] sm:$0xff]
    %v2260 = vld [vmem:[%s6 + $0x30] sm:$0xff]
    %v2261 = vld [vmem:[%s6 + $0x38] sm:$0xff]
    %v2270 = vcombine.high %v2254, %v2254
    %v2271 = vcombine.high %v2255, %v2255
    %v2272 = vcombine.high %v2256, %v2256
    %v2273 = vcombine.high %v2257, %v2257
    %v2274 = vcombine.high %v2258, %v2258
    %v2275 = vcombine.high %v2259, %v2259
    %v2276 = vcombine.high %v2260, %v2260
    %v2277 = vcombine.high %v2261, %v2261
    %v2286 = vmul.f32 %v1777, %v2254
    %v2287 = vmul.f32 %v1781, %v2270
    %v2288 = vmul.f32 %v1785, %v2255
    %v2289 = vmul.f32 %v1789, %v2271
    %v2290 = vmul.f32 %v1793, %v2256
    %v2291 = vmul.f32 %v1797, %v2272
    %v2292 = vmul.f32 %v1801, %v2257
    %v2293 = vmul.f32 %v1805, %v2273
    %v2294 = vmul.f32 %v1809, %v2258
    %v2295 = vmul.f32 %v1813, %v2274
    %v2296 = vmul.f32 %v1817, %v2259
    %v2297 = vmul.f32 %v1821, %v2275
    %v2298 = vmul.f32 %v1825, %v2260
    %v2299 = vmul.f32 %v1829, %v2276
    %v2300 = vmul.f32 %v1833, %v2261
    %v2301 = vmul.f32 %v1837, %v2277
    %v2302 = vmul.f32 %v1841, %v2254
    %v2303 = vmul.f32 %v1845, %v2270
    %v2304 = vmul.f32 %v1849, %v2255
    %v2305 = vmul.f32 %v1853, %v2271
    %v2306 = vmul.f32 %v1857, %v2256
    %v2307 = vmul.f32 %v1861, %v2272
    %v2308 = vmul.f32 %v1865, %v2257
    %v2309 = vmul.f32 %v1869, %v2273
    %v2310 = vmul.f32 %v1873, %v2258
    %v2311 = vmul.f32 %v1877, %v2274
    %v2312 = vmul.f32 %v1881, %v2259
    %v2313 = vmul.f32 %v1885, %v2275
    %v2314 = vmul.f32 %v1889, %v2260
    %v2315 = vmul.f32 %v1893, %v2276
    %v2316 = vmul.f32 %v1897, %v2261
    %v2317 = vmul.f32 %v1901, %v2277
    %v2318 = vmul.f32 %v1905, %v2254
    %v2319 = vmul.f32 %v1909, %v2270
    %v2320 = vmul.f32 %v1913, %v2255
    %v2321 = vmul.f32 %v1917, %v2271
    %v2322 = vmul.f32 %v1921, %v2256
    %v2323 = vmul.f32 %v1925, %v2272
    %v2324 = vmul.f32 %v1929, %v2257
    %v2325 = vmul.f32 %v1933, %v2273
    %v2326 = vmul.f32 %v1937, %v2258
    %v2327 = vmul.f32 %v1941, %v2274
    %v2328 = vmul.f32 %v1945, %v2259
    %v2329 = vmul.f32 %v1949, %v2275
    %v2330 = vmul.f32 %v1953, %v2260
    %v2331 = vmul.f32 %v1957, %v2276
    %v2332 = vmul.f32 %v1961, %v2261
    %v2333 = vmul.f32 %v1965, %v2277
    %v2334 = vmul.f32 %v1969, %v2254
    %v2335 = vmul.f32 %v1973, %v2270
    %v2336 = vmul.f32 %v1977, %v2255
    %v2337 = vmul.f32 %v1981, %v2271
    %v2338 = vmul.f32 %v1985, %v2256
    %v2339 = vmul.f32 %v1989, %v2272
    %v2340 = vmul.f32 %v1993, %v2257
    %v2341 = vmul.f32 %v1997, %v2273
    %v2342 = vmul.f32 %v2001, %v2258
    %v2343 = vmul.f32 %v2005, %v2274
    %v2344 = vmul.f32 %v2009, %v2259
    %v2345 = vmul.f32 %v2013, %v2275
    %v2346 = vmul.f32 %v2017, %v2260
    %v2347 = vmul.f32 %v2021, %v2276
    %v2348 = vmul.f32 %v2025, %v2261
    %v2349 = vmul.f32 %v2029, %v2277
    %v2350 = vmul.f32 %v2033, %v2254
    %v2351 = vmul.f32 %v2037, %v2270
    %v2352 = vmul.f32 %v2041, %v2255
    %v2353 = vmul.f32 %v2045, %v2271
    %v2354 = vmul.f32 %v2049, %v2256
    %v2355 = vmul.f32 %v2053, %v2272
    %v2356 = vmul.f32 %v2057, %v2257
    %v2357 = vmul.f32 %v2061, %v2273
    %v2358 = vmul.f32 %v2065, %v2258
    %v2359 = vmul.f32 %v2069, %v2274
    %v2360 = vmul.f32 %v2073, %v2259
    %v2361 = vmul.f32 %v2077, %v2275
    %v2362 = vmul.f32 %v2081, %v2260
    %v2363 = vmul.f32 %v2085, %v2276
    %v2364 = vmul.f32 %v2089, %v2261
    %v2365 = vmul.f32 %v2093, %v2277
    %v2366 = vmul.f32 %v2097, %v2254
    %v2367 = vmul.f32 %v2101, %v2270
    %v2368 = vmul.f32 %v2105, %v2255
    %v2369 = vmul.f32 %v2109, %v2271
    %v2370 = vmul.f32 %v2113, %v2256
    %v2371 = vmul.f32 %v2117, %v2272
    %v2372 = vmul.f32 %v2121, %v2257
    %v2373 = vmul.f32 %v2125, %v2273
    %v2374 = vmul.f32 %v2129, %v2258
    %v2375 = vmul.f32 %v2133, %v2274
    %v2376 = vmul.f32 %v2137, %v2259
    %v2377 = vmul.f32 %v2141, %v2275
    %v2378 = vmul.f32 %v2145, %v2260
    %v2379 = vmul.f32 %v2149, %v2276
    %v2380 = vmul.f32 %v2153, %v2261
    %v2381 = vmul.f32 %v2157, %v2277
    %2384 = vrot.lane.b32.xlu0 %v1162, 96
    %v2385 = vpop.permute.xlu0 %2384
    %2386 = vrot.lane.b32.xlu0 %v1163, 96
    %v2387 = vpop.permute.xlu0 %2386
    %v2404 = vcombine.low %v2286, %v2287
    %v2405 = vcombine.low %v2288, %v2289
    %v2406 = vcombine.low %v2290, %v2291
    %v2407 = vcombine.low %v2292, %v2293
    %v2408 = vcombine.low %v2294, %v2295
    %v2409 = vcombine.low %v2296, %v2297
    %v2410 = vcombine.low %v2298, %v2299
    %v2411 = vcombine.low %v2300, %v2301
    %v2420 = vsel %vm424, %v2385, 0
    %v2422 = vsel %vm424, %v2387, 0
    %2424 = vmatprep.subr.mxu0 0.0
    %2425 = vmatpush1.msra.mxu0 0.0
    %2426 = vmatprep.subr.mxu0 0.0
    %2427 = vmatpush1.msra.mxu0 0.0
    %2428 = vmatprep.subr.mxu0 0.0
    %2429 = vmatpush1.msra.mxu0 0.0
    %2430 = vmatprep.subr.mxu0 0.0
    %2431 = vmatpush1.msra.mxu0 0.0
    %2432 = vmatprep.subr.mxu0 0.0
    %2433 = vmatpush1.msra.mxu0 0.0
    %2434 = vmatprep.subr.mxu0 0.0
    %2435 = vmatpush1.msra.mxu0 0.0
    %2436 = vmatprep.subr.mxu0 0.0
    %2437 = vmatpush1.msra.mxu0 0.0
    %2438 = vmatprep.subr.mxu0 0.0
    %2439 = vmatpush1.msra.mxu0 0.0
    %2440 = vmatprep.subr.mxu0 0.0
    %2441 = vmatpush1.msra.mxu0 %v2411
    %2442 = vmatprep.subr.mxu0 0.0
    %2443 = vmatpush1.msra.mxu0 %v2410
    %2444 = vmatprep.subr.mxu0 0.0
    %2445 = vmatpush1.msra.mxu0 %v2409
    %2446 = vmatprep.subr.mxu0 0.0
    %2447 = vmatpush1.msra.mxu0 %v2408
    %2448 = vmatprep.subr.mxu0 0.0
    %2449 = vmatpush1.msra.mxu0 %v2407
    %2450 = vmatprep.subr.mxu0 0.0
    %2451 = vmatpush1.msra.mxu0 %v2406
    %2452 = vmatprep.subr.mxu0 0.0
    %2453 = vmatpush1.msra.mxu0 %v2405
    %2454 = vmatprep.subr.mxu0 0.0
    %2455 = vmatpush1.msra.mxu0 %v2404
    %2456 = vmatprep.subr.mxu0 0.0
    %2457 = vmatpush2.msra.mxu0 0.0
    %2458 = vmatprep.subr.mxu0 0.0
    %2459 = vmatpush2.msra.mxu0 0.0
    %2460 = vmatprep.subr.mxu0 0.0
    %2461 = vmatpush2.msra.mxu0 0.0
    %2462 = vmatprep.subr.mxu0 0.0
    %2463 = vmatpush2.msra.mxu0 0.0
    %2464 = vmatprep.subr.mxu0 0.0
    %2465 = vmatpush2.msra.mxu0 0.0
    %2466 = vmatprep.subr.mxu0 0.0
    %2467 = vmatpush2.msra.mxu0 0.0
    %2468 = vmatprep.subr.mxu0 0.0
    %2469 = vmatpush2.msra.mxu0 0.0
    %2470 = vmatprep.subr.mxu0 0.0
    %2471 = vmatpush2.msra.mxu0 0.0
    %2472 = vmatprep.subr.mxu0 0.0
    %2473 = vmatpush2.msra.mxu0 0.0
    %2474 = vmatprep.subr.mxu0 0.0
    %2475 = vmatpush2.msra.mxu0 0.0
    %2476 = vmatprep.subr.mxu0 0.0
    %2477 = vmatpush2.msra.mxu0 0.0
    %2478 = vmatprep.subr.mxu0 0.0
    %2479 = vmatpush2.msra.mxu0 0.0
    %2480 = vmatprep.subr.mxu0 0.0
    %2481 = vmatpush2.msra.mxu0 0.0
    %2482 = vmatprep.subr.mxu0 0.0
    %2483 = vmatpush2.msra.mxu0 0.0
    %2484 = vmatprep.subr.mxu0 0.0
    %2485 = vmatpush2.msra.mxu0 0.0
    %2486 = vmatprep.subr.mxu0 0.0
    %2487 = vmatpush2.msra.mxu0 0.0
    %2488 = vmatprep.mubr.f32.mxu0 0.0
    %2489 = vmatmul.mubr.f32.gmra.mxu0 %v2420
    %v2490 = vpop.f32.mrf.mxu0
    %v2491 = vadd.f32 0.0, %v2490
    %v2492 = vpop.f32.mrf.mxu0
    %2493 = vmatprep.mubr.f32.mxu0 0.0
    %2494 = vmatmul.mubr.f32.gmra.mxu0 %v2422
    %v2495 = vpop.f32.mrf.mxu0
    %v2496 = vadd.f32 0.0, %v2495
    %v2497 = vpop.f32.mrf.mxu0
    %2498 = vdwg.mxu0
    %2501 = vrot.lane.b32.xlu0 %v1164, 96
    %v2502 = vpop.permute.xlu0 %2501
    %2503 = vrot.lane.b32.xlu0 %v1165, 96
    %v2504 = vpop.permute.xlu0 %2503
    %v2521 = vcombine.low %v2302, %v2303
    %v2522 = vcombine.low %v2304, %v2305
    %v2523 = vcombine.low %v2306, %v2307
    %v2524 = vcombine.low %v2308, %v2309
    %v2525 = vcombine.low %v2310, %v2311
    %v2526 = vcombine.low %v2312, %v2313
    %v2527 = vcombine.low %v2314, %v2315
    %v2528 = vcombine.low %v2316, %v2317
    %v2537 = vsel %vm424, %v2502, 0
    %v2539 = vsel %vm424, %v2504, 0
    %2541 = vmatprep.subr.mxu0 0.0
    %2542 = vmatpush1.msra.mxu0 0.0
    %2543 = vmatprep.subr.mxu0 0.0
    %2544 = vmatpush1.msra.mxu0 0.0
    %2545 = vmatprep.subr.mxu0 0.0
    %2546 = vmatpush1.msra.mxu0 0.0
    %2547 = vmatprep.subr.mxu0 0.0
    %2548 = vmatpush1.msra.mxu0 0.0
    %2549 = vmatprep.subr.mxu0 0.0
    %2550 = vmatpush1.msra.mxu0 0.0
    %2551 = vmatprep.subr.mxu0 0.0
    %2552 = vmatpush1.msra.mxu0 0.0
    %2553 = vmatprep.subr.mxu0 0.0
    %2554 = vmatpush1.msra.mxu0 0.0
    %2555 = vmatprep.subr.mxu0 0.0
    %2556 = vmatpush1.msra.mxu0 0.0
    %2557 = vmatprep.subr.mxu0 0.0
    %2558 = vmatpush1.msra.mxu0 %v2528
    %2559 = vmatprep.subr.mxu0 0.0
    %2560 = vmatpush1.msra.mxu0 %v2527
    %2561 = vmatprep.subr.mxu0 0.0
    %2562 = vmatpush1.msra.mxu0 %v2526
    %2563 = vmatprep.subr.mxu0 0.0
    %2564 = vmatpush1.msra.mxu0 %v2525
    %2565 = vmatprep.subr.mxu0 0.0
    %2566 = vmatpush1.msra.mxu0 %v2524
    %2567 = vmatprep.subr.mxu0 0.0
    %2568 = vmatpush1.msra.mxu0 %v2523
    %2569 = vmatprep.subr.mxu0 0.0
    %2570 = vmatpush1.msra.mxu0 %v2522
    %2571 = vmatprep.subr.mxu0 0.0
    %2572 = vmatpush1.msra.mxu0 %v2521
    %2573 = vmatprep.subr.mxu0 0.0
    %2574 = vmatpush2.msra.mxu0 0.0
    %2575 = vmatprep.subr.mxu0 0.0
    %2576 = vmatpush2.msra.mxu0 0.0
    %2577 = vmatprep.subr.mxu0 0.0
    %2578 = vmatpush2.msra.mxu0 0.0
    %2579 = vmatprep.subr.mxu0 0.0
    %2580 = vmatpush2.msra.mxu0 0.0
    %2581 = vmatprep.subr.mxu0 0.0
    %2582 = vmatpush2.msra.mxu0 0.0
    %2583 = vmatprep.subr.mxu0 0.0
    %2584 = vmatpush2.msra.mxu0 0.0
    %2585 = vmatprep.subr.mxu0 0.0
    %2586 = vmatpush2.msra.mxu0 0.0
    %2587 = vmatprep.subr.mxu0 0.0
    %2588 = vmatpush2.msra.mxu0 0.0
    %2589 = vmatprep.subr.mxu0 0.0
    %2590 = vmatpush2.msra.mxu0 0.0
    %2591 = vmatprep.subr.mxu0 0.0
    %2592 = vmatpush2.msra.mxu0 0.0
    %2593 = vmatprep.subr.mxu0 0.0
    %2594 = vmatpush2.msra.mxu0 0.0
    %2595 = vmatprep.subr.mxu0 0.0
    %2596 = vmatpush2.msra.mxu0 0.0
    %2597 = vmatprep.subr.mxu0 0.0
    %2598 = vmatpush2.msra.mxu0 0.0
    %2599 = vmatprep.subr.mxu0 0.0
    %2600 = vmatpush2.msra.mxu0 0.0
    %2601 = vmatprep.subr.mxu0 0.0
    %2602 = vmatpush2.msra.mxu0 0.0
    %2603 = vmatprep.subr.mxu0 0.0
    %2604 = vmatpush2.msra.mxu0 0.0
    %2605 = vmatprep.mubr.f32.mxu0 0.0
    %2606 = vmatmul.mubr.f32.gmra.mxu0 %v2537
    %v2607 = vpop.f32.mrf.mxu0
    %v2608 = vadd.f32 0.0, %v2607
    %v2609 = vpop.f32.mrf.mxu0
    %2610 = vmatprep.mubr.f32.mxu0 0.0
    %2611 = vmatmul.mubr.f32.gmra.mxu0 %v2539
    %v2612 = vpop.f32.mrf.mxu0
    %v2613 = vadd.f32 0.0, %v2612
    %v2614 = vpop.f32.mrf.mxu0
    %2615 = vdwg.mxu0
    %2618 = vrot.lane.b32.xlu0 %v1166, 96
    %v2619 = vpop.permute.xlu0 %2618
    %2620 = vrot.lane.b32.xlu0 %v1167, 96
    %v2621 = vpop.permute.xlu0 %2620
    %v2638 = vcombine.low %v2318, %v2319
    %v2639 = vcombine.low %v2320, %v2321
    %v2640 = vcombine.low %v2322, %v2323
    %v2641 = vcombine.low %v2324, %v2325
    %v2642 = vcombine.low %v2326, %v2327
    %v2643 = vcombine.low %v2328, %v2329
    %v2644 = vcombine.low %v2330, %v2331
    %v2645 = vcombine.low %v2332, %v2333
    %v2654 = vsel %vm424, %v2619, 0
    %v2656 = vsel %vm424, %v2621, 0
    %2658 = vmatprep.subr.mxu0 0.0
    %2659 = vmatpush1.msra.mxu0 0.0
    %2660 = vmatprep.subr.mxu0 0.0
    %2661 = vmatpush1.msra.mxu0 0.0
    %2662 = vmatprep.subr.mxu0 0.0
    %2663 = vmatpush1.msra.mxu0 0.0
    %2664 = vmatprep.subr.mxu0 0.0
    %2665 = vmatpush1.msra.mxu0 0.0
    %2666 = vmatprep.subr.mxu0 0.0
    %2667 = vmatpush1.msra.mxu0 0.0
    %2668 = vmatprep.subr.mxu0 0.0
    %2669 = vmatpush1.msra.mxu0 0.0
    %2670 = vmatprep.subr.mxu0 0.0
    %2671 = vmatpush1.msra.mxu0 0.0
    %2672 = vmatprep.subr.mxu0 0.0
    %2673 = vmatpush1.msra.mxu0 0.0
    %2674 = vmatprep.subr.mxu0 0.0
    %2675 = vmatpush1.msra.mxu0 %v2645
    %2676 = vmatprep.subr.mxu0 0.0
    %2677 = vmatpush1.msra.mxu0 %v2644
    %2678 = vmatprep.subr.mxu0 0.0
    %2679 = vmatpush1.msra.mxu0 %v2643
    %2680 = vmatprep.subr.mxu0 0.0
    %2681 = vmatpush1.msra.mxu0 %v2642
    %2682 = vmatprep.subr.mxu0 0.0
    %2683 = vmatpush1.msra.mxu0 %v2641
    %2684 = vmatprep.subr.mxu0 0.0
    %2685 = vmatpush1.msra.mxu0 %v2640
    %2686 = vmatprep.subr.mxu0 0.0
    %2687 = vmatpush1.msra.mxu0 %v2639
    %2688 = vmatprep.subr.mxu0 0.0
    %2689 = vmatpush1.msra.mxu0 %v2638
    %2690 = vmatprep.subr.mxu0 0.0
    %2691 = vmatpush2.msra.mxu0 0.0
    %2692 = vmatprep.subr.mxu0 0.0
    %2693 = vmatpush2.msra.mxu0 0.0
    %2694 = vmatprep.subr.mxu0 0.0
    %2695 = vmatpush2.msra.mxu0 0.0
    %2696 = vmatprep.subr.mxu0 0.0
    %2697 = vmatpush2.msra.mxu0 0.0
    %2698 = vmatprep.subr.mxu0 0.0
    %2699 = vmatpush2.msra.mxu0 0.0
    %2700 = vmatprep.subr.mxu0 0.0
    %2701 = vmatpush2.msra.mxu0 0.0
    %2702 = vmatprep.subr.mxu0 0.0
    %2703 = vmatpush2.msra.mxu0 0.0
    %2704 = vmatprep.subr.mxu0 0.0
    %2705 = vmatpush2.msra.mxu0 0.0
    %2706 = vmatprep.subr.mxu0 0.0
    %2707 = vmatpush2.msra.mxu0 0.0
    %2708 = vmatprep.subr.mxu0 0.0
    %2709 = vmatpush2.msra.mxu0 0.0
    %2710 = vmatprep.subr.mxu0 0.0
    %2711 = vmatpush2.msra.mxu0 0.0
    %2712 = vmatprep.subr.mxu0 0.0
    %2713 = vmatpush2.msra.mxu0 0.0
    %2714 = vmatprep.subr.mxu0 0.0
    %2715 = vmatpush2.msra.mxu0 0.0
    %2716 = vmatprep.subr.mxu0 0.0
    %2717 = vmatpush2.msra.mxu0 0.0
    %2718 = vmatprep.subr.mxu0 0.0
    %2719 = vmatpush2.msra.mxu0 0.0
    %2720 = vmatprep.subr.mxu0 0.0
    %2721 = vmatpush2.msra.mxu0 0.0
    %2722 = vmatprep.mubr.f32.mxu0 0.0
    %2723 = vmatmul.mubr.f32.gmra.mxu0 %v2654
    %v2724 = vpop.f32.mrf.mxu0
    %v2725 = vadd.f32 0.0, %v2724
    %v2726 = vpop.f32.mrf.mxu0
    %2727 = vmatprep.mubr.f32.mxu0 0.0
    %2728 = vmatmul.mubr.f32.gmra.mxu0 %v2656
    %v2729 = vpop.f32.mrf.mxu0
    %v2730 = vadd.f32 0.0, %v2729
    %v2731 = vpop.f32.mrf.mxu0
    %2732 = vdwg.mxu0
    %2735 = vrot.lane.b32.xlu0 %v1168, 96
    %v2736 = vpop.permute.xlu0 %2735
    %2737 = vrot.lane.b32.xlu0 %v1169, 96
    %v2738 = vpop.permute.xlu0 %2737
    %v2755 = vcombine.low %v2334, %v2335
    %v2756 = vcombine.low %v2336, %v2337
    %v2757 = vcombine.low %v2338, %v2339
    %v2758 = vcombine.low %v2340, %v2341
    %v2759 = vcombine.low %v2342, %v2343
    %v2760 = vcombine.low %v2344, %v2345
    %v2761 = vcombine.low %v2346, %v2347
    %v2762 = vcombine.low %v2348, %v2349
    %v2771 = vsel %vm424, %v2736, 0
    %v2773 = vsel %vm424, %v2738, 0
    %2775 = vmatprep.subr.mxu0 0.0
    %2776 = vmatpush1.msra.mxu0 0.0
    %2777 = vmatprep.subr.mxu0 0.0
    %2778 = vmatpush1.msra.mxu0 0.0
    %2779 = vmatprep.subr.mxu0 0.0
    %2780 = vmatpush1.msra.mxu0 0.0
    %2781 = vmatprep.subr.mxu0 0.0
    %2782 = vmatpush1.msra.mxu0 0.0
    %2783 = vmatprep.subr.mxu0 0.0
    %2784 = vmatpush1.msra.mxu0 0.0
    %2785 = vmatprep.subr.mxu0 0.0
    %2786 = vmatpush1.msra.mxu0 0.0
    %2787 = vmatprep.subr.mxu0 0.0
    %2788 = vmatpush1.msra.mxu0 0.0
    %2789 = vmatprep.subr.mxu0 0.0
    %2790 = vmatpush1.msra.mxu0 0.0
    %2791 = vmatprep.subr.mxu0 0.0
    %2792 = vmatpush1.msra.mxu0 %v2762
    %2793 = vmatprep.subr.mxu0 0.0
    %2794 = vmatpush1.msra.mxu0 %v2761
    %2795 = vmatprep.subr.mxu0 0.0
    %2796 = vmatpush1.msra.mxu0 %v2760
    %2797 = vmatprep.subr.mxu0 0.0
    %2798 = vmatpush1.msra.mxu0 %v2759
    %2799 = vmatprep.subr.mxu0 0.0
    %2800 = vmatpush1.msra.mxu0 %v2758
    %2801 = vmatprep.subr.mxu0 0.0
    %2802 = vmatpush1.msra.mxu0 %v2757
    %2803 = vmatprep.subr.mxu0 0.0
    %2804 = vmatpush1.msra.mxu0 %v2756
    %2805 = vmatprep.subr.mxu0 0.0
    %2806 = vmatpush1.msra.mxu0 %v2755
    %2807 = vmatprep.subr.mxu0 0.0
    %2808 = vmatpush2.msra.mxu0 0.0
    %2809 = vmatprep.subr.mxu0 0.0
    %2810 = vmatpush2.msra.mxu0 0.0
    %2811 = vmatprep.subr.mxu0 0.0
    %2812 = vmatpush2.msra.mxu0 0.0
    %2813 = vmatprep.subr.mxu0 0.0
    %2814 = vmatpush2.msra.mxu0 0.0
    %2815 = vmatprep.subr.mxu0 0.0
    %2816 = vmatpush2.msra.mxu0 0.0
    %2817 = vmatprep.subr.mxu0 0.0
    %2818 = vmatpush2.msra.mxu0 0.0
    %2819 = vmatprep.subr.mxu0 0.0
    %2820 = vmatpush2.msra.mxu0 0.0
    %2821 = vmatprep.subr.mxu0 0.0
    %2822 = vmatpush2.msra.mxu0 0.0
    %2823 = vmatprep.subr.mxu0 0.0
    %2824 = vmatpush2.msra.mxu0 0.0
    %2825 = vmatprep.subr.mxu0 0.0
    %2826 = vmatpush2.msra.mxu0 0.0
    %2827 = vmatprep.subr.mxu0 0.0
    %2828 = vmatpush2.msra.mxu0 0.0
    %2829 = vmatprep.subr.mxu0 0.0
    %2830 = vmatpush2.msra.mxu0 0.0
    %2831 = vmatprep.subr.mxu0 0.0
    %2832 = vmatpush2.msra.mxu0 0.0
    %2833 = vmatprep.subr.mxu0 0.0
    %2834 = vmatpush2.msra.mxu0 0.0
    %2835 = vmatprep.subr.mxu0 0.0
    %2836 = vmatpush2.msra.mxu0 0.0
    %2837 = vmatprep.subr.mxu0 0.0
    %2838 = vmatpush2.msra.mxu0 0.0
    %2839 = vmatprep.mubr.f32.mxu0 0.0
    %2840 = vmatmul.mubr.f32.gmra.mxu0 %v2771
    %v2841 = vpop.f32.mrf.mxu0
    %v2842 = vadd.f32 0.0, %v2841
    %v2843 = vpop.f32.mrf.mxu0
    %2844 = vmatprep.mubr.f32.mxu0 0.0
    %2845 = vmatmul.mubr.f32.gmra.mxu0 %v2773
    %v2846 = vpop.f32.mrf.mxu0
    %v2847 = vadd.f32 0.0, %v2846
    %v2848 = vpop.f32.mrf.mxu0
    %2849 = vdwg.mxu0
    %2852 = vrot.lane.b32.xlu0 %v1170, 96
    %v2853 = vpop.permute.xlu0 %2852
    %2854 = vrot.lane.b32.xlu0 %v1171, 96
    %v2855 = vpop.permute.xlu0 %2854
    %v2872 = vcombine.low %v2350, %v2351
    %v2873 = vcombine.low %v2352, %v2353
    %v2874 = vcombine.low %v2354, %v2355
    %v2875 = vcombine.low %v2356, %v2357
    %v2876 = vcombine.low %v2358, %v2359
    %v2877 = vcombine.low %v2360, %v2361
    %v2878 = vcombine.low %v2362, %v2363
    %v2879 = vcombine.low %v2364, %v2365
    %v2888 = vsel %vm424, %v2853, 0
    %v2890 = vsel %vm424, %v2855, 0
    %2892 = vmatprep.subr.mxu0 0.0
    %2893 = vmatpush1.msra.mxu0 0.0
    %2894 = vmatprep.subr.mxu0 0.0
    %2895 = vmatpush1.msra.mxu0 0.0
    %2896 = vmatprep.subr.mxu0 0.0
    %2897 = vmatpush1.msra.mxu0 0.0
    %2898 = vmatprep.subr.mxu0 0.0
    %2899 = vmatpush1.msra.mxu0 0.0
    %2900 = vmatprep.subr.mxu0 0.0
    %2901 = vmatpush1.msra.mxu0 0.0
    %2902 = vmatprep.subr.mxu0 0.0
    %2903 = vmatpush1.msra.mxu0 0.0
    %2904 = vmatprep.subr.mxu0 0.0
    %2905 = vmatpush1.msra.mxu0 0.0
    %2906 = vmatprep.subr.mxu0 0.0
    %2907 = vmatpush1.msra.mxu0 0.0
    %2908 = vmatprep.subr.mxu0 0.0
    %2909 = vmatpush1.msra.mxu0 %v2879
    %2910 = vmatprep.subr.mxu0 0.0
    %2911 = vmatpush1.msra.mxu0 %v2878
    %2912 = vmatprep.subr.mxu0 0.0
    %2913 = vmatpush1.msra.mxu0 %v2877
    %2914 = vmatprep.subr.mxu0 0.0
    %2915 = vmatpush1.msra.mxu0 %v2876
    %2916 = vmatprep.subr.mxu0 0.0
    %2917 = vmatpush1.msra.mxu0 %v2875
    %2918 = vmatprep.subr.mxu0 0.0
    %2919 = vmatpush1.msra.mxu0 %v2874
    %2920 = vmatprep.subr.mxu0 0.0
    %2921 = vmatpush1.msra.mxu0 %v2873
    %2922 = vmatprep.subr.mxu0 0.0
    %2923 = vmatpush1.msra.mxu0 %v2872
    %2924 = vmatprep.subr.mxu0 0.0
    %2925 = vmatpush2.msra.mxu0 0.0
    %2926 = vmatprep.subr.mxu0 0.0
    %2927 = vmatpush2.msra.mxu0 0.0
    %2928 = vmatprep.subr.mxu0 0.0
    %2929 = vmatpush2.msra.mxu0 0.0
    %2930 = vmatprep.subr.mxu0 0.0
    %2931 = vmatpush2.msra.mxu0 0.0
    %2932 = vmatprep.subr.mxu0 0.0
    %2933 = vmatpush2.msra.mxu0 0.0
    %2934 = vmatprep.subr.mxu0 0.0
    %2935 = vmatpush2.msra.mxu0 0.0
    %2936 = vmatprep.subr.mxu0 0.0
    %2937 = vmatpush2.msra.mxu0 0.0
    %2938 = vmatprep.subr.mxu0 0.0
    %2939 = vmatpush2.msra.mxu0 0.0
    %2940 = vmatprep.subr.mxu0 0.0
    %2941 = vmatpush2.msra.mxu0 0.0
    %2942 = vmatprep.subr.mxu0 0.0
    %2943 = vmatpush2.msra.mxu0 0.0
    %2944 = vmatprep.subr.mxu0 0.0
    %2945 = vmatpush2.msra.mxu0 0.0
    %2946 = vmatprep.subr.mxu0 0.0
    %2947 = vmatpush2.msra.mxu0 0.0
    %2948 = vmatprep.subr.mxu0 0.0
    %2949 = vmatpush2.msra.mxu0 0.0
    %2950 = vmatprep.subr.mxu0 0.0
    %2951 = vmatpush2.msra.mxu0 0.0
    %2952 = vmatprep.subr.mxu0 0.0
    %2953 = vmatpush2.msra.mxu0 0.0
    %2954 = vmatprep.subr.mxu0 0.0
    %2955 = vmatpush2.msra.mxu0 0.0
    %2956 = vmatprep.mubr.f32.mxu0 0.0
    %2957 = vmatmul.mubr.f32.gmra.mxu0 %v2888
    %v2958 = vpop.f32.mrf.mxu0
    %v2959 = vadd.f32 0.0, %v2958
    %v2960 = vpop.f32.mrf.mxu0
    %2961 = vmatprep.mubr.f32.mxu0 0.0
    %2962 = vmatmul.mubr.f32.gmra.mxu0 %v2890
    %v2963 = vpop.f32.mrf.mxu0
    %v2964 = vadd.f32 0.0, %v2963
    %v2965 = vpop.f32.mrf.mxu0
    %2966 = vdwg.mxu0
    %2969 = vrot.lane.b32.xlu0 %v1172, 96
    %v2970 = vpop.permute.xlu0 %2969
    %2971 = vrot.lane.b32.xlu0 %v1173, 96
    %v2972 = vpop.permute.xlu0 %2971
    %v2989 = vcombine.low %v2366, %v2367
    %v2990 = vcombine.low %v2368, %v2369
    %v2991 = vcombine.low %v2370, %v2371
    %v2992 = vcombine.low %v2372, %v2373
    %v2993 = vcombine.low %v2374, %v2375
    %v2994 = vcombine.low %v2376, %v2377
    %v2995 = vcombine.low %v2378, %v2379
    %v2996 = vcombine.low %v2380, %v2381
    %v3005 = vsel %vm424, %v2970, 0
    %v3007 = vsel %vm424, %v2972, 0
    %3009 = vmatprep.subr.mxu0 0.0
    %3010 = vmatpush1.msra.mxu0 0.0
    %3011 = vmatprep.subr.mxu0 0.0
    %3012 = vmatpush1.msra.mxu0 0.0
    %3013 = vmatprep.subr.mxu0 0.0
    %3014 = vmatpush1.msra.mxu0 0.0
    %3015 = vmatprep.subr.mxu0 0.0
    %3016 = vmatpush1.msra.mxu0 0.0
    %3017 = vmatprep.subr.mxu0 0.0
    %3018 = vmatpush1.msra.mxu0 0.0
    %3019 = vmatprep.subr.mxu0 0.0
    %3020 = vmatpush1.msra.mxu0 0.0
    %3021 = vmatprep.subr.mxu0 0.0
    %3022 = vmatpush1.msra.mxu0 0.0
    %3023 = vmatprep.subr.mxu0 0.0
    %3024 = vmatpush1.msra.mxu0 0.0
    %3025 = vmatprep.subr.mxu0 0.0
    %3026 = vmatpush1.msra.mxu0 %v2996
    %3027 = vmatprep.subr.mxu0 0.0
    %3028 = vmatpush1.msra.mxu0 %v2995
    %3029 = vmatprep.subr.mxu0 0.0
    %3030 = vmatpush1.msra.mxu0 %v2994
    %3031 = vmatprep.subr.mxu0 0.0
    %3032 = vmatpush1.msra.mxu0 %v2993
    %3033 = vmatprep.subr.mxu0 0.0
    %3034 = vmatpush1.msra.mxu0 %v2992
    %3035 = vmatprep.subr.mxu0 0.0
    %3036 = vmatpush1.msra.mxu0 %v2991
    %3037 = vmatprep.subr.mxu0 0.0
    %3038 = vmatpush1.msra.mxu0 %v2990
    %3039 = vmatprep.subr.mxu0 0.0
    %3040 = vmatpush1.msra.mxu0 %v2989
    %3041 = vmatprep.subr.mxu0 0.0
    %3042 = vmatpush2.msra.mxu0 0.0
    %3043 = vmatprep.subr.mxu0 0.0
    %3044 = vmatpush2.msra.mxu0 0.0
    %3045 = vmatprep.subr.mxu0 0.0
    %3046 = vmatpush2.msra.mxu0 0.0
    %3047 = vmatprep.subr.mxu0 0.0
    %3048 = vmatpush2.msra.mxu0 0.0
    %3049 = vmatprep.subr.mxu0 0.0
    %3050 = vmatpush2.msra.mxu0 0.0
    %3051 = vmatprep.subr.mxu0 0.0
    %3052 = vmatpush2.msra.mxu0 0.0
    %3053 = vmatprep.subr.mxu0 0.0
    %3054 = vmatpush2.msra.mxu0 0.0
    %3055 = vmatprep.subr.mxu0 0.0
    %3056 = vmatpush2.msra.mxu0 0.0
    %3057 = vmatprep.subr.mxu0 0.0
    %3058 = vmatpush2.msra.mxu0 0.0
    %3059 = vmatprep.subr.mxu0 0.0
    %3060 = vmatpush2.msra.mxu0 0.0
    %3061 = vmatprep.subr.mxu0 0.0
    %3062 = vmatpush2.msra.mxu0 0.0
    %3063 = vmatprep.subr.mxu0 0.0
    %3064 = vmatpush2.msra.mxu0 0.0
    %3065 = vmatprep.subr.mxu0 0.0
    %3066 = vmatpush2.msra.mxu0 0.0
    %3067 = vmatprep.subr.mxu0 0.0
    %3068 = vmatpush2.msra.mxu0 0.0
    %3069 = vmatprep.subr.mxu0 0.0
    %3070 = vmatpush2.msra.mxu0 0.0
    %3071 = vmatprep.subr.mxu0 0.0
    %3072 = vmatpush2.msra.mxu0 0.0
    %3073 = vmatprep.mubr.f32.mxu0 0.0
    %3074 = vmatmul.mubr.f32.gmra.mxu0 %v3005
    %v3075 = vpop.f32.mrf.mxu0
    %v3076 = vadd.f32 0.0, %v3075
    %v3077 = vpop.f32.mrf.mxu0
    %3078 = vmatprep.mubr.f32.mxu0 0.0
    %3079 = vmatmul.mubr.f32.gmra.mxu0 %v3007
    %v3080 = vpop.f32.mrf.mxu0
    %v3081 = vadd.f32 0.0, %v3080
    %v3082 = vpop.f32.mrf.mxu0
    %3083 = vdwg.mxu0
    %v3084 = vld [vmem:[%s8] sm:$0xff]
    %v3085 = vld [vmem:[%s8 + $0x8] sm:$0xff]
    %v3086 = vld [vmem:[%s8 + $0x10] sm:$0xff]
    %v3087 = vld [vmem:[%s8 + $0x18] sm:$0xff]
    %v3089 = vsel %vm71, %v2491, 0
    %v3092 = vsel %vm71, %v2496, 0
    %v3095 = vsel %vm71, %v2608, 0
    %v3098 = vsel %vm71, %v2613, 0
    %v3101 = vsel %vm71, %v2725, 0
    %v3104 = vsel %vm71, %v2730, 0
    %v3107 = vsel %vm71, %v2842, 0
    %v3110 = vsel %vm71, %v2847, 0
    %v3113 = vsel %vm71, %v2959, 0
    %v3116 = vsel %vm71, %v2964, 0
    %v3119 = vsel %vm71, %v3076, 0
    %v3122 = vsel %vm71, %v3081, 0
    %3124 = vmatprep.subr.mxu0 0.0
    %3125 = vmatpush1.msra.mxu0 0.0
    %3126 = vmatprep.subr.mxu0 0.0
    %3127 = vmatpush1.msra.mxu0 0.0
    %3128 = vmatprep.subr.mxu0 0.0
    %3129 = vmatpush1.msra.mxu0 0.0
    %3130 = vmatprep.subr.mxu0 0.0
    %3131 = vmatpush1.msra.mxu0 0.0
    %3132 = vmatprep.subr.mxu0 0.0
    %3133 = vmatpush1.msra.mxu0 0.0
    %3134 = vmatprep.subr.mxu0 0.0
    %3135 = vmatpush1.msra.mxu0 0.0
    %3136 = vmatprep.subr.mxu0 0.0
    %3137 = vmatpush1.msra.mxu0 0.0
    %3138 = vmatprep.subr.mxu0 0.0
    %3139 = vmatpush1.msra.mxu0 0.0
    %3140 = vmatprep.subr.mxu0 0.0
    %3141 = vmatpush1.msra.mxu0 0.0
    %3142 = vmatprep.subr.mxu0 0.0
    %3143 = vmatpush1.msra.mxu0 0.0
    %3144 = vmatprep.subr.mxu0 0.0
    %3145 = vmatpush1.msra.mxu0 0.0
    %3146 = vmatprep.subr.mxu0 0.0
    %3147 = vmatpush1.msra.mxu0 0.0
    %3148 = vmatprep.subr.mxu0 0.0
    %3149 = vmatpush1.msra.mxu0 %v3087
    %3150 = vmatprep.subr.mxu0 0.0
    %3151 = vmatpush1.msra.mxu0 %v3086
    %3152 = vmatprep.subr.mxu0 0.0
    %3153 = vmatpush1.msra.mxu0 %v3085
    %3154 = vmatprep.subr.mxu0 0.0
    %3155 = vmatpush1.msra.mxu0 %v3084
    %3156 = vmatprep.subr.mxu0 0.0
    %3157 = vmatpush2.msra.mxu0 0.0
    %3158 = vmatprep.subr.mxu0 0.0
    %3159 = vmatpush2.msra.mxu0 0.0
    %3160 = vmatprep.subr.mxu0 0.0
    %3161 = vmatpush2.msra.mxu0 0.0
    %3162 = vmatprep.subr.mxu0 0.0
    %3163 = vmatpush2.msra.mxu0 0.0
    %3164 = vmatprep.subr.mxu0 0.0
    %3165 = vmatpush2.msra.mxu0 0.0
    %3166 = vmatprep.subr.mxu0 0.0
    %3167 = vmatpush2.msra.mxu0 0.0
    %3168 = vmatprep.subr.mxu0 0.0
    %3169 = vmatpush2.msra.mxu0 0.0
    %3170 = vmatprep.subr.mxu0 0.0
    %3171 = vmatpush2.msra.mxu0 0.0
    %3172 = vmatprep.subr.mxu0 0.0
    %3173 = vmatpush2.msra.mxu0 0.0
    %3174 = vmatprep.subr.mxu0 0.0
    %3175 = vmatpush2.msra.mxu0 0.0
    %3176 = vmatprep.subr.mxu0 0.0
    %3177 = vmatpush2.msra.mxu0 0.0
    %3178 = vmatprep.subr.mxu0 0.0
    %3179 = vmatpush2.msra.mxu0 0.0
    %3180 = vmatprep.subr.mxu0 0.0
    %3181 = vmatpush2.msra.mxu0 0.0
    %3182 = vmatprep.subr.mxu0 0.0
    %3183 = vmatpush2.msra.mxu0 0.0
    %3184 = vmatprep.subr.mxu0 0.0
    %3185 = vmatpush2.msra.mxu0 0.0
    %3186 = vmatprep.subr.mxu0 0.0
    %3187 = vmatpush2.msra.mxu0 0.0
    %3188 = vmatprep.mubr.f32.mxu0 0.0
    %3189 = vmatmul.mubr.f32.gmra.mxu0 %v3089
    %v3190 = vpop.f32.mrf.mxu0
    %v3191 = vadd.f32 0.0, %v3190
    %v3192 = vpop.f32.mrf.mxu0
    %3193 = vmatprep.mubr.f32.mxu0 0.0
    %3194 = vmatmul.mubr.f32.gmra.mxu0 %v3092
    %v3195 = vpop.f32.mrf.mxu0
    %v3196 = vadd.f32 0.0, %v3195
    %v3197 = vpop.f32.mrf.mxu0
    %3198 = vmatprep.mubr.f32.mxu0 0.0
    %3199 = vmatmul.mubr.f32.gmra.mxu0 %v3095
    %v3200 = vpop.f32.mrf.mxu0
    %v3201 = vadd.f32 0.0, %v3200
    %v3202 = vpop.f32.mrf.mxu0
    %3203 = vmatprep.mubr.f32.mxu0 0.0
    %3204 = vmatmul.mubr.f32.gmra.mxu0 %v3098
    %v3205 = vpop.f32.mrf.mxu0
    %v3206 = vadd.f32 0.0, %v3205
    %v3207 = vpop.f32.mrf.mxu0
    %3208 = vmatprep.mubr.f32.mxu0 0.0
    %3209 = vmatmul.mubr.f32.gmra.mxu0 %v3101
    %v3210 = vpop.f32.mrf.mxu0
    %v3211 = vadd.f32 0.0, %v3210
    %v3212 = vpop.f32.mrf.mxu0
    %3213 = vmatprep.mubr.f32.mxu0 0.0
    %3214 = vmatmul.mubr.f32.gmra.mxu0 %v3104
    %v3215 = vpop.f32.mrf.mxu0
    %v3216 = vadd.f32 0.0, %v3215
    %v3217 = vpop.f32.mrf.mxu0
    %3218 = vmatprep.mubr.f32.mxu0 0.0
    %3219 = vmatmul.mubr.f32.gmra.mxu0 %v3107
    %v3220 = vpop.f32.mrf.mxu0
    %v3221 = vadd.f32 0.0, %v3220
    %v3222 = vpop.f32.mrf.mxu0
    %3223 = vmatprep.mubr.f32.mxu0 0.0
    %3224 = vmatmul.mubr.f32.gmra.mxu0 %v3110
    %v3225 = vpop.f32.mrf.mxu0
    %v3226 = vadd.f32 0.0, %v3225
    %v3227 = vpop.f32.mrf.mxu0
    %3228 = vmatprep.mubr.f32.mxu0 0.0
    %3229 = vmatmul.mubr.f32.gmra.mxu0 %v3113
    %v3230 = vpop.f32.mrf.mxu0
    %v3231 = vadd.f32 0.0, %v3230
    %v3232 = vpop.f32.mrf.mxu0
    %3233 = vmatprep.mubr.f32.mxu0 0.0
    %3234 = vmatmul.mubr.f32.gmra.mxu0 %v3116
    %v3235 = vpop.f32.mrf.mxu0
    %v3236 = vadd.f32 0.0, %v3235
    %v3237 = vpop.f32.mrf.mxu0
    %3238 = vmatprep.mubr.f32.mxu0 0.0
    %3239 = vmatmul.mubr.f32.gmra.mxu0 %v3119
    %v3240 = vpop.f32.mrf.mxu0
    %v3241 = vadd.f32 0.0, %v3240
    %v3242 = vpop.f32.mrf.mxu0
    %3243 = vmatprep.mubr.f32.mxu0 0.0
    %3244 = vmatmul.mubr.f32.gmra.mxu0 %v3122
    %v3245 = vpop.f32.mrf.mxu0
    %v3246 = vadd.f32 0.0, %v3245
    %v3247 = vpop.f32.mrf.mxu0
    %3248 = vdwg.mxu0
    %v3249 = vmul.f32 %v3191, %v3191
    %v3250 = vmul.f32 %v3196, %v3196
    %v3251 = vmul.f32 %v3201, %v3201
    %v3252 = vmul.f32 %v3206, %v3206
    %v3253 = vmul.f32 %v3211, %v3211
    %v3254 = vmul.f32 %v3216, %v3216
    %v3255 = vmul.f32 %v3221, %v3221
    %v3256 = vmul.f32 %v3226, %v3226
    %v3257 = vmul.f32 %v3231, %v3231
    %v3258 = vmul.f32 %v3236, %v3236
    %v3259 = vmul.f32 %v3241, %v3241
    %v3260 = vmul.f32 %v3246, %v3246
    %3273 = vrot.lane.b32.xlu0 %v3249, 32
    %v3274 = vpop.permute.xlu0 %3273
    %3275 = vrot.lane.b32.xlu0 %v3250, 32
    %v3276 = vpop.permute.xlu0 %3275
    %3277 = vrot.lane.b32.xlu0 %v3251, 32
    %v3278 = vpop.permute.xlu0 %3277
    %3279 = vrot.lane.b32.xlu0 %v3252, 32
    %v3280 = vpop.permute.xlu0 %3279
    %3281 = vrot.lane.b32.xlu0 %v3253, 32
    %v3282 = vpop.permute.xlu0 %3281
    %3283 = vrot.lane.b32.xlu0 %v3254, 32
    %v3284 = vpop.permute.xlu0 %3283
    %3285 = vrot.lane.b32.xlu0 %v3255, 32
    %v3286 = vpop.permute.xlu0 %3285
    %3287 = vrot.lane.b32.xlu0 %v3256, 32
    %v3288 = vpop.permute.xlu0 %3287
    %3289 = vrot.lane.b32.xlu0 %v3257, 32
    %v3290 = vpop.permute.xlu0 %3289
    %3291 = vrot.lane.b32.xlu0 %v3258, 32
    %v3292 = vpop.permute.xlu0 %3291
    %3293 = vrot.lane.b32.xlu0 %v3259, 32
    %v3294 = vpop.permute.xlu0 %3293
    %3295 = vrot.lane.b32.xlu0 %v3260, 32
    %v3296 = vpop.permute.xlu0 %3295
    %v3309 = vsel %vm71, %v3191, %v3274
    %v3310 = vsel %vm71, %v3196, %v3276
    %v3311 = vsel %vm71, %v3201, %v3278
    %v3312 = vsel %vm71, %v3206, %v3280
    %v3313 = vsel %vm71, %v3211, %v3282
    %v3314 = vsel %vm71, %v3216, %v3284
    %v3315 = vsel %vm71, %v3221, %v3286
    %v3316 = vsel %vm71, %v3226, %v3288
    %v3317 = vsel %vm71, %v3231, %v3290
    %v3318 = vsel %vm71, %v3236, %v3292
    %v3319 = vsel %vm71, %v3241, %v3294
    %v3320 = vsel %vm71, %v3246, %v3296
    %vm3321 = vcmask 785408
    %v3323 = vsel %vm3321, 1.0, 0
    %3325 = vmatprep.subr.mxu0 0.0
    %3326 = vmatpush1.msra.mxu0 0.0
    %3327 = vmatprep.subr.mxu0 0.0
    %3328 = vmatpush1.msra.mxu0 0.0
    %3329 = vmatprep.subr.mxu0 0.0
    %3330 = vmatpush1.msra.mxu0 0.0
    %3331 = vmatprep.subr.mxu0 0.0
    %3332 = vmatpush1.msra.mxu0 0.0
    %3333 = vmatprep.subr.mxu0 0.0
    %3334 = vmatpush1.msra.mxu0 %v3320
    %3335 = vmatprep.subr.mxu0 0.0
    %3336 = vmatpush1.msra.mxu0 %v3319
    %3337 = vmatprep.subr.mxu0 0.0
    %3338 = vmatpush1.msra.mxu0 %v3318
    %3339 = vmatprep.subr.mxu0 0.0
    %3340 = vmatpush1.msra.mxu0 %v3317
    %3341 = vmatprep.subr.mxu0 0.0
    %3342 = vmatpush1.msra.mxu0 %v3316
    %3343 = vmatprep.subr.mxu0 0.0
    %3344 = vmatpush1.msra.mxu0 %v3315
    %3345 = vmatprep.subr.mxu0 0.0
    %3346 = vmatpush1.msra.mxu0 %v3314
    %3347 = vmatprep.subr.mxu0 0.0
    %3348 = vmatpush1.msra.mxu0 %v3313
    %3349 = vmatprep.subr.mxu0 0.0
    %3350 = vmatpush1.msra.mxu0 %v3312
    %3351 = vmatprep.subr.mxu0 0.0
    %3352 = vmatpush1.msra.mxu0 %v3311
    %3353 = vmatprep.subr.mxu0 0.0
    %3354 = vmatpush1.msra.mxu0 %v3310
    %3355 = vmatprep.subr.mxu0 0.0
    %3356 = vmatpush1.msra.mxu0 %v3309
    %3357 = vmatprep.subr.mxu0 0.0
    %3358 = vmatpush2.msra.mxu0 0.0
    %3359 = vmatprep.subr.mxu0 0.0
    %3360 = vmatpush2.msra.mxu0 0.0
    %3361 = vmatprep.subr.mxu0 0.0
    %3362 = vmatpush2.msra.mxu0 0.0
    %3363 = vmatprep.subr.mxu0 0.0
    %3364 = vmatpush2.msra.mxu0 0.0
    %3365 = vmatprep.subr.mxu0 0.0
    %3366 = vmatpush2.msra.mxu0 0.0
    %3367 = vmatprep.subr.mxu0 0.0
    %3368 = vmatpush2.msra.mxu0 0.0
    %3369 = vmatprep.subr.mxu0 0.0
    %3370 = vmatpush2.msra.mxu0 0.0
    %3371 = vmatprep.subr.mxu0 0.0
    %3372 = vmatpush2.msra.mxu0 0.0
    %3373 = vmatprep.subr.mxu0 0.0
    %3374 = vmatpush2.msra.mxu0 0.0
    %3375 = vmatprep.subr.mxu0 0.0
    %3376 = vmatpush2.msra.mxu0 0.0
    %3377 = vmatprep.subr.mxu0 0.0
    %3378 = vmatpush2.msra.mxu0 0.0
    %3379 = vmatprep.subr.mxu0 0.0
    %3380 = vmatpush2.msra.mxu0 0.0
    %3381 = vmatprep.subr.mxu0 0.0
    %3382 = vmatpush2.msra.mxu0 0.0
    %3383 = vmatprep.subr.mxu0 0.0
    %3384 = vmatpush2.msra.mxu0 0.0
    %3385 = vmatprep.subr.mxu0 0.0
    %3386 = vmatpush2.msra.mxu0 0.0
    %3387 = vmatprep.subr.mxu0 0.0
    %3388 = vmatpush2.msra.mxu0 0.0
    %3389 = vmatprep.mubr.f32.mxu0 0.0
    %3390 = vmatmul.mubr.f32.gmra.mxu0 %v3323
    %v3391 = vpop.f32.mrf.mxu0
    %v3392 = vadd.f32 0.0, %v3391
    %v3393 = vpop.f32.mrf.mxu0
    %3394 = vdwg.mxu0
    %v3395 = vmul.f32 %v3392, 0.010416667
    %v3396 = vmul.f32 %v3395, %v3395
    %3398 = vrot.lane.b32.xlu0 %v3396, 32
    %v3399 = vpop.permute.xlu0 %3398
    %v3401 = vsub.f32 %v3395, %v3399
    %v3402 = vld [vmem:[%s9] sm:$0x1]
    %v3403 = vadd.f32 %v3401, 1e-05
    %v3404 = vrsqrt.pop %v3403
    %v3407 = vunpack.c.l.s4 1966171168
    %v3408 = vunpack.c.0.s8 %v3407
    %v3409 = vlaneseq
    %v3410 = vshrl.u32 %v3409, 7
    %v3411 = vsub.s32 %v3408, %v3410
    %v3412 = vrot.slane %v3404, %v3411
    %v3414 = vunpack.c.l.s4 1966171168
    %v3415 = vunpack.c.0.s8 %v3414
    %v3416 = vlaneseq
    %v3417 = vshrl.u32 %v3416, 7
    %v3418 = vsub.s32 %v3415, %v3417
    %v3419 = vrot.slane %v3412, %v3418
    %3420 = vrot.lane.b32.xlu0 %v3419, 96
    %v3421 = vpop.permute.xlu0 %3420
    %v3423 = vmul.f32 %v3402, %v3421
    %v3424 = vld [vmem:[%s10] sm:$0x1]
    %v3425 = vmul.f32 %v3395, %v3423
    %v3426 = vsub.f32 %v3424, %v3425
    %v3428 = vlaneseq
    %v3429 = vshrl.u32 %v3428, 7
    %v3430 = vsub.s32 0, %v3429
    %v3431 = vrot.slane %v3423, %v3430
    %v3433 = vmul.f32 %v3191, %v3431
    %v3434 = vmul.f32 %v3196, %v3431
    %v3435 = vmul.f32 %v3201, %v3431
    %v3436 = vmul.f32 %v3206, %v3431
    %v3437 = vmul.f32 %v3211, %v3431
    %v3438 = vmul.f32 %v3216, %v3431
    %v3439 = vmul.f32 %v3221, %v3431
    %v3440 = vmul.f32 %v3226, %v3431
    %v3441 = vmul.f32 %v3231, %v3431
    %v3442 = vmul.f32 %v3236, %v3431
    %v3443 = vmul.f32 %v3241, %v3431
    %v3444 = vmul.f32 %v3246, %v3431
    %v3446 = vlaneseq
    %v3447 = vshrl.u32 %v3446, 7
    %v3448 = vsub.s32 0, %v3447
    %v3449 = vrot.slane %v3426, %v3448
    %v3451 = vadd.f32 %v3433, %v3449
    %v3452 = vadd.f32 %v3434, %v3449
    %v3453 = vadd.f32 %v3435, %v3449
    %v3454 = vadd.f32 %v3436, %v3449
    %v3455 = vadd.f32 %v3437, %v3449
    %v3456 = vadd.f32 %v3438, %v3449
    %v3457 = vadd.f32 %v3439, %v3449
    %v3458 = vadd.f32 %v3440, %v3449
    %v3459 = vadd.f32 %v3441, %v3449
    %v3460 = vadd.f32 %v3442, %v3449
    %v3461 = vadd.f32 %v3443, %v3449
    %v3462 = vadd.f32 %v3444, %v3449
    %v3463 = vmax.f32 %v3451, 0.0
    %v3464 = vmax.f32 %v3452, 0.0
    %v3465 = vmax.f32 %v3453, 0.0
    %v3466 = vmax.f32 %v3454, 0.0
    %v3467 = vmax.f32 %v3455, 0.0
    %v3468 = vmax.f32 %v3456, 0.0
    %v3469 = vmax.f32 %v3457, 0.0
    %v3470 = vmax.f32 %v3458, 0.0
    %v3471 = vmax.f32 %v3459, 0.0
    %v3472 = vmax.f32 %v3460, 0.0
    %v3473 = vmax.f32 %v3461, 0.0
    %v3474 = vmax.f32 %v3462, 0.0
    %3475 = vst.msk [vmem:[#allocation2] sm:$0xff] %vm71, %v3463
    %3476 = vst.msk [vmem:[#allocation2 + $0x8] sm:$0xff] %vm71, %v3464
    %3477 = vst.msk [vmem:[#allocation2 + $0x10] sm:$0xff] %vm71, %v3465
    %3478 = vst.msk [vmem:[#allocation2 + $0x18] sm:$0xff] %vm71, %v3466
    %3479 = vst.msk [vmem:[#allocation2 + $0x20] sm:$0xff] %vm71, %v3467
    %3480 = vst.msk [vmem:[#allocation2 + $0x28] sm:$0xff] %vm71, %v3468
    %3481 = vst.msk [vmem:[#allocation2 + $0x30] sm:$0xff] %vm71, %v3469
    %3482 = vst.msk [vmem:[#allocation2 + $0x38] sm:$0xff] %vm71, %v3470
    %3483 = vst.msk [vmem:[#allocation2 + $0x40] sm:$0xff] %vm71, %v3471
    %3484 = vst.msk [vmem:[#allocation2 + $0x48] sm:$0xff] %vm71, %v3472
    %3485 = vst.msk [vmem:[#allocation2 + $0x50] sm:$0xff] %vm71, %v3473
    %3486 = vst.msk [vmem:[#allocation2 + $0x58] sm:$0xff] %vm71, %v3474
    // Predicated region
    $region46: #{multi_global_part.1} parent=1 // pred_check
      _
    $region47: #{multi_global_part.1} parent=1 // pred_check_branch
      %3488 = sbr.rel (0) target = $region49
    $region48: #{multi_global_part.1} parent=1 // pred_region
      %s3490 = ssub.s32 1536, 1536
      %3491 = vsyncadd [#allocation3], %s3490
      %s3492 = sshll.u32 [#allocation2], 4
      %s3493 = int_to_ptr.vmem [resolvable:$true] %s3492
      %3498 = dma.vmem_to_hbm [thread:$0]  %s3493, 1536, %s11, [#allocation3], 128, 128, 8
    $region49: #{multi_global_part.1} parent=1 // pred_fallthru
      _
    // Predicated region
    $region50: #{multi_global_part.1} parent=1 // pred_check
      _
    $region51: #{multi_global_part.1} parent=1 // pred_check_branch
      %3500 = sbr.rel (0) target = $region53
    $region52: #{multi_global_part.1} parent=1 // pred_region
      %3501 = dma.done [#allocation3], 1536
    $region53: #{multi_global_part.1} parent=1 // pred_fallthru
      _
    %3502 = vsyncpa [#allocation3], 1

</llo_original>
